<compile_context>
chip_gen: v6e
topology: v6e:2x2x1
jax: 0.10.0
libtpu: 0.0.40
codegen_flags: <defaults>
</compile_context>

<pallas_src>
import functools
import math

import jax
import jax.numpy as jnp
import numpy as np
from jax.experimental import pallas as pl
from jax.experimental.pallas import tpu as pltpu

EMBED_DIM = 128
NUM_HEADS = 4


def _attention_kernel(x_ref, wqkv_ref, bqkv_ref, wout_ref, bout_ref,
                      gamma_ref, beta_ref, o_ref, *,
                      embed_dim, num_heads, batch_block, seq_len, eps):
    E = embed_dim
    H = num_heads
    hd = E // H
    bb = batch_block
    S = seq_len
    R = bb * S

    # NCHW-native block (bb, E, S) -> rows (bb*S, E) in VMEM (one XLU transpose; saves an
    # HBM transpose pass over the input).
    x_nchw = x_ref[...].astype(jnp.float32)                       # (bb, E, S)
    x_bse = jnp.transpose(x_nchw, (0, 2, 1))                      # (bb, S, E)
    x2 = x_bse.reshape(R, E)                                      # (bb*S, E), f32 for residual/LN

    # Packed in-projection: weights pre-transposed + Q rows pre-scaled + pre-cast to bf16
    # in the wrapper; f32 accumulation on the MXU.
    qkv = jnp.dot(x2.astype(jnp.bfloat16), wqkv_ref[...],
                  preferred_element_type=jnp.float32)
    qkv = qkv + bqkv_ref[...]                                     # (bb*S, 3E), f32

    # Head split: 4 per-head 32-lane slices per tensor (constant count, independent of bb),
    # leading-dim reshapes, and one leading-axis stack -> (H*bb, S, hd).
    def split_heads(base):
        pieces = [qkv[:, base + h * hd: base + (h + 1) * hd].reshape(bb, S, hd)
                  for h in range(H)]
        return jnp.stack(pieces, axis=0).reshape(H * bb, S, hd).astype(jnp.bfloat16)

    qh = split_heads(0 * E)                                       # (H*bb, S, hd) bf16
    kh = split_heads(1 * E)
    vh = split_heads(2 * E)

    # Two head-batched MXU matmuls + numerically-stable softmax (EUP reciprocal).
    scores = jnp.einsum('bqd,bkd->bqk', qh, kh,
                        preferred_element_type=jnp.float32)       # (H*bb, S, S) f32
    scores = scores - jnp.max(scores, axis=-1, keepdims=True)
    probs = jnp.exp(scores)
    probs = probs * pl.reciprocal(jnp.sum(probs, axis=-1, keepdims=True), approx=True)
    ctx = jnp.einsum('bqk,bkd->bqd', probs.astype(jnp.bfloat16), vh,
                     preferred_element_type=jnp.float32)          # (H*bb, S, hd) f32

    # Merge heads back to (bb*S, E): leading-dim reshape + a 4-piece lane concat.
    ctx4 = ctx.reshape(H, bb, S, hd)
    attn = jnp.concatenate([ctx4[h] for h in range(H)], axis=-1)  # (bb, S, E)
    attn = attn.reshape(R, E)

    # Output projection kept in f32 (feeds LayerNorm directly; precision headroom).
    out = jnp.dot(attn, wout_ref[...], preferred_element_type=jnp.float32)
    out = out + bout_ref[...]

    # Residual + LayerNorm over embed_dim, single-pass statistics.
    y = out + x2
    inv_e = 1.0 / E
    mean = jnp.sum(y, axis=-1, keepdims=True) * inv_e
    mean_sq = jnp.sum(y * y, axis=-1, keepdims=True) * inv_e
    var = mean_sq - mean * mean
    y = (y - mean) * jax.lax.rsqrt(var + eps)
    y = y * gamma_ref[...] + beta_ref[...]

    # Lane-dense store: (bb, S, E) with E=128 on the lane axis (no final transpose).
    o_ref[...] = y.reshape(bb, S, E).astype(o_ref.dtype)


def vision_attention(x, params, *, embed_dim=EMBED_DIM, num_heads=NUM_HEADS,
                     eps=1e-5, batch_block=None):
    """x: (B, C, H, W) with C == embed_dim, float32. Returns (B, C, H, W)."""
    B, C, Hh, Ww = x.shape
    assert C == embed_dim
    S = Hh * Ww
    head_dim = embed_dim // num_heads
    scaling = float(head_dim) ** (-0.5)

    # NCHW -> (B, C, S) is a free reshape; the (C,S)->(S,C) move happens in VMEM.
    xb = x.reshape(B, C, S)

    if batch_block is None:
        # Fold batches into the MXU M dimension (S-row blocks underfill the MXU and pay
        # ~0.35us/step pipeline overhead); keep >=2 parallel blocks when possible so
        # v7x's two TensorCores both get work.
        if B % 2 == 0 and B >= 4 and (B // 2) * S <= 2048:
            batch_block = B // 2
        elif B * S <= 2048:
            batch_block = B
        else:
            batch_block = 1
    if B % batch_block != 0:
        batch_block = 1
    num_blocks = B // batch_block

    # One-time weight prep: fold the 1/sqrt(head_dim) scaling into the Q rows, pre-transpose,
    # and pre-cast the in-projection weight to bf16 (halves its DMA / VMEM footprint and
    # hits the bf16 MXU path).  The out-projection weight stays f32 (see kernel note).
    in_w = params["in_proj_weight"].astype(jnp.float32)           # (3E, E)
    in_b = params["in_proj_bias"].astype(jnp.float32)             # (3E,)
    row_scale = jnp.concatenate([
        jnp.full((embed_dim,), scaling, jnp.float32),
        jnp.ones((2 * embed_dim,), jnp.float32)], axis=0)
    w_qkv_t = (in_w * row_scale[:, None]).T.astype(jnp.bfloat16)  # (E, 3E) bf16
    b_qkv = (in_b * row_scale).reshape(1, 3 * embed_dim)
    w_out_t = params["out_proj_weight"].astype(jnp.float32).T     # (E, E) f32
    b_out = params["out_proj_bias"].astype(jnp.float32).reshape(1, embed_dim)
    gamma = params["norm_weight"].astype(jnp.float32).reshape(1, embed_dim)
    beta = params["norm_bias"].astype(jnp.float32).reshape(1, embed_dim)

    kernel = functools.partial(
        _attention_kernel, embed_dim=embed_dim, num_heads=num_heads,
        batch_block=batch_block, seq_len=S, eps=eps)

    full2d = lambda arr: pl.BlockSpec(arr.shape, lambda b: (0, 0))

    out_bse = pl.pallas_call(
        kernel,
        out_shape=jax.ShapeDtypeStruct((B, S, embed_dim), x.dtype),
        grid_spec=pltpu.PrefetchScalarGridSpec(
            num_scalar_prefetch=0,
            grid=(num_blocks,),
            in_specs=[
                pl.BlockSpec((batch_block, embed_dim, S), lambda b: (b, 0, 0)),
                full2d(w_qkv_t),
                full2d(b_qkv),
                full2d(w_out_t),
                full2d(b_out),
                full2d(gamma),
                full2d(beta),
            ],
            out_specs=pl.BlockSpec((batch_block, S, embed_dim), lambda b: (b, 0, 0)),
        ),
        compiler_params=pltpu.CompilerParams(
            dimension_semantics=("parallel",)),
    )(xb, w_qkv_t, b_qkv, w_out_t, b_out, gamma, beta)

    # Lane-dense (B, S, E) -> NCHW; this transpose runs in XLA, off the kernel store path.
    return jnp.transpose(out_bse, (0, 2, 1)).reshape(B, C, Hh, Ww)


def _reference(x, params, *, embed_dim=EMBED_DIM, num_heads=NUM_HEADS, eps=1e-5):
    """Pure-JAX reference mirroring the PyTorch module_fn."""
    B, C, H, W = x.shape
    S = H * W
    head_dim = embed_dim // num_heads
    scaling = float(head_dim) ** (-0.5)
    hp = jax.lax.Precision.HIGHEST

    xs = jnp.transpose(x.reshape(B, C, S), (2, 0, 1))             # (S, B, E)
    qkv = jnp.einsum("sbe,fe->sbf", xs, params["in_proj_weight"],
                     precision=hp) + params["in_proj_bias"]
    q, k, v = jnp.split(qkv, 3, axis=-1)
    q = q * scaling

    def to_heads(t):                                              # (S, B, E) -> (B, H, S, hd)
        return jnp.transpose(t.reshape(S, B, num_heads, head_dim), (1, 2, 0, 3))

    qh, kh, vh = to_heads(q), to_heads(k), to_heads(v)
    scores = jnp.einsum("bhqd,bhkd->bhqk", qh, kh, precision=hp)
    probs = jax.nn.softmax(scores, axis=-1)
    attn = jnp.einsum("bhqk,bhkd->bhqd", probs, vh, precision=hp)
    attn = jnp.transpose(attn, (0, 2, 1, 3)).reshape(B, S, embed_dim)
    attn = jnp.einsum("bse,fe->bsf", attn, params["out_proj_weight"],
                      precision=hp) + params["out_proj_bias"]

    y = attn + jnp.transpose(xs, (1, 0, 2))                       # (B, S, E)
    mean = jnp.mean(y, axis=-1, keepdims=True)
    var = jnp.mean((y - mean) ** 2, axis=-1, keepdims=True)
    y = (y - mean) / jnp.sqrt(var + eps)
    y = y * params["norm_weight"] + params["norm_bias"]
    return jnp.transpose(y, (0, 2, 1)).reshape(B, C, H, W)


def init_params(key, embed_dim=EMBED_DIM):
    # Matches the PyTorch __init__: in_proj ones / zeros, out_proj xavier_uniform / zeros,
    # layer-norm affine ones / zeros.
    bound = math.sqrt(6.0 / (embed_dim + embed_dim))              # xavier_uniform for (E, E)
    out_proj_weight = jax.random.uniform(
        key, (embed_dim, embed_dim), jnp.float32, minval=-bound, maxval=bound)
    return {
        "in_proj_weight": jnp.ones((3 * embed_dim, embed_dim), jnp.float32),
        "in_proj_bias": jnp.zeros((3 * embed_dim,), jnp.float32),
        "out_proj_weight": out_proj_weight,
        "out_proj_bias": jnp.zeros((embed_dim,), jnp.float32),
        "norm_weight": jnp.ones((embed_dim,), jnp.float32),
        "norm_bias": jnp.zeros((embed_dim,), jnp.float32),
    }


if __name__ == "__main__":
    B, H, W = 2, 8, 8                                             # seq = H*W = 64, C = embed_dim = 128
    root = jax.random.PRNGKey(0)
    kp, kx = jax.random.split(root)

    params = init_params(kp, EMBED_DIM)
    x = jax.random.normal(kx, (B, EMBED_DIM, H, W), jnp.float32)

    out = jax.block_until_ready(vision_attention(x, params))
    ref = jax.block_until_ready(_reference(x, params))
    np.testing.assert_allclose(np.asarray(out), np.asarray(ref), rtol=2e-3, atol=2e-3)

    print("KERNEL_OK")
</pallas_src>

<mosaic_0001>
module attributes {stable_mosaic.version = 11 : i64} {
  func.func @_attention_kernel(%arg0: i32, %arg1: memref<2x128x64xf32, #tpu.memory_space<vmem>>, %arg2: memref<128x384xbf16, #tpu.memory_space<vmem>>, %arg3: memref<1x384xf32, #tpu.memory_space<vmem>>, %arg4: memref<128x128xf32, #tpu.memory_space<vmem>>, %arg5: memref<1x128xf32, #tpu.memory_space<vmem>>, %arg6: memref<1x128xf32, #tpu.memory_space<vmem>>, %arg7: memref<1x128xf32, #tpu.memory_space<vmem>>, %arg8: memref<2x64x128xf32, #tpu.memory_space<vmem>>) attributes {dimension_semantics = [#tpu.dimension_semantics<parallel>], iteration_bounds = array<i64: 1>, scalar_prefetch = 0 : i64, scratch_operands = 0 : i64, tpu.core_type = #tpu.core_type<tc>, window_params = [{transform_indices = @transform_0, window_bounds = array<i64: 2, 128, 64>}, {pipeline_mode = #tpu.pipeline_mode<synchronous>, transform_indices = @transform_1, window_bounds = array<i64: 128, 384>}, {pipeline_mode = #tpu.pipeline_mode<synchronous>, transform_indices = @transform_2, window_bounds = array<i64: 1, 384>}, {pipeline_mode = #tpu.pipeline_mode<synchronous>, transform_indices = @transform_3, window_bounds = array<i64: 128, 128>}, {pipeline_mode = #tpu.pipeline_mode<synchronous>, transform_indices = @transform_4, window_bounds = array<i64: 1, 128>}, {pipeline_mode = #tpu.pipeline_mode<synchronous>, transform_indices = @transform_5, window_bounds = array<i64: 1, 128>}, {pipeline_mode = #tpu.pipeline_mode<synchronous>, transform_indices = @transform_6, window_bounds = array<i64: 1, 128>}, {transform_indices = @transform_7, window_bounds = array<i64: 2, 64, 128>}]} {
    %c0 = arith.constant 0 : index
    %c0_0 = arith.constant 0 : index
    %c0_1 = arith.constant 0 : index
    %0 = vector.load %arg1[%c0, %c0_0, %c0_1] : memref<2x128x64xf32, #tpu.memory_space<vmem>>, vector<2x128x64xf32>
    %1 = tpu.transpose %0, [0, 2, 1] : vector<2x128x64xf32> -> vector<2x64x128xf32>
    %2 = vector.shape_cast %1 : vector<2x64x128xf32> to vector<128x128xf32>
    %3 = arith.truncf %2 : vector<128x128xf32> to vector<128x128xbf16>
    %c0_2 = arith.constant 0 : index
    %c0_3 = arith.constant 0 : index
    %4 = vector.load %arg2[%c0_2, %c0_3] : memref<128x384xbf16, #tpu.memory_space<vmem>>, vector<128x384xbf16>
    %cst = arith.constant dense<0.000000e+00> : vector<128x384xf32>
    %5 = tpu.matmul %3, %4, %cst {dimension_numbers = #tpu.dot_dimension_numbers<[1], [0], [0], [1], [0, 0, 1, 1], [], []>} : vector<128x128xbf16>, vector<128x384xbf16>, vector<128x384xf32> -> vector<128x384xf32>
    %c0_4 = arith.constant 0 : index
    %c0_5 = arith.constant 0 : index
    %6 = vector.load %arg3[%c0_4, %c0_5] : memref<1x384xf32, #tpu.memory_space<vmem>>, vector<1x384xf32>
    %7 = vector.broadcast %6 : vector<1x384xf32> to vector<128x384xf32>
    %8 = arith.addf %5, %7 : vector<128x384xf32>
    %9 = vector.extract_strided_slice %8 {offsets = [0, 0], sizes = [128, 32], strides = [1, 1]} : vector<128x384xf32> to vector<128x32xf32>
    %10 = vector.shape_cast %9 : vector<128x32xf32> to vector<2x64x32xf32>
    %11 = vector.extract_strided_slice %8 {offsets = [0, 32], sizes = [128, 32], strides = [1, 1]} : vector<128x384xf32> to vector<128x32xf32>
    %12 = vector.shape_cast %11 : vector<128x32xf32> to vector<2x64x32xf32>
    %13 = vector.extract_strided_slice %8 {offsets = [0, 64], sizes = [128, 32], strides = [1, 1]} : vector<128x384xf32> to vector<128x32xf32>
    %14 = vector.shape_cast %13 : vector<128x32xf32> to vector<2x64x32xf32>
    %15 = vector.extract_strided_slice %8 {offsets = [0, 96], sizes = [128, 32], strides = [1, 1]} : vector<128x384xf32> to vector<128x32xf32>
    %16 = vector.shape_cast %15 : vector<128x32xf32> to vector<2x64x32xf32>
    %17 = vector.shape_cast %10 : vector<2x64x32xf32> to vector<1x2x64x32xf32>
    %18 = vector.shape_cast %12 : vector<2x64x32xf32> to vector<1x2x64x32xf32>
    %19 = vector.shape_cast %14 : vector<2x64x32xf32> to vector<1x2x64x32xf32>
    %20 = vector.shape_cast %16 : vector<2x64x32xf32> to vector<1x2x64x32xf32>
    %21 = tpu.concatenate %17, %18, %19, %20 in 0 : vector<1x2x64x32xf32>, vector<1x2x64x32xf32>, vector<1x2x64x32xf32>, vector<1x2x64x32xf32> -> vector<4x2x64x32xf32>
    %22 = vector.shape_cast %21 : vector<4x2x64x32xf32> to vector<8x64x32xf32>
    %23 = arith.truncf %22 : vector<8x64x32xf32> to vector<8x64x32xbf16>
    %24 = vector.extract_strided_slice %8 {offsets = [0, 128], sizes = [128, 32], strides = [1, 1]} : vector<128x384xf32> to vector<128x32xf32>
    %25 = vector.shape_cast %24 : vector<128x32xf32> to vector<2x64x32xf32>
    %26 = vector.extract_strided_slice %8 {offsets = [0, 160], sizes = [128, 32], strides = [1, 1]} : vector<128x384xf32> to vector<128x32xf32>
    %27 = vector.shape_cast %26 : vector<128x32xf32> to vector<2x64x32xf32>
    %28 = vector.extract_strided_slice %8 {offsets = [0, 192], sizes = [128, 32], strides = [1, 1]} : vector<128x384xf32> to vector<128x32xf32>
    %29 = vector.shape_cast %28 : vector<128x32xf32> to vector<2x64x32xf32>
    %30 = vector.extract_strided_slice %8 {offsets = [0, 224], sizes = [128, 32], strides = [1, 1]} : vector<128x384xf32> to vector<128x32xf32>
    %31 = vector.shape_cast %30 : vector<128x32xf32> to vector<2x64x32xf32>
    %32 = vector.shape_cast %25 : vector<2x64x32xf32> to vector<1x2x64x32xf32>
    %33 = vector.shape_cast %27 : vector<2x64x32xf32> to vector<1x2x64x32xf32>
    %34 = vector.shape_cast %29 : vector<2x64x32xf32> to vector<1x2x64x32xf32>
    %35 = vector.shape_cast %31 : vector<2x64x32xf32> to vector<1x2x64x32xf32>
    %36 = tpu.concatenate %32, %33, %34, %35 in 0 : vector<1x2x64x32xf32>, vector<1x2x64x32xf32>, vector<1x2x64x32xf32>, vector<1x2x64x32xf32> -> vector<4x2x64x32xf32>
    %37 = vector.shape_cast %36 : vector<4x2x64x32xf32> to vector<8x64x32xf32>
    %38 = arith.truncf %37 : vector<8x64x32xf32> to vector<8x64x32xbf16>
    %39 = vector.extract_strided_slice %8 {offsets = [0, 256], sizes = [128, 32], strides = [1, 1]} : vector<128x384xf32> to vector<128x32xf32>
    %40 = vector.shape_cast %39 : vector<128x32xf32> to vector<2x64x32xf32>
    %41 = vector.extract_strided_slice %8 {offsets = [0, 288], sizes = [128, 32], strides = [1, 1]} : vector<128x384xf32> to vector<128x32xf32>
    %42 = vector.shape_cast %41 : vector<128x32xf32> to vector<2x64x32xf32>
    %43 = vector.extract_strided_slice %8 {offsets = [0, 320], sizes = [128, 32], strides = [1, 1]} : vector<128x384xf32> to vector<128x32xf32>
    %44 = vector.shape_cast %43 : vector<128x32xf32> to vector<2x64x32xf32>
    %45 = vector.extract_strided_slice %8 {offsets = [0, 352], sizes = [128, 32], strides = [1, 1]} : vector<128x384xf32> to vector<128x32xf32>
    %46 = vector.shape_cast %45 : vector<128x32xf32> to vector<2x64x32xf32>
    %47 = vector.shape_cast %40 : vector<2x64x32xf32> to vector<1x2x64x32xf32>
    %48 = vector.shape_cast %42 : vector<2x64x32xf32> to vector<1x2x64x32xf32>
    %49 = vector.shape_cast %44 : vector<2x64x32xf32> to vector<1x2x64x32xf32>
    %50 = vector.shape_cast %46 : vector<2x64x32xf32> to vector<1x2x64x32xf32>
    %51 = tpu.concatenate %47, %48, %49, %50 in 0 : vector<1x2x64x32xf32>, vector<1x2x64x32xf32>, vector<1x2x64x32xf32>, vector<1x2x64x32xf32> -> vector<4x2x64x32xf32>
    %52 = vector.shape_cast %51 : vector<4x2x64x32xf32> to vector<8x64x32xf32>
    %53 = arith.truncf %52 : vector<8x64x32xf32> to vector<8x64x32xbf16>
    "tpu.trace_start"() <{level = 10 : i32, message = "bqd,bkd->bqk"}> : () -> ()
    %cst_6 = arith.constant dense<0.000000e+00> : vector<8x64x64xf32>
    %54 = tpu.matmul %23, %38, %cst_6 {dimension_numbers = #tpu.dot_dimension_numbers<[2], [2], [1], [1], [0, 0, 0, 1, 1, 1], [0], [0]>} : vector<8x64x32xbf16>, vector<8x64x32xbf16>, vector<8x64x64xf32> -> vector<8x64x64xf32>
    "tpu.trace_stop"() : () -> ()
    %cst_7 = arith.constant dense<0xFF800000> : vector<8x64xf32>
    %55 = vector.multi_reduction <maximumf>, %54, %cst_7 [2] : vector<8x64x64xf32> to vector<8x64xf32>
    %56 = vector.shape_cast %55 : vector<8x64xf32> to vector<8x64x1xf32>
    %57 = vector.broadcast %56 : vector<8x64x1xf32> to vector<8x64x64xf32>
    %58 = arith.subf %54, %57 : vector<8x64x64xf32>
    %59 = math.exp %58 : vector<8x64x64xf32>
    %cst_8 = arith.constant dense<0.000000e+00> : vector<8x64xf32>
    %60 = vector.multi_reduction <add>, %59, %cst_8 [2] : vector<8x64x64xf32> to vector<8x64xf32>
    %61 = vector.shape_cast %60 : vector<8x64xf32> to vector<8x64x1xf32>
    %62 = tpu.reciprocal %61 {approx = true} : vector<8x64x1xf32> -> vector<8x64x1xf32>
    %63 = vector.broadcast %62 : vector<8x64x1xf32> to vector<8x64x64xf32>
    %64 = arith.mulf %59, %63 : vector<8x64x64xf32>
    %65 = arith.truncf %64 : vector<8x64x64xf32> to vector<8x64x64xbf16>
    "tpu.trace_start"() <{level = 10 : i32, message = "bqk,bkd->bqd"}> : () -> ()
    %cst_9 = arith.constant dense<0.000000e+00> : vector<8x64x32xf32>
    %66 = tpu.matmul %65, %53, %cst_9 {dimension_numbers = #tpu.dot_dimension_numbers<[2], [1], [1], [2], [0, 0, 0, 1, 1, 2], [0], [0]>} : vector<8x64x64xbf16>, vector<8x64x32xbf16>, vector<8x64x32xf32> -> vector<8x64x32xf32>
    "tpu.trace_stop"() : () -> ()
    %67 = vector.shape_cast %66 : vector<8x64x32xf32> to vector<4x2x64x32xf32>
    %68 = vector.extract_strided_slice %67 {offsets = [0, 0, 0, 0], sizes = [1, 2, 64, 32], strides = [1, 1, 1, 1]} : vector<4x2x64x32xf32> to vector<1x2x64x32xf32>
    %69 = vector.shape_cast %68 : vector<1x2x64x32xf32> to vector<2x64x32xf32>
    %70 = vector.extract_strided_slice %67 {offsets = [1, 0, 0, 0], sizes = [1, 2, 64, 32], strides = [1, 1, 1, 1]} : vector<4x2x64x32xf32> to vector<1x2x64x32xf32>
    %71 = vector.shape_cast %70 : vector<1x2x64x32xf32> to vector<2x64x32xf32>
    %72 = vector.extract_strided_slice %67 {offsets = [2, 0, 0, 0], sizes = [1, 2, 64, 32], strides = [1, 1, 1, 1]} : vector<4x2x64x32xf32> to vector<1x2x64x32xf32>
    %73 = vector.shape_cast %72 : vector<1x2x64x32xf32> to vector<2x64x32xf32>
    %74 = vector.extract_strided_slice %67 {offsets = [3, 0, 0, 0], sizes = [1, 2, 64, 32], strides = [1, 1, 1, 1]} : vector<4x2x64x32xf32> to vector<1x2x64x32xf32>
    %75 = vector.shape_cast %74 : vector<1x2x64x32xf32> to vector<2x64x32xf32>
    %76 = tpu.concatenate %69, %71, %73, %75 in 2 : vector<2x64x32xf32>, vector<2x64x32xf32>, vector<2x64x32xf32>, vector<2x64x32xf32> -> vector<2x64x128xf32>
    %77 = vector.shape_cast %76 : vector<2x64x128xf32> to vector<128x128xf32>
    %c0_10 = arith.constant 0 : index
    %c0_11 = arith.constant 0 : index
    %78 = vector.load %arg4[%c0_10, %c0_11] : memref<128x128xf32, #tpu.memory_space<vmem>>, vector<128x128xf32>
    %cst_12 = arith.constant dense<0.000000e+00> : vector<128x128xf32>
    %79 = tpu.matmul %77, %78, %cst_12 {dimension_numbers = #tpu.dot_dimension_numbers<[1], [0], [0], [1], [0, 0, 1, 1], [], []>} : vector<128x128xf32>, vector<128x128xf32>, vector<128x128xf32> -> vector<128x128xf32>
    %c0_13 = arith.constant 0 : index
    %c0_14 = arith.constant 0 : index
    %80 = vector.load %arg5[%c0_13, %c0_14] : memref<1x128xf32, #tpu.memory_space<vmem>>, vector<1x128xf32>
    %81 = vector.broadcast %80 : vector<1x128xf32> to vector<128x128xf32>
    %82 = arith.addf %79, %81 : vector<128x128xf32>
    %83 = arith.addf %82, %2 : vector<128x128xf32>
    %cst_15 = arith.constant dense<0.000000e+00> : vector<128xf32>
    %84 = vector.multi_reduction <add>, %83, %cst_15 [1] : vector<128x128xf32> to vector<128xf32>
    %85 = vector.shape_cast %84 : vector<128xf32> to vector<128x1xf32>
    %cst_16 = arith.constant 7.812500e-03 : f32
    %86 = vector.broadcast %cst_16 : f32 to vector<128x1xf32>
    %87 = arith.mulf %85, %86 : vector<128x1xf32>
    %88 = arith.mulf %83, %83 : vector<128x128xf32>
    %cst_17 = arith.constant dense<0.000000e+00> : vector<128xf32>
    %89 = vector.multi_reduction <add>, %88, %cst_17 [1] : vector<128x128xf32> to vector<128xf32>
    %90 = vector.shape_cast %89 : vector<128xf32> to vector<128x1xf32>
    %cst_18 = arith.constant 7.812500e-03 : f32
    %91 = vector.broadcast %cst_18 : f32 to vector<128x1xf32>
    %92 = arith.mulf %90, %91 : vector<128x1xf32>
    %93 = arith.mulf %87, %87 : vector<128x1xf32>
    %94 = arith.subf %92, %93 : vector<128x1xf32>
    %95 = vector.broadcast %87 : vector<128x1xf32> to vector<128x128xf32>
    %96 = arith.subf %83, %95 : vector<128x128xf32>
    %cst_19 = arith.constant 9.99999974E-6 : f32
    %97 = vector.broadcast %cst_19 : f32 to vector<128x1xf32>
    %98 = arith.addf %94, %97 : vector<128x1xf32>
    %99 = math.rsqrt %98 : vector<128x1xf32>
    %100 = vector.broadcast %99 : vector<128x1xf32> to vector<128x128xf32>
    %101 = arith.mulf %96, %100 : vector<128x128xf32>
    %c0_20 = arith.constant 0 : index
    %c0_21 = arith.constant 0 : index
    %102 = vector.load %arg6[%c0_20, %c0_21] : memref<1x128xf32, #tpu.memory_space<vmem>>, vector<1x128xf32>
    %103 = vector.broadcast %102 : vector<1x128xf32> to vector<128x128xf32>
    %104 = arith.mulf %101, %103 : vector<128x128xf32>
    %c0_22 = arith.constant 0 : index
    %c0_23 = arith.constant 0 : index
    %105 = vector.load %arg7[%c0_22, %c0_23] : memref<1x128xf32, #tpu.memory_space<vmem>>, vector<1x128xf32>
    %106 = vector.broadcast %105 : vector<1x128xf32> to vector<128x128xf32>
    %107 = arith.addf %104, %106 : vector<128x128xf32>
    %108 = vector.shape_cast %107 : vector<128x128xf32> to vector<2x64x128xf32>
    %c0_24 = arith.constant 0 : index
    %c0_25 = arith.constant 0 : index
    %c0_26 = arith.constant 0 : index
    %109 = vector.load %arg8[%c0_24, %c0_25, %c0_26] : memref<2x64x128xf32, #tpu.memory_space<vmem>>, vector<2x64x128xf32>
    tpu.vector_store %arg8[%c0_24, %c0_25, %c0_26], %108 {strides = array<i32>} : memref<2x64x128xf32, #tpu.memory_space<vmem>>, vector<2x64x128xf32>,
    return
  }
  func.func @transform_0(%arg0: i32) -> (i32, i32, i32) {
    %c0_i32 = arith.constant 0 : i32
    %c0_i32_0 = arith.constant 0 : i32
    %c0_i32_1 = arith.constant 0 : i32
    return %arg0, %c0_i32, %c0_i32_0 : i32, i32, i32
  }
  func.func @transform_1(%arg0: i32) -> (i32, i32) {
    %c0_i32 = arith.constant 0 : i32
    %c0_i32_0 = arith.constant 0 : i32
    %c0_i32_1 = arith.constant 0 : i32
    return %c0_i32, %c0_i32_0 : i32, i32
  }
  func.func @transform_2(%arg0: i32) -> (i32, i32) {
    %c0_i32 = arith.constant 0 : i32
    %c0_i32_0 = arith.constant 0 : i32
    %c0_i32_1 = arith.constant 0 : i32
    return %c0_i32, %c0_i32_0 : i32, i32
  }
  func.func @transform_3(%arg0: i32) -> (i32, i32) {
    %c0_i32 = arith.constant 0 : i32
    %c0_i32_0 = arith.constant 0 : i32
    %c0_i32_1 = arith.constant 0 : i32
    return %c0_i32, %c0_i32_0 : i32, i32
  }
  func.func @transform_4(%arg0: i32) -> (i32, i32) {
    %c0_i32 = arith.constant 0 : i32
    %c0_i32_0 = arith.constant 0 : i32
    %c0_i32_1 = arith.constant 0 : i32
    return %c0_i32, %c0_i32_0 : i32, i32
  }
  func.func @transform_5(%arg0: i32) -> (i32, i32) {
    %c0_i32 = arith.constant 0 : i32
    %c0_i32_0 = arith.constant 0 : i32
    %c0_i32_1 = arith.constant 0 : i32
    return %c0_i32, %c0_i32_0 : i32, i32
  }
  func.func @transform_6(%arg0: i32) -> (i32, i32) {
    %c0_i32 = arith.constant 0 : i32
    %c0_i32_0 = arith.constant 0 : i32
    %c0_i32_1 = arith.constant 0 : i32
    return %c0_i32, %c0_i32_0 : i32, i32
  }
  func.func @transform_7(%arg0: i32) -> (i32, i32, i32) {
    %c0_i32 = arith.constant 0 : i32
    %c0_i32_0 = arith.constant 0 : i32
    %c0_i32_1 = arith.constant 0 : i32
    return %arg0, %c0_i32, %c0_i32_0 : i32, i32, i32
  }
}

</mosaic_0001>

<llo_original>
// kernel: tpu_custom_call.1
$region0: #{tpu_custom_call.1}
  #allocation0 [shape = 'u32[]', space=smem, size = 0x4, offset = 0x4, fixed_abs, tag = 'smem constant byte address 0x4 - core index']
  #allocation1 [shape = 'u32[144,128]{1,0:T(1,128)}', space=vmem, size = 0x12000, scoped, tag = 'internal scratch']
  %s0 = inlined_call_operand.vmem [shape: f32[2,128,64], index: 0, kind: input, shape index: {}]
  %s1 = inlined_call_operand.vmem [shape: bf16[128,384], index: 1, kind: input, shape index: {}]
  %s2 = inlined_call_operand.vmem [shape: f32[1,384], index: 2, kind: input, shape index: {}]
  %s3 = inlined_call_operand.vmem [shape: f32[128,128], index: 3, kind: input, shape index: {}]
  %s4 = inlined_call_operand.vmem [shape: f32[1,128], index: 4, kind: input, shape index: {}]
  %s5 = inlined_call_operand.vmem [shape: f32[1,128], index: 5, kind: input, shape index: {}]
  %s6 = inlined_call_operand.vmem [shape: f32[1,128], index: 6, kind: input, shape index: {}]
  %s7 = inlined_call_operand.hbm [shape: f32[2,64,128], index: 7, kind: output, shape index: {}]
  %s8 = sld [smem:[#allocation0]]
  $region38: #{tpu_custom_call.1} parent=0
    _
  %s10 = ssub.s32 1, %s8
  %s11 = scalar_select 0, %s10, %s8
  $region1: #{tpu_custom_call.1} parent=0
    #allocation2 [shape = 'u8[65536]{0}', space=vmem, size = 0x10000, scoped, tag = 'output window, operand 0, single buffered']
    #allocation3 [shape = 's32[1]{0}', space=sflag, size = 0x4, scoped, tag = 'scoped memory for tpu_custom_call.1']
    %12 = vsyncpa [#allocation3], 0
    // Predicated region
    $region2: #{tpu_custom_call.1} parent=1 // pred_check
      _
    $region3: #{tpu_custom_call.1} parent=1 // pred_check_branch
      %14 = sbr.rel (0) target = $region5
    $region4: #{tpu_custom_call.1} parent=1 // pred_region
      _
    $region5: #{tpu_custom_call.1} parent=1 // pred_fallthru
      _
    // Predicated region
    $region6: #{tpu_custom_call.1} parent=1 // pred_check
      _
    $region7: #{tpu_custom_call.1} parent=1 // pred_check_branch
      %16 = sbr.rel (0) target = $region9
    $region8: #{tpu_custom_call.1} parent=1 // pred_region
      _
    $region9: #{tpu_custom_call.1} parent=1 // pred_fallthru
      _
    // Predicated region
    $region10: #{tpu_custom_call.1} parent=1 // pred_check
      _
    $region11: #{tpu_custom_call.1} parent=1 // pred_check_branch
      %18 = sbr.rel (0) target = $region13
    $region12: #{tpu_custom_call.1} parent=1 // pred_region
      _
    $region13: #{tpu_custom_call.1} parent=1 // pred_fallthru
      _
    // Predicated region
    $region14: #{tpu_custom_call.1} parent=1 // pred_check
      _
    $region15: #{tpu_custom_call.1} parent=1 // pred_check_branch
      %20 = sbr.rel (0) target = $region17
    $region16: #{tpu_custom_call.1} parent=1 // pred_region
      _
    $region17: #{tpu_custom_call.1} parent=1 // pred_fallthru
      _
    // Predicated region
    $region18: #{tpu_custom_call.1} parent=1 // pred_check
      _
    $region19: #{tpu_custom_call.1} parent=1 // pred_check_branch
      %22 = sbr.rel (0) target = $region21
    $region20: #{tpu_custom_call.1} parent=1 // pred_region
      _
    $region21: #{tpu_custom_call.1} parent=1 // pred_fallthru
      _
    // Predicated region
    $region22: #{tpu_custom_call.1} parent=1 // pred_check
      _
    $region23: #{tpu_custom_call.1} parent=1 // pred_check_branch
      %24 = sbr.rel (0) target = $region25
    $region24: #{tpu_custom_call.1} parent=1 // pred_region
      _
    $region25: #{tpu_custom_call.1} parent=1 // pred_fallthru
      _
    // Predicated region
    $region26: #{tpu_custom_call.1} parent=1 // pred_check
      _
    $region27: #{tpu_custom_call.1} parent=1 // pred_check_branch
      %26 = sbr.rel (0) target = $region29
    $region28: #{tpu_custom_call.1} parent=1 // pred_region
      _
    $region29: #{tpu_custom_call.1} parent=1 // pred_fallthru
      _
    %v28 = vld [vmem:[%s0] sm:$0xff]
    %v29 = vld [vmem:[%s0 + $0x8] sm:$0xff]
    %v30 = vld [vmem:[%s0 + $0x10] sm:$0xff]
    %v31 = vld [vmem:[%s0 + $0x18] sm:$0xff]
    %v32 = vld [vmem:[%s0 + $0x20] sm:$0xff]
    %v33 = vld [vmem:[%s0 + $0x28] sm:$0xff]
    %v34 = vld [vmem:[%s0 + $0x30] sm:$0xff]
    %v35 = vld [vmem:[%s0 + $0x38] sm:$0xff]
    %v36 = vld [vmem:[%s0 + $0x40] sm:$0xff]
    %v37 = vld [vmem:[%s0 + $0x48] sm:$0xff]
    %v38 = vld [vmem:[%s0 + $0x50] sm:$0xff]
    %v39 = vld [vmem:[%s0 + $0x58] sm:$0xff]
    %v40 = vld [vmem:[%s0 + $0x60] sm:$0xff]
    %v41 = vld [vmem:[%s0 + $0x68] sm:$0xff]
    %v42 = vld [vmem:[%s0 + $0x70] sm:$0xff]
    %v43 = vld [vmem:[%s0 + $0x78] sm:$0xff]
    %v44 = vld [vmem:[%s0 + $0x80] sm:$0xff]
    %v45 = vld [vmem:[%s0 + $0x88] sm:$0xff]
    %v46 = vld [vmem:[%s0 + $0x90] sm:$0xff]
    %v47 = vld [vmem:[%s0 + $0x98] sm:$0xff]
    %v48 = vld [vmem:[%s0 + $0xa0] sm:$0xff]
    %v49 = vld [vmem:[%s0 + $0xa8] sm:$0xff]
    %v50 = vld [vmem:[%s0 + $0xb0] sm:$0xff]
    %v51 = vld [vmem:[%s0 + $0xb8] sm:$0xff]
    %v52 = vld [vmem:[%s0 + $0xc0] sm:$0xff]
    %v53 = vld [vmem:[%s0 + $0xc8] sm:$0xff]
    %v54 = vld [vmem:[%s0 + $0xd0] sm:$0xff]
    %v55 = vld [vmem:[%s0 + $0xd8] sm:$0xff]
    %v56 = vld [vmem:[%s0 + $0xe0] sm:$0xff]
    %v57 = vld [vmem:[%s0 + $0xe8] sm:$0xff]
    %v58 = vld [vmem:[%s0 + $0xf0] sm:$0xff]
    %v59 = vld [vmem:[%s0 + $0xf8] sm:$0xff]
    %60 = vxpose.xlu0.b32.start [1/16] %v28, 128
    %61 = vxpose.xlu0.b32.cont [2/16] %v29, 128
    %62 = vxpose.xlu0.b32.cont [3/16] %v30, 128
    %63 = vxpose.xlu0.b32.cont [4/16] %v31, 128
    %64 = vxpose.xlu0.b32.cont [5/16] %v32, 128
    %65 = vxpose.xlu0.b32.cont [6/16] %v33, 128
    %66 = vxpose.xlu0.b32.cont [7/16] %v34, 128
    %67 = vxpose.xlu0.b32.cont [8/16] %v35, 128
    %68 = vxpose.xlu0.b32.cont [9/16] %v36, 128
    %69 = vxpose.xlu0.b32.cont [10/16] %v37, 128
    %70 = vxpose.xlu0.b32.cont [11/16] %v38, 128
    %71 = vxpose.xlu0.b32.cont [12/16] %v39, 128
    %72 = vxpose.xlu0.b32.cont [13/16] %v40, 128
    %73 = vxpose.xlu0.b32.cont [14/16] %v41, 128
    %74 = vxpose.xlu0.b32.cont [15/16] %v42, 128
    %75 = vxpose.xlu0.b32.end [16/16] %v43, 128
    %v76 = vpop.trf.xlu0
    %v77 = vpop.trf.xlu0
    %v78 = vpop.trf.xlu0
    %v79 = vpop.trf.xlu0
    %v80 = vpop.trf.xlu0
    %v81 = vpop.trf.xlu0
    %v82 = vpop.trf.xlu0
    %v83 = vpop.trf.xlu0
    %v84 = vpop.trf.xlu0
    %v85 = vpop.trf.xlu0
    %v86 = vpop.trf.xlu0
    %v87 = vpop.trf.xlu0
    %v88 = vpop.trf.xlu0
    %v89 = vpop.trf.xlu0
    %v90 = vpop.trf.xlu0
    %v91 = vpop.trf.xlu0
    %92 = vxpose.xlu0.b32.start [1/16] %v44, 128
    %93 = vxpose.xlu0.b32.cont [2/16] %v45, 128
    %94 = vxpose.xlu0.b32.cont [3/16] %v46, 128
    %95 = vxpose.xlu0.b32.cont [4/16] %v47, 128
    %96 = vxpose.xlu0.b32.cont [5/16] %v48, 128
    %97 = vxpose.xlu0.b32.cont [6/16] %v49, 128
    %98 = vxpose.xlu0.b32.cont [7/16] %v50, 128
    %99 = vxpose.xlu0.b32.cont [8/16] %v51, 128
    %100 = vxpose.xlu0.b32.cont [9/16] %v52, 128
    %101 = vxpose.xlu0.b32.cont [10/16] %v53, 128
    %102 = vxpose.xlu0.b32.cont [11/16] %v54, 128
    %103 = vxpose.xlu0.b32.cont [12/16] %v55, 128
    %104 = vxpose.xlu0.b32.cont [13/16] %v56, 128
    %105 = vxpose.xlu0.b32.cont [14/16] %v57, 128
    %106 = vxpose.xlu0.b32.cont [15/16] %v58, 128
    %107 = vxpose.xlu0.b32.end [16/16] %v59, 128
    %v108 = vpop.trf.xlu0
    %v109 = vpop.trf.xlu0
    %v110 = vpop.trf.xlu0
    %v111 = vpop.trf.xlu0
    %v112 = vpop.trf.xlu0
    %v113 = vpop.trf.xlu0
    %v114 = vpop.trf.xlu0
    %v115 = vpop.trf.xlu0
    %v116 = vpop.trf.xlu0
    %v117 = vpop.trf.xlu0
    %v118 = vpop.trf.xlu0
    %v119 = vpop.trf.xlu0
    %v120 = vpop.trf.xlu0
    %v121 = vpop.trf.xlu0
    %v122 = vpop.trf.xlu0
    %v123 = vpop.trf.xlu0
    %v124 = vpack.c.bf16 %v77, %v76
    %v125 = vpack.c.bf16 %v79, %v78
    %v126 = vpack.c.bf16 %v81, %v80
    %v127 = vpack.c.bf16 %v83, %v82
    %v128 = vpack.c.bf16 %v109, %v108
    %v129 = vpack.c.bf16 %v111, %v110
    %v130 = vpack.c.bf16 %v113, %v112
    %v131 = vpack.c.bf16 %v115, %v114
    %v132 = vld [vmem:[%s1] sm:$0xff]
    %v133 = vld [vmem:[%s1 + $0x8] sm:$0xf]
    %v134 = vld [vmem:[%s1 + $0xc] sm:$0xff]
    %v135 = vld [vmem:[%s1 + $0x14] sm:$0xf]
    %v136 = vld [vmem:[%s1 + $0x18] sm:$0xff]
    %v137 = vld [vmem:[%s1 + $0x20] sm:$0xf]
    %v138 = vld [vmem:[%s1 + $0x24] sm:$0xff]
    %v139 = vld [vmem:[%s1 + $0x2c] sm:$0xf]
    %v140 = vld [vmem:[%s1 + $0x30] sm:$0xff]
    %v141 = vld [vmem:[%s1 + $0x38] sm:$0xf]
    %v142 = vld [vmem:[%s1 + $0x3c] sm:$0xff]
    %v143 = vld [vmem:[%s1 + $0x44] sm:$0xf]
    %v144 = vld [vmem:[%s1 + $0x48] sm:$0xff]
    %v145 = vld [vmem:[%s1 + $0x50] sm:$0xf]
    %v146 = vld [vmem:[%s1 + $0x54] sm:$0xff]
    %v147 = vld [vmem:[%s1 + $0x5c] sm:$0xf]
    %v148 = vld [vmem:[%s1 + $0x60] sm:$0xff]
    %v149 = vld [vmem:[%s1 + $0x68] sm:$0xf]
    %v150 = vld [vmem:[%s1 + $0x6c] sm:$0xff]
    %v151 = vld [vmem:[%s1 + $0x74] sm:$0xf]
    %v152 = vld [vmem:[%s1 + $0x78] sm:$0xff]
    %v153 = vld [vmem:[%s1 + $0x80] sm:$0xf]
    %v154 = vld [vmem:[%s1 + $0x84] sm:$0xff]
    %v155 = vld [vmem:[%s1 + $0x8c] sm:$0xf]
    %v156 = vld [vmem:[%s1 + $0x90] sm:$0xff]
    %v157 = vld [vmem:[%s1 + $0x98] sm:$0xf]
    %v158 = vld [vmem:[%s1 + $0x9c] sm:$0xff]
    %v159 = vld [vmem:[%s1 + $0xa4] sm:$0xf]
    %v160 = vld [vmem:[%s1 + $0xa8] sm:$0xff]
    %v161 = vld [vmem:[%s1 + $0xb0] sm:$0xf]
    %v162 = vld [vmem:[%s1 + $0xb4] sm:$0xff]
    %v163 = vld [vmem:[%s1 + $0xbc] sm:$0xf]
    %v164 = vld [vmem:[%s2] sm:$0x7]
    %v166 = vlaneseq
    %v167 = vshrl.u32 %v166, 7
    %v168 = vsub.s32 0, %v167
    %v169 = vrot.slane %v164, %v168
    %v170 = vlaneseq
    %v171 = vshrl.u32 %v170, 7
    %v172 = vsub.s32 1, %v171
    %v173 = vrot.slane %v164, %v172
    %v174 = vlaneseq
    %v175 = vshrl.u32 %v174, 7
    %v176 = vsub.s32 2, %v175
    %v177 = vrot.slane %v164, %v176
    %v213 = vunpack.c.l.b16 %v132
    %v214 = vunpack.c.h.b16 %v132
    %v215 = vunpack.c.l.b16 %v133
    %v216 = vunpack.c.l.b16 %v134
    %v217 = vunpack.c.h.b16 %v134
    %v218 = vunpack.c.l.b16 %v135
    %v219 = vunpack.c.l.b16 %v136
    %v220 = vunpack.c.h.b16 %v136
    %v221 = vunpack.c.l.b16 %v137
    %v222 = vunpack.c.l.b16 %v138
    %v223 = vunpack.c.h.b16 %v138
    %v224 = vunpack.c.l.b16 %v139
    %v225 = vunpack.c.l.b16 %v140
    %v226 = vunpack.c.h.b16 %v140
    %v227 = vunpack.c.l.b16 %v141
    %v228 = vunpack.c.l.b16 %v142
    %v229 = vunpack.c.h.b16 %v142
    %v230 = vunpack.c.l.b16 %v143
    %v231 = vunpack.c.l.b16 %v144
    %v232 = vunpack.c.h.b16 %v144
    %v233 = vunpack.c.l.b16 %v145
    %v234 = vunpack.c.l.b16 %v146
    %v235 = vunpack.c.h.b16 %v146
    %v236 = vunpack.c.l.b16 %v147
    %v237 = vunpack.c.l.b16 %v148
    %v238 = vunpack.c.h.b16 %v148
    %v239 = vunpack.c.l.b16 %v149
    %v240 = vunpack.c.l.b16 %v150
    %v241 = vunpack.c.h.b16 %v150
    %v242 = vunpack.c.l.b16 %v151
    %v243 = vunpack.c.l.b16 %v152
    %v244 = vunpack.c.h.b16 %v152
    %v245 = vunpack.c.l.b16 %v153
    %v246 = vunpack.c.l.b16 %v154
    %v247 = vunpack.c.h.b16 %v154
    %v248 = vunpack.c.l.b16 %v155
    %v249 = vunpack.c.l.b16 %v156
    %v250 = vunpack.c.h.b16 %v156
    %v251 = vunpack.c.l.b16 %v157
    %v252 = vunpack.c.l.b16 %v158
    %v253 = vunpack.c.h.b16 %v158
    %v254 = vunpack.c.l.b16 %v159
    %v255 = vunpack.c.l.b16 %v160
    %v256 = vunpack.c.h.b16 %v160
    %v257 = vunpack.c.l.b16 %v161
    %v258 = vunpack.c.l.b16 %v162
    %v259 = vunpack.c.h.b16 %v162
    %v260 = vunpack.c.l.b16 %v163
    %v261 = vpack.c.b16 %v216, %v213
    %v262 = vpack.c.b16 %v217, %v214
    %v263 = vpack.c.b16 %v218, %v215
    %v264 = vpack.c.b16 %v222, %v219
    %v265 = vpack.c.b16 %v223, %v220
    %v266 = vpack.c.b16 %v224, %v221
    %v267 = vpack.c.b16 %v228, %v225
    %v268 = vpack.c.b16 %v229, %v226
    %v269 = vpack.c.b16 %v230, %v227
    %v270 = vpack.c.b16 %v234, %v231
    %v271 = vpack.c.b16 %v235, %v232
    %v272 = vpack.c.b16 %v236, %v233
    %v273 = vpack.c.b16 %v240, %v237
    %v274 = vpack.c.b16 %v241, %v238
    %v275 = vpack.c.b16 %v242, %v239
    %v276 = vpack.c.b16 %v246, %v243
    %v277 = vpack.c.b16 %v247, %v244
    %v278 = vpack.c.b16 %v248, %v245
    %v279 = vpack.c.b16 %v252, %v249
    %v280 = vpack.c.b16 %v253, %v250
    %v281 = vpack.c.b16 %v254, %v251
    %v282 = vpack.c.b16 %v258, %v255
    %v283 = vpack.c.b16 %v259, %v256
    %v284 = vpack.c.b16 %v260, %v257
    %309 = vmatprep.subr.bf16.mxu0 %v283
    %310 = vmatpush1.bf16.msra.mxu0 %v282
    %311 = vmatprep.subr.bf16.mxu0 %v280
    %312 = vmatpush1.bf16.msra.mxu0 %v279
    %313 = vmatprep.subr.bf16.mxu0 %v277
    %314 = vmatpush1.bf16.msra.mxu0 %v276
    %315 = vmatprep.subr.bf16.mxu0 %v274
    %316 = vmatpush1.bf16.msra.mxu0 %v273
    %317 = vmatprep.subr.bf16.mxu0 %v271
    %318 = vmatpush1.bf16.msra.mxu0 %v270
    %319 = vmatprep.subr.bf16.mxu0 %v268
    %320 = vmatpush1.bf16.msra.mxu0 %v267
    %321 = vmatprep.subr.bf16.mxu0 %v265
    %322 = vmatpush1.bf16.msra.mxu0 %v264
    %323 = vmatprep.subr.bf16.mxu0 %v262
    %324 = vmatpush1.bf16.msra.mxu0 %v261
    %325 = vmatprep.subr.bf16.mxu0 0
    %326 = vmatpush2.bf16.msra.mxu0 0
    %327 = vmatprep.subr.bf16.mxu0 0
    %328 = vmatpush2.bf16.msra.mxu0 0
    %329 = vmatprep.subr.bf16.mxu0 0
    %330 = vmatpush2.bf16.msra.mxu0 0
    %331 = vmatprep.subr.bf16.mxu0 0
    %332 = vmatpush2.bf16.msra.mxu0 0
    %333 = vmatprep.subr.bf16.mxu0 0
    %334 = vmatpush2.bf16.msra.mxu0 0
    %335 = vmatprep.subr.bf16.mxu0 0
    %336 = vmatpush2.bf16.msra.mxu0 0
    %337 = vmatprep.subr.bf16.mxu0 0
    %338 = vmatpush2.bf16.msra.mxu0 0
    %339 = vmatprep.subr.bf16.mxu0 0
    %340 = vmatpush2.bf16.msra.mxu0 0
    %341 = vmatprep.mubr.bf16.mxu0 0
    %342 = vmatmul.mubr.bf16.gmra.mxu0 %v124
    %v343 = vpop.f32.mrf.mxu0
    %v344 = vadd.f32 %v169, %v343
    %v345 = vpop.f32.mrf.mxu0
    %v346 = vadd.f32 %v173, %v345
    %v347 = vpop.f32.mrf.mxu0
    %v348 = vadd.f32 %v169, %v347
    %v349 = vpop.f32.mrf.mxu0
    %v350 = vadd.f32 %v173, %v349
    %351 = vmatprep.mubr.bf16.mxu0 0
    %352 = vmatmul.mubr.bf16.gmra.mxu0 %v125
    %v353 = vpop.f32.mrf.mxu0
    %v354 = vadd.f32 %v169, %v353
    %v355 = vpop.f32.mrf.mxu0
    %v356 = vadd.f32 %v173, %v355
    %v357 = vpop.f32.mrf.mxu0
    %v358 = vadd.f32 %v169, %v357
    %v359 = vpop.f32.mrf.mxu0
    %v360 = vadd.f32 %v173, %v359
    %361 = vmatprep.mubr.bf16.mxu0 0
    %362 = vmatmul.mubr.bf16.gmra.mxu0 %v126
    %v363 = vpop.f32.mrf.mxu0
    %v364 = vadd.f32 %v169, %v363
    %v365 = vpop.f32.mrf.mxu0
    %v366 = vadd.f32 %v173, %v365
    %v367 = vpop.f32.mrf.mxu0
    %v368 = vadd.f32 %v169, %v367
    %v369 = vpop.f32.mrf.mxu0
    %v370 = vadd.f32 %v173, %v369
    %371 = vmatprep.mubr.bf16.mxu0 0
    %372 = vmatmul.mubr.bf16.gmra.mxu0 %v127
    %v373 = vpop.f32.mrf.mxu0
    %v374 = vadd.f32 %v169, %v373
    %v375 = vpop.f32.mrf.mxu0
    %v376 = vadd.f32 %v173, %v375
    %v377 = vpop.f32.mrf.mxu0
    %v378 = vadd.f32 %v169, %v377
    %v379 = vpop.f32.mrf.mxu0
    %v380 = vadd.f32 %v173, %v379
    %381 = vmatprep.mubr.bf16.mxu0 0
    %382 = vmatmul.mubr.bf16.gmra.mxu0 %v128
    %v383 = vpop.f32.mrf.mxu0
    %v384 = vadd.f32 %v169, %v383
    %v385 = vpop.f32.mrf.mxu0
    %v386 = vadd.f32 %v173, %v385
    %v387 = vpop.f32.mrf.mxu0
    %v388 = vadd.f32 %v169, %v387
    %v389 = vpop.f32.mrf.mxu0
    %v390 = vadd.f32 %v173, %v389
    %391 = vmatprep.mubr.bf16.mxu0 0
    %392 = vmatmul.mubr.bf16.gmra.mxu0 %v129
    %v393 = vpop.f32.mrf.mxu0
    %v394 = vadd.f32 %v169, %v393
    %v395 = vpop.f32.mrf.mxu0
    %v396 = vadd.f32 %v173, %v395
    %v397 = vpop.f32.mrf.mxu0
    %v398 = vadd.f32 %v169, %v397
    %v399 = vpop.f32.mrf.mxu0
    %v400 = vadd.f32 %v173, %v399
    %401 = vmatprep.mubr.bf16.mxu0 0
    %402 = vmatmul.mubr.bf16.gmra.mxu0 %v130
    %v403 = vpop.f32.mrf.mxu0
    %v404 = vadd.f32 %v169, %v403
    %v405 = vpop.f32.mrf.mxu0
    %v406 = vadd.f32 %v173, %v405
    %v407 = vpop.f32.mrf.mxu0
    %v408 = vadd.f32 %v169, %v407
    %v409 = vpop.f32.mrf.mxu0
    %v410 = vadd.f32 %v173, %v409
    %411 = vmatprep.mubr.bf16.mxu0 0
    %412 = vmatmul.mubr.bf16.gmra.mxu0 %v131
    %v413 = vpop.f32.mrf.mxu0
    %v414 = vadd.f32 %v169, %v413
    %v415 = vpop.f32.mrf.mxu0
    %v416 = vadd.f32 %v173, %v415
    %v417 = vpop.f32.mrf.mxu0
    %v418 = vadd.f32 %v169, %v417
    %v419 = vpop.f32.mrf.mxu0
    %v420 = vadd.f32 %v173, %v419
    %421 = vdwg.mxu0
    %422 = vmatprep.subr.bf16.mxu0 0
    %423 = vmatpush1.bf16.msra.mxu0 %v284
    %424 = vmatprep.subr.bf16.mxu0 0
    %425 = vmatpush1.bf16.msra.mxu0 %v281
    %426 = vmatprep.subr.bf16.mxu0 0
    %427 = vmatpush1.bf16.msra.mxu0 %v278
    %428 = vmatprep.subr.bf16.mxu0 0
    %429 = vmatpush1.bf16.msra.mxu0 %v275
    %430 = vmatprep.subr.bf16.mxu0 0
    %431 = vmatpush1.bf16.msra.mxu0 %v272
    %432 = vmatprep.subr.bf16.mxu0 0
    %433 = vmatpush1.bf16.msra.mxu0 %v269
    %434 = vmatprep.subr.bf16.mxu0 0
    %435 = vmatpush1.bf16.msra.mxu0 %v266
    %436 = vmatprep.subr.bf16.mxu0 0
    %437 = vmatpush1.bf16.msra.mxu0 %v263
    %438 = vmatprep.subr.bf16.mxu0 0
    %439 = vmatpush2.bf16.msra.mxu0 0
    %440 = vmatprep.subr.bf16.mxu0 0
    %441 = vmatpush2.bf16.msra.mxu0 0
    %442 = vmatprep.subr.bf16.mxu0 0
    %443 = vmatpush2.bf16.msra.mxu0 0
    %444 = vmatprep.subr.bf16.mxu0 0
    %445 = vmatpush2.bf16.msra.mxu0 0
    %446 = vmatprep.subr.bf16.mxu0 0
    %447 = vmatpush2.bf16.msra.mxu0 0
    %448 = vmatprep.subr.bf16.mxu0 0
    %449 = vmatpush2.bf16.msra.mxu0 0
    %450 = vmatprep.subr.bf16.mxu0 0
    %451 = vmatpush2.bf16.msra.mxu0 0
    %452 = vmatprep.subr.bf16.mxu0 0
    %453 = vmatpush2.bf16.msra.mxu0 0
    %454 = vmatprep.mubr.bf16.mxu0 0
    %455 = vmatmul.mubr.bf16.gmra.mxu0 %v124
    %v456 = vpop.f32.mrf.mxu0
    %v457 = vadd.f32 %v177, %v456
    %v458 = vpop.f32.mrf.mxu0
    %v459 = vpop.f32.mrf.mxu0
    %v460 = vadd.f32 %v177, %v459
    %v461 = vpop.f32.mrf.mxu0
    %462 = vmatprep.mubr.bf16.mxu0 0
    %463 = vmatmul.mubr.bf16.gmra.mxu0 %v125
    %v464 = vpop.f32.mrf.mxu0
    %v465 = vadd.f32 %v177, %v464
    %v466 = vpop.f32.mrf.mxu0
    %v467 = vpop.f32.mrf.mxu0
    %v468 = vadd.f32 %v177, %v467
    %v469 = vpop.f32.mrf.mxu0
    %470 = vmatprep.mubr.bf16.mxu0 0
    %471 = vmatmul.mubr.bf16.gmra.mxu0 %v126
    %v472 = vpop.f32.mrf.mxu0
    %v473 = vadd.f32 %v177, %v472
    %v474 = vpop.f32.mrf.mxu0
    %v475 = vpop.f32.mrf.mxu0
    %v476 = vadd.f32 %v177, %v475
    %v477 = vpop.f32.mrf.mxu0
    %478 = vmatprep.mubr.bf16.mxu0 0
    %479 = vmatmul.mubr.bf16.gmra.mxu0 %v127
    %v480 = vpop.f32.mrf.mxu0
    %v481 = vadd.f32 %v177, %v480
    %v482 = vpop.f32.mrf.mxu0
    %v483 = vpop.f32.mrf.mxu0
    %v484 = vadd.f32 %v177, %v483
    %v485 = vpop.f32.mrf.mxu0
    %486 = vmatprep.mubr.bf16.mxu0 0
    %487 = vmatmul.mubr.bf16.gmra.mxu0 %v128
    %v488 = vpop.f32.mrf.mxu0
    %v489 = vadd.f32 %v177, %v488
    %v490 = vpop.f32.mrf.mxu0
    %v491 = vpop.f32.mrf.mxu0
    %v492 = vadd.f32 %v177, %v491
    %v493 = vpop.f32.mrf.mxu0
    %494 = vmatprep.mubr.bf16.mxu0 0
    %495 = vmatmul.mubr.bf16.gmra.mxu0 %v129
    %v496 = vpop.f32.mrf.mxu0
    %v497 = vadd.f32 %v177, %v496
    %v498 = vpop.f32.mrf.mxu0
    %v499 = vpop.f32.mrf.mxu0
    %v500 = vadd.f32 %v177, %v499
    %v501 = vpop.f32.mrf.mxu0
    %502 = vmatprep.mubr.bf16.mxu0 0
    %503 = vmatmul.mubr.bf16.gmra.mxu0 %v130
    %v504 = vpop.f32.mrf.mxu0
    %v505 = vadd.f32 %v177, %v504
    %v506 = vpop.f32.mrf.mxu0
    %v507 = vpop.f32.mrf.mxu0
    %v508 = vadd.f32 %v177, %v507
    %v509 = vpop.f32.mrf.mxu0
    %510 = vmatprep.mubr.bf16.mxu0 0
    %511 = vmatmul.mubr.bf16.gmra.mxu0 %v131
    %v512 = vpop.f32.mrf.mxu0
    %v513 = vadd.f32 %v177, %v512
    %v514 = vpop.f32.mrf.mxu0
    %v515 = vpop.f32.mrf.mxu0
    %v516 = vadd.f32 %v177, %v515
    %v517 = vpop.f32.mrf.mxu0
    %518 = vdwg.mxu0
    %535 = vrot.lane.b32.xlu0 %v344, 96
    %v536 = vpop.permute.xlu0 %535
    %537 = vrot.lane.b32.xlu0 %v348, 96
    %v538 = vpop.permute.xlu0 %537
    %539 = vrot.lane.b32.xlu0 %v354, 96
    %v540 = vpop.permute.xlu0 %539
    %541 = vrot.lane.b32.xlu0 %v358, 96
    %v542 = vpop.permute.xlu0 %541
    %543 = vrot.lane.b32.xlu0 %v364, 96
    %v544 = vpop.permute.xlu0 %543
    %545 = vrot.lane.b32.xlu0 %v368, 96
    %v546 = vpop.permute.xlu0 %545
    %547 = vrot.lane.b32.xlu0 %v374, 96
    %v548 = vpop.permute.xlu0 %547
    %549 = vrot.lane.b32.xlu0 %v378, 96
    %v550 = vpop.permute.xlu0 %549
    %551 = vrot.lane.b32.xlu0 %v384, 96
    %v552 = vpop.permute.xlu0 %551
    %553 = vrot.lane.b32.xlu0 %v388, 96
    %v554 = vpop.permute.xlu0 %553
    %555 = vrot.lane.b32.xlu0 %v394, 96
    %v556 = vpop.permute.xlu0 %555
    %557 = vrot.lane.b32.xlu0 %v398, 96
    %v558 = vpop.permute.xlu0 %557
    %559 = vrot.lane.b32.xlu0 %v404, 96
    %v560 = vpop.permute.xlu0 %559
    %561 = vrot.lane.b32.xlu0 %v408, 96
    %v562 = vpop.permute.xlu0 %561
    %563 = vrot.lane.b32.xlu0 %v414, 96
    %v564 = vpop.permute.xlu0 %563
    %565 = vrot.lane.b32.xlu0 %v418, 96
    %v566 = vpop.permute.xlu0 %565
    %583 = vrot.lane.b32.xlu0 %v344, 64
    %v584 = vpop.permute.xlu0 %583
    %585 = vrot.lane.b32.xlu0 %v348, 64
    %v586 = vpop.permute.xlu0 %585
    %587 = vrot.lane.b32.xlu0 %v354, 64
    %v588 = vpop.permute.xlu0 %587
    %589 = vrot.lane.b32.xlu0 %v358, 64
    %v590 = vpop.permute.xlu0 %589
    %591 = vrot.lane.b32.xlu0 %v364, 64
    %v592 = vpop.permute.xlu0 %591
    %593 = vrot.lane.b32.xlu0 %v368, 64
    %v594 = vpop.permute.xlu0 %593
    %595 = vrot.lane.b32.xlu0 %v374, 64
    %v596 = vpop.permute.xlu0 %595
    %597 = vrot.lane.b32.xlu0 %v378, 64
    %v598 = vpop.permute.xlu0 %597
    %599 = vrot.lane.b32.xlu0 %v384, 64
    %v600 = vpop.permute.xlu0 %599
    %601 = vrot.lane.b32.xlu0 %v388, 64
    %v602 = vpop.permute.xlu0 %601
    %603 = vrot.lane.b32.xlu0 %v394, 64
    %v604 = vpop.permute.xlu0 %603
    %605 = vrot.lane.b32.xlu0 %v398, 64
    %v606 = vpop.permute.xlu0 %605
    %607 = vrot.lane.b32.xlu0 %v404, 64
    %v608 = vpop.permute.xlu0 %607
    %609 = vrot.lane.b32.xlu0 %v408, 64
    %v610 = vpop.permute.xlu0 %609
    %611 = vrot.lane.b32.xlu0 %v414, 64
    %v612 = vpop.permute.xlu0 %611
    %613 = vrot.lane.b32.xlu0 %v418, 64
    %v614 = vpop.permute.xlu0 %613
    %631 = vrot.lane.b32.xlu0 %v344, 32
    %v632 = vpop.permute.xlu0 %631
    %633 = vrot.lane.b32.xlu0 %v348, 32
    %v634 = vpop.permute.xlu0 %633
    %635 = vrot.lane.b32.xlu0 %v354, 32
    %v636 = vpop.permute.xlu0 %635
    %637 = vrot.lane.b32.xlu0 %v358, 32
    %v638 = vpop.permute.xlu0 %637
    %639 = vrot.lane.b32.xlu0 %v364, 32
    %v640 = vpop.permute.xlu0 %639
    %641 = vrot.lane.b32.xlu0 %v368, 32
    %v642 = vpop.permute.xlu0 %641
    %643 = vrot.lane.b32.xlu0 %v374, 32
    %v644 = vpop.permute.xlu0 %643
    %645 = vrot.lane.b32.xlu0 %v378, 32
    %v646 = vpop.permute.xlu0 %645
    %647 = vrot.lane.b32.xlu0 %v384, 32
    %v648 = vpop.permute.xlu0 %647
    %649 = vrot.lane.b32.xlu0 %v388, 32
    %v650 = vpop.permute.xlu0 %649
    %651 = vrot.lane.b32.xlu0 %v394, 32
    %v652 = vpop.permute.xlu0 %651
    %653 = vrot.lane.b32.xlu0 %v398, 32
    %v654 = vpop.permute.xlu0 %653
    %655 = vrot.lane.b32.xlu0 %v404, 32
    %v656 = vpop.permute.xlu0 %655
    %657 = vrot.lane.b32.xlu0 %v408, 32
    %v658 = vpop.permute.xlu0 %657
    %659 = vrot.lane.b32.xlu0 %v414, 32
    %v660 = vpop.permute.xlu0 %659
    %661 = vrot.lane.b32.xlu0 %v418, 32
    %v662 = vpop.permute.xlu0 %661
    %v679 = vpack.c.bf16 %v348, %v344
    %v680 = vpack.c.bf16 %v358, %v354
    %v681 = vpack.c.bf16 %v368, %v364
    %v682 = vpack.c.bf16 %v378, %v374
    %v683 = vpack.c.bf16 %v388, %v384
    %v684 = vpack.c.bf16 %v398, %v394
    %v685 = vpack.c.bf16 %v408, %v404
    %v686 = vpack.c.bf16 %v418, %v414
    %v687 = vpack.c.bf16 %v538, %v536
    %v688 = vpack.c.bf16 %v542, %v540
    %v689 = vpack.c.bf16 %v546, %v544
    %v690 = vpack.c.bf16 %v550, %v548
    %v691 = vpack.c.bf16 %v554, %v552
    %v692 = vpack.c.bf16 %v558, %v556
    %v693 = vpack.c.bf16 %v562, %v560
    %v694 = vpack.c.bf16 %v566, %v564
    %v695 = vpack.c.bf16 %v586, %v584
    %v696 = vpack.c.bf16 %v590, %v588
    %v697 = vpack.c.bf16 %v594, %v592
    %v698 = vpack.c.bf16 %v598, %v596
    %v699 = vpack.c.bf16 %v602, %v600
    %v700 = vpack.c.bf16 %v606, %v604
    %v701 = vpack.c.bf16 %v610, %v608
    %v702 = vpack.c.bf16 %v614, %v612
    %v703 = vpack.c.bf16 %v634, %v632
    %v704 = vpack.c.bf16 %v638, %v636
    %v705 = vpack.c.bf16 %v642, %v640
    %v706 = vpack.c.bf16 %v646, %v644
    %v707 = vpack.c.bf16 %v650, %v648
    %v708 = vpack.c.bf16 %v654, %v652
    %v709 = vpack.c.bf16 %v658, %v656
    %v710 = vpack.c.bf16 %v662, %v660
    %727 = vrot.lane.b32.xlu0 %v346, 96
    %v728 = vpop.permute.xlu0 %727
    %729 = vrot.lane.b32.xlu0 %v350, 96
    %v730 = vpop.permute.xlu0 %729
    %731 = vrot.lane.b32.xlu0 %v356, 96
    %v732 = vpop.permute.xlu0 %731
    %733 = vrot.lane.b32.xlu0 %v360, 96
    %v734 = vpop.permute.xlu0 %733
    %735 = vrot.lane.b32.xlu0 %v366, 96
    %v736 = vpop.permute.xlu0 %735
    %737 = vrot.lane.b32.xlu0 %v370, 96
    %v738 = vpop.permute.xlu0 %737
    %739 = vrot.lane.b32.xlu0 %v376, 96
    %v740 = vpop.permute.xlu0 %739
    %741 = vrot.lane.b32.xlu0 %v380, 96
    %v742 = vpop.permute.xlu0 %741
    %743 = vrot.lane.b32.xlu0 %v386, 96
    %v744 = vpop.permute.xlu0 %743
    %745 = vrot.lane.b32.xlu0 %v390, 96
    %v746 = vpop.permute.xlu0 %745
    %747 = vrot.lane.b32.xlu0 %v396, 96
    %v748 = vpop.permute.xlu0 %747
    %749 = vrot.lane.b32.xlu0 %v400, 96
    %v750 = vpop.permute.xlu0 %749
    %751 = vrot.lane.b32.xlu0 %v406, 96
    %v752 = vpop.permute.xlu0 %751
    %753 = vrot.lane.b32.xlu0 %v410, 96
    %v754 = vpop.permute.xlu0 %753
    %755 = vrot.lane.b32.xlu0 %v416, 96
    %v756 = vpop.permute.xlu0 %755
    %757 = vrot.lane.b32.xlu0 %v420, 96
    %v758 = vpop.permute.xlu0 %757
    %775 = vrot.lane.b32.xlu0 %v346, 64
    %v776 = vpop.permute.xlu0 %775
    %777 = vrot.lane.b32.xlu0 %v350, 64
    %v778 = vpop.permute.xlu0 %777
    %779 = vrot.lane.b32.xlu0 %v356, 64
    %v780 = vpop.permute.xlu0 %779
    %781 = vrot.lane.b32.xlu0 %v360, 64
    %v782 = vpop.permute.xlu0 %781
    %783 = vrot.lane.b32.xlu0 %v366, 64
    %v784 = vpop.permute.xlu0 %783
    %785 = vrot.lane.b32.xlu0 %v370, 64
    %v786 = vpop.permute.xlu0 %785
    %787 = vrot.lane.b32.xlu0 %v376, 64
    %v788 = vpop.permute.xlu0 %787
    %789 = vrot.lane.b32.xlu0 %v380, 64
    %v790 = vpop.permute.xlu0 %789
    %791 = vrot.lane.b32.xlu0 %v386, 64
    %v792 = vpop.permute.xlu0 %791
    %793 = vrot.lane.b32.xlu0 %v390, 64
    %v794 = vpop.permute.xlu0 %793
    %795 = vrot.lane.b32.xlu0 %v396, 64
    %v796 = vpop.permute.xlu0 %795
    %797 = vrot.lane.b32.xlu0 %v400, 64
    %v798 = vpop.permute.xlu0 %797
    %799 = vrot.lane.b32.xlu0 %v406, 64
    %v800 = vpop.permute.xlu0 %799
    %801 = vrot.lane.b32.xlu0 %v410, 64
    %v802 = vpop.permute.xlu0 %801
    %803 = vrot.lane.b32.xlu0 %v416, 64
    %v804 = vpop.permute.xlu0 %803
    %805 = vrot.lane.b32.xlu0 %v420, 64
    %v806 = vpop.permute.xlu0 %805
    %823 = vrot.lane.b32.xlu0 %v346, 32
    %v824 = vpop.permute.xlu0 %823
    %825 = vrot.lane.b32.xlu0 %v350, 32
    %v826 = vpop.permute.xlu0 %825
    %827 = vrot.lane.b32.xlu0 %v356, 32
    %v828 = vpop.permute.xlu0 %827
    %829 = vrot.lane.b32.xlu0 %v360, 32
    %v830 = vpop.permute.xlu0 %829
    %831 = vrot.lane.b32.xlu0 %v366, 32
    %v832 = vpop.permute.xlu0 %831
    %833 = vrot.lane.b32.xlu0 %v370, 32
    %v834 = vpop.permute.xlu0 %833
    %835 = vrot.lane.b32.xlu0 %v376, 32
    %v836 = vpop.permute.xlu0 %835
    %837 = vrot.lane.b32.xlu0 %v380, 32
    %v838 = vpop.permute.xlu0 %837
    %839 = vrot.lane.b32.xlu0 %v386, 32
    %v840 = vpop.permute.xlu0 %839
    %841 = vrot.lane.b32.xlu0 %v390, 32
    %v842 = vpop.permute.xlu0 %841
    %843 = vrot.lane.b32.xlu0 %v396, 32
    %v844 = vpop.permute.xlu0 %843
    %845 = vrot.lane.b32.xlu0 %v400, 32
    %v846 = vpop.permute.xlu0 %845
    %847 = vrot.lane.b32.xlu0 %v406, 32
    %v848 = vpop.permute.xlu0 %847
    %849 = vrot.lane.b32.xlu0 %v410, 32
    %v850 = vpop.permute.xlu0 %849
    %851 = vrot.lane.b32.xlu0 %v416, 32
    %v852 = vpop.permute.xlu0 %851
    %853 = vrot.lane.b32.xlu0 %v420, 32
    %v854 = vpop.permute.xlu0 %853
    %v871 = vpack.c.bf16 %v350, %v346
    %v872 = vpack.c.bf16 %v360, %v356
    %v873 = vpack.c.bf16 %v370, %v366
    %v874 = vpack.c.bf16 %v380, %v376
    %v875 = vpack.c.bf16 %v390, %v386
    %v876 = vpack.c.bf16 %v400, %v396
    %v877 = vpack.c.bf16 %v410, %v406
    %v878 = vpack.c.bf16 %v420, %v416
    %v879 = vpack.c.bf16 %v730, %v728
    %v880 = vpack.c.bf16 %v734, %v732
    %v881 = vpack.c.bf16 %v738, %v736
    %v882 = vpack.c.bf16 %v742, %v740
    %v883 = vpack.c.bf16 %v746, %v744
    %v884 = vpack.c.bf16 %v750, %v748
    %v885 = vpack.c.bf16 %v754, %v752
    %v886 = vpack.c.bf16 %v758, %v756
    %v887 = vpack.c.bf16 %v778, %v776
    %v888 = vpack.c.bf16 %v782, %v780
    %v889 = vpack.c.bf16 %v786, %v784
    %v890 = vpack.c.bf16 %v790, %v788
    %v891 = vpack.c.bf16 %v794, %v792
    %v892 = vpack.c.bf16 %v798, %v796
    %v893 = vpack.c.bf16 %v802, %v800
    %v894 = vpack.c.bf16 %v806, %v804
    %v895 = vpack.c.bf16 %v826, %v824
    %v896 = vpack.c.bf16 %v830, %v828
    %v897 = vpack.c.bf16 %v834, %v832
    %v898 = vpack.c.bf16 %v838, %v836
    %v899 = vpack.c.bf16 %v842, %v840
    %v900 = vpack.c.bf16 %v846, %v844
    %v901 = vpack.c.bf16 %v850, %v848
    %v902 = vpack.c.bf16 %v854, %v852
    %919 = vrot.lane.b32.xlu0 %v457, 96
    %v920 = vpop.permute.xlu0 %919
    %921 = vrot.lane.b32.xlu0 %v460, 96
    %v922 = vpop.permute.xlu0 %921
    %923 = vrot.lane.b32.xlu0 %v465, 96
    %v924 = vpop.permute.xlu0 %923
    %925 = vrot.lane.b32.xlu0 %v468, 96
    %v926 = vpop.permute.xlu0 %925
    %927 = vrot.lane.b32.xlu0 %v473, 96
    %v928 = vpop.permute.xlu0 %927
    %929 = vrot.lane.b32.xlu0 %v476, 96
    %v930 = vpop.permute.xlu0 %929
    %931 = vrot.lane.b32.xlu0 %v481, 96
    %v932 = vpop.permute.xlu0 %931
    %933 = vrot.lane.b32.xlu0 %v484, 96
    %v934 = vpop.permute.xlu0 %933
    %935 = vrot.lane.b32.xlu0 %v489, 96
    %v936 = vpop.permute.xlu0 %935
    %937 = vrot.lane.b32.xlu0 %v492, 96
    %v938 = vpop.permute.xlu0 %937
    %939 = vrot.lane.b32.xlu0 %v497, 96
    %v940 = vpop.permute.xlu0 %939
    %941 = vrot.lane.b32.xlu0 %v500, 96
    %v942 = vpop.permute.xlu0 %941
    %943 = vrot.lane.b32.xlu0 %v505, 96
    %v944 = vpop.permute.xlu0 %943
    %945 = vrot.lane.b32.xlu0 %v508, 96
    %v946 = vpop.permute.xlu0 %945
    %947 = vrot.lane.b32.xlu0 %v513, 96
    %v948 = vpop.permute.xlu0 %947
    %949 = vrot.lane.b32.xlu0 %v516, 96
    %v950 = vpop.permute.xlu0 %949
    %967 = vrot.lane.b32.xlu0 %v457, 64
    %v968 = vpop.permute.xlu0 %967
    %969 = vrot.lane.b32.xlu0 %v460, 64
    %v970 = vpop.permute.xlu0 %969
    %971 = vrot.lane.b32.xlu0 %v465, 64
    %v972 = vpop.permute.xlu0 %971
    %973 = vrot.lane.b32.xlu0 %v468, 64
    %v974 = vpop.permute.xlu0 %973
    %975 = vrot.lane.b32.xlu0 %v473, 64
    %v976 = vpop.permute.xlu0 %975
    %977 = vrot.lane.b32.xlu0 %v476, 64
    %v978 = vpop.permute.xlu0 %977
    %979 = vrot.lane.b32.xlu0 %v481, 64
    %v980 = vpop.permute.xlu0 %979
    %981 = vrot.lane.b32.xlu0 %v484, 64
    %v982 = vpop.permute.xlu0 %981
    %983 = vrot.lane.b32.xlu0 %v489, 64
    %v984 = vpop.permute.xlu0 %983
    %985 = vrot.lane.b32.xlu0 %v492, 64
    %v986 = vpop.permute.xlu0 %985
    %987 = vrot.lane.b32.xlu0 %v497, 64
    %v988 = vpop.permute.xlu0 %987
    %989 = vrot.lane.b32.xlu0 %v500, 64
    %v990 = vpop.permute.xlu0 %989
    %991 = vrot.lane.b32.xlu0 %v505, 64
    %v992 = vpop.permute.xlu0 %991
    %993 = vrot.lane.b32.xlu0 %v508, 64
    %v994 = vpop.permute.xlu0 %993
    %995 = vrot.lane.b32.xlu0 %v513, 64
    %v996 = vpop.permute.xlu0 %995
    %997 = vrot.lane.b32.xlu0 %v516, 64
    %v998 = vpop.permute.xlu0 %997
    %1015 = vrot.lane.b32.xlu0 %v457, 32
    %v1016 = vpop.permute.xlu0 %1015
    %1017 = vrot.lane.b32.xlu0 %v460, 32
    %v1018 = vpop.permute.xlu0 %1017
    %1019 = vrot.lane.b32.xlu0 %v465, 32
    %v1020 = vpop.permute.xlu0 %1019
    %1021 = vrot.lane.b32.xlu0 %v468, 32
    %v1022 = vpop.permute.xlu0 %1021
    %1023 = vrot.lane.b32.xlu0 %v473, 32
    %v1024 = vpop.permute.xlu0 %1023
    %1025 = vrot.lane.b32.xlu0 %v476, 32
    %v1026 = vpop.permute.xlu0 %1025
    %1027 = vrot.lane.b32.xlu0 %v481, 32
    %v1028 = vpop.permute.xlu0 %1027
    %1029 = vrot.lane.b32.xlu0 %v484, 32
    %v1030 = vpop.permute.xlu0 %1029
    %1031 = vrot.lane.b32.xlu0 %v489, 32
    %v1032 = vpop.permute.xlu0 %1031
    %1033 = vrot.lane.b32.xlu0 %v492, 32
    %v1034 = vpop.permute.xlu0 %1033
    %1035 = vrot.lane.b32.xlu0 %v497, 32
    %v1036 = vpop.permute.xlu0 %1035
    %1037 = vrot.lane.b32.xlu0 %v500, 32
    %v1038 = vpop.permute.xlu0 %1037
    %1039 = vrot.lane.b32.xlu0 %v505, 32
    %v1040 = vpop.permute.xlu0 %1039
    %1041 = vrot.lane.b32.xlu0 %v508, 32
    %v1042 = vpop.permute.xlu0 %1041
    %1043 = vrot.lane.b32.xlu0 %v513, 32
    %v1044 = vpop.permute.xlu0 %1043
    %1045 = vrot.lane.b32.xlu0 %v516, 32
    %v1046 = vpop.permute.xlu0 %1045
    %v1063 = vpack.c.bf16 %v460, %v457
    %v1064 = vpack.c.bf16 %v468, %v465
    %v1065 = vpack.c.bf16 %v476, %v473
    %v1066 = vpack.c.bf16 %v484, %v481
    %v1067 = vpack.c.bf16 %v492, %v489
    %v1068 = vpack.c.bf16 %v500, %v497
    %v1069 = vpack.c.bf16 %v508, %v505
    %v1070 = vpack.c.bf16 %v516, %v513
    %v1071 = vpack.c.bf16 %v922, %v920
    %v1072 = vpack.c.bf16 %v926, %v924
    %v1073 = vpack.c.bf16 %v930, %v928
    %v1074 = vpack.c.bf16 %v934, %v932
    %v1075 = vpack.c.bf16 %v938, %v936
    %v1076 = vpack.c.bf16 %v942, %v940
    %v1077 = vpack.c.bf16 %v946, %v944
    %v1078 = vpack.c.bf16 %v950, %v948
    %v1079 = vpack.c.bf16 %v970, %v968
    %v1080 = vpack.c.bf16 %v974, %v972
    %v1081 = vpack.c.bf16 %v978, %v976
    %v1082 = vpack.c.bf16 %v982, %v980
    %v1083 = vpack.c.bf16 %v986, %v984
    %v1084 = vpack.c.bf16 %v990, %v988
    %v1085 = vpack.c.bf16 %v994, %v992
    %v1086 = vpack.c.bf16 %v998, %v996
    %v1087 = vpack.c.bf16 %v1018, %v1016
    %v1088 = vpack.c.bf16 %v1022, %v1020
    %v1089 = vpack.c.bf16 %v1026, %v1024
    %v1090 = vpack.c.bf16 %v1030, %v1028
    %v1091 = vpack.c.bf16 %v1034, %v1032
    %v1092 = vpack.c.bf16 %v1038, %v1036
    %v1093 = vpack.c.bf16 %v1042, %v1040
    %v1094 = vpack.c.bf16 %v1046, %v1044
    %vm1095 = vcmask 261120
    %v1097 = vsel %vm1095, %v679, 0
    %v1100 = vsel %vm1095, %v680, 0
    %v1103 = vsel %vm1095, %v681, 0
    %v1106 = vsel %vm1095, %v682, 0
    %v1109 = vsel %vm1095, %v871, 0
    %v1112 = vsel %vm1095, %v872, 0
    %v1115 = vsel %vm1095, %v873, 0
    %v1118 = vsel %vm1095, %v874, 0
    %1120 = vmatprep.subr.bf16.mxu0 0
    %1121 = vmatpush1.bf16.xpose.msra.mxu0 0
    %1122 = vmatprep.subr.bf16.mxu0 0
    %1123 = vmatpush1.bf16.xpose.msra.mxu0 0
    %1124 = vmatprep.subr.bf16.mxu0 0
    %1125 = vmatpush1.bf16.xpose.msra.mxu0 0
    %1126 = vmatprep.subr.bf16.mxu0 0
    %1127 = vmatpush1.bf16.xpose.msra.mxu0 0
    %1128 = vmatprep.subr.bf16.mxu0 0
    %1129 = vmatpush1.bf16.xpose.msra.mxu0 %v1118
    %1130 = vmatprep.subr.bf16.mxu0 0
    %1131 = vmatpush1.bf16.xpose.msra.mxu0 %v1115
    %1132 = vmatprep.subr.bf16.mxu0 0
    %1133 = vmatpush1.bf16.xpose.msra.mxu0 %v1112
    %1134 = vmatprep.subr.bf16.mxu0 0
    %1135 = vmatpush1.bf16.xpose.msra.mxu0 %v1109
    %1136 = vmatprep.subr.bf16.mxu0 0
    %1137 = vmatpush2.bf16.xpose.msra.mxu0 0
    %1138 = vmatprep.subr.bf16.mxu0 0
    %1139 = vmatpush2.bf16.xpose.msra.mxu0 0
    %1140 = vmatprep.subr.bf16.mxu0 0
    %1141 = vmatpush2.bf16.xpose.msra.mxu0 0
    %1142 = vmatprep.subr.bf16.mxu0 0
    %1143 = vmatpush2.bf16.xpose.msra.mxu0 0
    %1144 = vmatprep.subr.bf16.mxu0 0
    %1145 = vmatpush2.bf16.xpose.msra.mxu0 0
    %1146 = vmatprep.subr.bf16.mxu0 0
    %1147 = vmatpush2.bf16.xpose.msra.mxu0 0
    %1148 = vmatprep.subr.bf16.mxu0 0
    %1149 = vmatpush2.bf16.xpose.msra.mxu0 0
    %1150 = vmatprep.subr.bf16.mxu0 0
    %1151 = vmatpush2.bf16.xpose.msra.mxu0 0
    %1152 = vmatprep.mubr.bf16.mxu0 0
    %1153 = vmatmul.mubr.bf16.gmra.mxu0 %v1097
    %v1154 = vpop.f32.mrf.mxu0
    %v1155 = vadd.f32 0.0, %v1154
    %v1156 = vpop.f32.mrf.mxu0
    %v1157 = vpop.f32.mrf.mxu0
    %v1158 = vadd.f32 0.0, %v1157
    %v1159 = vpop.f32.mrf.mxu0
    %1160 = vmatprep.mubr.bf16.mxu0 0
    %1161 = vmatmul.mubr.bf16.gmra.mxu0 %v1100
    %v1162 = vpop.f32.mrf.mxu0
    %v1163 = vadd.f32 0.0, %v1162
    %v1164 = vpop.f32.mrf.mxu0
    %v1165 = vpop.f32.mrf.mxu0
    %v1166 = vadd.f32 0.0, %v1165
    %v1167 = vpop.f32.mrf.mxu0
    %1168 = vmatprep.mubr.bf16.mxu0 0
    %1169 = vmatmul.mubr.bf16.gmra.mxu0 %v1103
    %v1170 = vpop.f32.mrf.mxu0
    %v1171 = vadd.f32 0.0, %v1170
    %v1172 = vpop.f32.mrf.mxu0
    %v1173 = vpop.f32.mrf.mxu0
    %v1174 = vadd.f32 0.0, %v1173
    %v1175 = vpop.f32.mrf.mxu0
    %1176 = vmatprep.mubr.bf16.mxu0 0
    %1177 = vmatmul.mubr.bf16.gmra.mxu0 %v1106
    %v1178 = vpop.f32.mrf.mxu0
    %v1179 = vadd.f32 0.0, %v1178
    %v1180 = vpop.f32.mrf.mxu0
    %v1181 = vpop.f32.mrf.mxu0
    %v1182 = vadd.f32 0.0, %v1181
    %v1183 = vpop.f32.mrf.mxu0
    %1184 = vdwg.mxu0
    %v1186 = vsel %vm1095, %v683, 0
    %v1189 = vsel %vm1095, %v684, 0
    %v1192 = vsel %vm1095, %v685, 0
    %v1195 = vsel %vm1095, %v686, 0
    %v1198 = vsel %vm1095, %v875, 0
    %v1201 = vsel %vm1095, %v876, 0
    %v1204 = vsel %vm1095, %v877, 0
    %v1207 = vsel %vm1095, %v878, 0
    %1209 = vmatprep.subr.bf16.mxu0 0
    %1210 = vmatpush1.bf16.xpose.msra.mxu0 0
    %1211 = vmatprep.subr.bf16.mxu0 0
    %1212 = vmatpush1.bf16.xpose.msra.mxu0 0
    %1213 = vmatprep.subr.bf16.mxu0 0
    %1214 = vmatpush1.bf16.xpose.msra.mxu0 0
    %1215 = vmatprep.subr.bf16.mxu0 0
    %1216 = vmatpush1.bf16.xpose.msra.mxu0 0
    %1217 = vmatprep.subr.bf16.mxu0 0
    %1218 = vmatpush1.bf16.xpose.msra.mxu0 %v1207
    %1219 = vmatprep.subr.bf16.mxu0 0
    %1220 = vmatpush1.bf16.xpose.msra.mxu0 %v1204
    %1221 = vmatprep.subr.bf16.mxu0 0
    %1222 = vmatpush1.bf16.xpose.msra.mxu0 %v1201
    %1223 = vmatprep.subr.bf16.mxu0 0
    %1224 = vmatpush1.bf16.xpose.msra.mxu0 %v1198
    %1225 = vmatprep.subr.bf16.mxu0 0
    %1226 = vmatpush2.bf16.xpose.msra.mxu0 0
    %1227 = vmatprep.subr.bf16.mxu0 0
    %1228 = vmatpush2.bf16.xpose.msra.mxu0 0
    %1229 = vmatprep.subr.bf16.mxu0 0
    %1230 = vmatpush2.bf16.xpose.msra.mxu0 0
    %1231 = vmatprep.subr.bf16.mxu0 0
    %1232 = vmatpush2.bf16.xpose.msra.mxu0 0
    %1233 = vmatprep.subr.bf16.mxu0 0
    %1234 = vmatpush2.bf16.xpose.msra.mxu0 0
    %1235 = vmatprep.subr.bf16.mxu0 0
    %1236 = vmatpush2.bf16.xpose.msra.mxu0 0
    %1237 = vmatprep.subr.bf16.mxu0 0
    %1238 = vmatpush2.bf16.xpose.msra.mxu0 0
    %1239 = vmatprep.subr.bf16.mxu0 0
    %1240 = vmatpush2.bf16.xpose.msra.mxu0 0
    %1241 = vmatprep.mubr.bf16.mxu0 0
    %1242 = vmatmul.mubr.bf16.gmra.mxu0 %v1186
    %v1243 = vpop.f32.mrf.mxu0
    %v1244 = vadd.f32 0.0, %v1243
    %v1245 = vpop.f32.mrf.mxu0
    %v1246 = vpop.f32.mrf.mxu0
    %v1247 = vadd.f32 0.0, %v1246
    %v1248 = vpop.f32.mrf.mxu0
    %1249 = vmatprep.mubr.bf16.mxu0 0
    %1250 = vmatmul.mubr.bf16.gmra.mxu0 %v1189
    %v1251 = vpop.f32.mrf.mxu0
    %v1252 = vadd.f32 0.0, %v1251
    %v1253 = vpop.f32.mrf.mxu0
    %v1254 = vpop.f32.mrf.mxu0
    %v1255 = vadd.f32 0.0, %v1254
    %v1256 = vpop.f32.mrf.mxu0
    %1257 = vmatprep.mubr.bf16.mxu0 0
    %1258 = vmatmul.mubr.bf16.gmra.mxu0 %v1192
    %v1259 = vpop.f32.mrf.mxu0
    %v1260 = vadd.f32 0.0, %v1259
    %v1261 = vpop.f32.mrf.mxu0
    %v1262 = vpop.f32.mrf.mxu0
    %v1263 = vadd.f32 0.0, %v1262
    %v1264 = vpop.f32.mrf.mxu0
    %1265 = vmatprep.mubr.bf16.mxu0 0
    %1266 = vmatmul.mubr.bf16.gmra.mxu0 %v1195
    %v1267 = vpop.f32.mrf.mxu0
    %v1268 = vadd.f32 0.0, %v1267
    %v1269 = vpop.f32.mrf.mxu0
    %v1270 = vpop.f32.mrf.mxu0
    %v1271 = vadd.f32 0.0, %v1270
    %v1272 = vpop.f32.mrf.mxu0
    %1273 = vdwg.mxu0
    %v1275 = vsel %vm1095, %v687, 0
    %v1278 = vsel %vm1095, %v688, 0
    %v1281 = vsel %vm1095, %v689, 0
    %v1284 = vsel %vm1095, %v690, 0
    %v1287 = vsel %vm1095, %v879, 0
    %v1290 = vsel %vm1095, %v880, 0
    %v1293 = vsel %vm1095, %v881, 0
    %v1296 = vsel %vm1095, %v882, 0
    %1298 = vmatprep.subr.bf16.mxu0 0
    %1299 = vmatpush1.bf16.xpose.msra.mxu0 0
    %1300 = vmatprep.subr.bf16.mxu0 0
    %1301 = vmatpush1.bf16.xpose.msra.mxu0 0
    %1302 = vmatprep.subr.bf16.mxu0 0
    %1303 = vmatpush1.bf16.xpose.msra.mxu0 0
    %1304 = vmatprep.subr.bf16.mxu0 0
    %1305 = vmatpush1.bf16.xpose.msra.mxu0 0
    %1306 = vmatprep.subr.bf16.mxu0 0
    %1307 = vmatpush1.bf16.xpose.msra.mxu0 %v1296
    %1308 = vmatprep.subr.bf16.mxu0 0
    %1309 = vmatpush1.bf16.xpose.msra.mxu0 %v1293
    %1310 = vmatprep.subr.bf16.mxu0 0
    %1311 = vmatpush1.bf16.xpose.msra.mxu0 %v1290
    %1312 = vmatprep.subr.bf16.mxu0 0
    %1313 = vmatpush1.bf16.xpose.msra.mxu0 %v1287
    %1314 = vmatprep.subr.bf16.mxu0 0
    %1315 = vmatpush2.bf16.xpose.msra.mxu0 0
    %1316 = vmatprep.subr.bf16.mxu0 0
    %1317 = vmatpush2.bf16.xpose.msra.mxu0 0
    %1318 = vmatprep.subr.bf16.mxu0 0
    %1319 = vmatpush2.bf16.xpose.msra.mxu0 0
    %1320 = vmatprep.subr.bf16.mxu0 0
    %1321 = vmatpush2.bf16.xpose.msra.mxu0 0
    %1322 = vmatprep.subr.bf16.mxu0 0
    %1323 = vmatpush2.bf16.xpose.msra.mxu0 0
    %1324 = vmatprep.subr.bf16.mxu0 0
    %1325 = vmatpush2.bf16.xpose.msra.mxu0 0
    %1326 = vmatprep.subr.bf16.mxu0 0
    %1327 = vmatpush2.bf16.xpose.msra.mxu0 0
    %1328 = vmatprep.subr.bf16.mxu0 0
    %1329 = vmatpush2.bf16.xpose.msra.mxu0 0
    %1330 = vmatprep.mubr.bf16.mxu0 0
    %1331 = vmatmul.mubr.bf16.gmra.mxu0 %v1275
    %v1332 = vpop.f32.mrf.mxu0
    %v1333 = vadd.f32 0.0, %v1332
    %v1334 = vpop.f32.mrf.mxu0
    %v1335 = vpop.f32.mrf.mxu0
    %v1336 = vadd.f32 0.0, %v1335
    %v1337 = vpop.f32.mrf.mxu0
    %1338 = vmatprep.mubr.bf16.mxu0 0
    %1339 = vmatmul.mubr.bf16.gmra.mxu0 %v1278
    %v1340 = vpop.f32.mrf.mxu0
    %v1341 = vadd.f32 0.0, %v1340
    %v1342 = vpop.f32.mrf.mxu0
    %v1343 = vpop.f32.mrf.mxu0
    %v1344 = vadd.f32 0.0, %v1343
    %v1345 = vpop.f32.mrf.mxu0
    %1346 = vmatprep.mubr.bf16.mxu0 0
    %1347 = vmatmul.mubr.bf16.gmra.mxu0 %v1281
    %v1348 = vpop.f32.mrf.mxu0
    %v1349 = vadd.f32 0.0, %v1348
    %v1350 = vpop.f32.mrf.mxu0
    %v1351 = vpop.f32.mrf.mxu0
    %v1352 = vadd.f32 0.0, %v1351
    %v1353 = vpop.f32.mrf.mxu0
    %1354 = vmatprep.mubr.bf16.mxu0 0
    %1355 = vmatmul.mubr.bf16.gmra.mxu0 %v1284
    %v1356 = vpop.f32.mrf.mxu0
    %v1357 = vadd.f32 0.0, %v1356
    %v1358 = vpop.f32.mrf.mxu0
    %v1359 = vpop.f32.mrf.mxu0
    %v1360 = vadd.f32 0.0, %v1359
    %v1361 = vpop.f32.mrf.mxu0
    %1362 = vdwg.mxu0
    %v1364 = vsel %vm1095, %v691, 0
    %v1367 = vsel %vm1095, %v692, 0
    %v1370 = vsel %vm1095, %v693, 0
    %v1373 = vsel %vm1095, %v694, 0
    %v1376 = vsel %vm1095, %v883, 0
    %v1379 = vsel %vm1095, %v884, 0
    %v1382 = vsel %vm1095, %v885, 0
    %v1385 = vsel %vm1095, %v886, 0
    %1387 = vmatprep.subr.bf16.mxu0 0
    %1388 = vmatpush1.bf16.xpose.msra.mxu0 0
    %1389 = vmatprep.subr.bf16.mxu0 0
    %1390 = vmatpush1.bf16.xpose.msra.mxu0 0
    %1391 = vmatprep.subr.bf16.mxu0 0
    %1392 = vmatpush1.bf16.xpose.msra.mxu0 0
    %1393 = vmatprep.subr.bf16.mxu0 0
    %1394 = vmatpush1.bf16.xpose.msra.mxu0 0
    %1395 = vmatprep.subr.bf16.mxu0 0
    %1396 = vmatpush1.bf16.xpose.msra.mxu0 %v1385
    %1397 = vmatprep.subr.bf16.mxu0 0
    %1398 = vmatpush1.bf16.xpose.msra.mxu0 %v1382
    %1399 = vmatprep.subr.bf16.mxu0 0
    %1400 = vmatpush1.bf16.xpose.msra.mxu0 %v1379
    %1401 = vmatprep.subr.bf16.mxu0 0
    %1402 = vmatpush1.bf16.xpose.msra.mxu0 %v1376
    %1403 = vmatprep.subr.bf16.mxu0 0
    %1404 = vmatpush2.bf16.xpose.msra.mxu0 0
    %1405 = vmatprep.subr.bf16.mxu0 0
    %1406 = vmatpush2.bf16.xpose.msra.mxu0 0
    %1407 = vmatprep.subr.bf16.mxu0 0
    %1408 = vmatpush2.bf16.xpose.msra.mxu0 0
    %1409 = vmatprep.subr.bf16.mxu0 0
    %1410 = vmatpush2.bf16.xpose.msra.mxu0 0
    %1411 = vmatprep.subr.bf16.mxu0 0
    %1412 = vmatpush2.bf16.xpose.msra.mxu0 0
    %1413 = vmatprep.subr.bf16.mxu0 0
    %1414 = vmatpush2.bf16.xpose.msra.mxu0 0
    %1415 = vmatprep.subr.bf16.mxu0 0
    %1416 = vmatpush2.bf16.xpose.msra.mxu0 0
    %1417 = vmatprep.subr.bf16.mxu0 0
    %1418 = vmatpush2.bf16.xpose.msra.mxu0 0
    %1419 = vmatprep.mubr.bf16.mxu0 0
    %1420 = vmatmul.mubr.bf16.gmra.mxu0 %v1364
    %v1421 = vpop.f32.mrf.mxu0
    %v1422 = vadd.f32 0.0, %v1421
    %v1423 = vpop.f32.mrf.mxu0
    %v1424 = vpop.f32.mrf.mxu0
    %v1425 = vadd.f32 0.0, %v1424
    %v1426 = vpop.f32.mrf.mxu0
    %1427 = vmatprep.mubr.bf16.mxu0 0
    %1428 = vmatmul.mubr.bf16.gmra.mxu0 %v1367
    %v1429 = vpop.f32.mrf.mxu0
    %v1430 = vadd.f32 0.0, %v1429
    %v1431 = vpop.f32.mrf.mxu0
    %v1432 = vpop.f32.mrf.mxu0
    %v1433 = vadd.f32 0.0, %v1432
    %v1434 = vpop.f32.mrf.mxu0
    %1435 = vmatprep.mubr.bf16.mxu0 0
    %1436 = vmatmul.mubr.bf16.gmra.mxu0 %v1370
    %v1437 = vpop.f32.mrf.mxu0
    %v1438 = vadd.f32 0.0, %v1437
    %v1439 = vpop.f32.mrf.mxu0
    %v1440 = vpop.f32.mrf.mxu0
    %v1441 = vadd.f32 0.0, %v1440
    %v1442 = vpop.f32.mrf.mxu0
    %1443 = vmatprep.mubr.bf16.mxu0 0
    %1444 = vmatmul.mubr.bf16.gmra.mxu0 %v1373
    %v1445 = vpop.f32.mrf.mxu0
    %v1446 = vadd.f32 0.0, %v1445
    %v1447 = vpop.f32.mrf.mxu0
    %v1448 = vpop.f32.mrf.mxu0
    %v1449 = vadd.f32 0.0, %v1448
    %v1450 = vpop.f32.mrf.mxu0
    %1451 = vdwg.mxu0
    %v1453 = vsel %vm1095, %v695, 0
    %v1456 = vsel %vm1095, %v696, 0
    %v1459 = vsel %vm1095, %v697, 0
    %v1462 = vsel %vm1095, %v698, 0
    %v1465 = vsel %vm1095, %v887, 0
    %v1468 = vsel %vm1095, %v888, 0
    %v1471 = vsel %vm1095, %v889, 0
    %v1474 = vsel %vm1095, %v890, 0
    %1476 = vmatprep.subr.bf16.mxu0 0
    %1477 = vmatpush1.bf16.xpose.msra.mxu0 0
    %1478 = vmatprep.subr.bf16.mxu0 0
    %1479 = vmatpush1.bf16.xpose.msra.mxu0 0
    %1480 = vmatprep.subr.bf16.mxu0 0
    %1481 = vmatpush1.bf16.xpose.msra.mxu0 0
    %1482 = vmatprep.subr.bf16.mxu0 0
    %1483 = vmatpush1.bf16.xpose.msra.mxu0 0
    %1484 = vmatprep.subr.bf16.mxu0 0
    %1485 = vmatpush1.bf16.xpose.msra.mxu0 %v1474
    %1486 = vmatprep.subr.bf16.mxu0 0
    %1487 = vmatpush1.bf16.xpose.msra.mxu0 %v1471
    %1488 = vmatprep.subr.bf16.mxu0 0
    %1489 = vmatpush1.bf16.xpose.msra.mxu0 %v1468
    %1490 = vmatprep.subr.bf16.mxu0 0
    %1491 = vmatpush1.bf16.xpose.msra.mxu0 %v1465
    %1492 = vmatprep.subr.bf16.mxu0 0
    %1493 = vmatpush2.bf16.xpose.msra.mxu0 0
    %1494 = vmatprep.subr.bf16.mxu0 0
    %1495 = vmatpush2.bf16.xpose.msra.mxu0 0
    %1496 = vmatprep.subr.bf16.mxu0 0
    %1497 = vmatpush2.bf16.xpose.msra.mxu0 0
    %1498 = vmatprep.subr.bf16.mxu0 0
    %1499 = vmatpush2.bf16.xpose.msra.mxu0 0
    %1500 = vmatprep.subr.bf16.mxu0 0
    %1501 = vmatpush2.bf16.xpose.msra.mxu0 0
    %1502 = vmatprep.subr.bf16.mxu0 0
    %1503 = vmatpush2.bf16.xpose.msra.mxu0 0
    %1504 = vmatprep.subr.bf16.mxu0 0
    %1505 = vmatpush2.bf16.xpose.msra.mxu0 0
    %1506 = vmatprep.subr.bf16.mxu0 0
    %1507 = vmatpush2.bf16.xpose.msra.mxu0 0
    %1508 = vmatprep.mubr.bf16.mxu0 0
    %1509 = vmatmul.mubr.bf16.gmra.mxu0 %v1453
    %v1510 = vpop.f32.mrf.mxu0
    %v1511 = vadd.f32 0.0, %v1510
    %v1512 = vpop.f32.mrf.mxu0
    %v1513 = vpop.f32.mrf.mxu0
    %v1514 = vadd.f32 0.0, %v1513
    %v1515 = vpop.f32.mrf.mxu0
    %1516 = vmatprep.mubr.bf16.mxu0 0
    %1517 = vmatmul.mubr.bf16.gmra.mxu0 %v1456
    %v1518 = vpop.f32.mrf.mxu0
    %v1519 = vadd.f32 0.0, %v1518
    %v1520 = vpop.f32.mrf.mxu0
    %v1521 = vpop.f32.mrf.mxu0
    %v1522 = vadd.f32 0.0, %v1521
    %v1523 = vpop.f32.mrf.mxu0
    %1524 = vmatprep.mubr.bf16.mxu0 0
    %1525 = vmatmul.mubr.bf16.gmra.mxu0 %v1459
    %v1526 = vpop.f32.mrf.mxu0
    %v1527 = vadd.f32 0.0, %v1526
    %v1528 = vpop.f32.mrf.mxu0
    %v1529 = vpop.f32.mrf.mxu0
    %v1530 = vadd.f32 0.0, %v1529
    %v1531 = vpop.f32.mrf.mxu0
    %1532 = vmatprep.mubr.bf16.mxu0 0
    %1533 = vmatmul.mubr.bf16.gmra.mxu0 %v1462
    %v1534 = vpop.f32.mrf.mxu0
    %v1535 = vadd.f32 0.0, %v1534
    %v1536 = vpop.f32.mrf.mxu0
    %v1537 = vpop.f32.mrf.mxu0
    %v1538 = vadd.f32 0.0, %v1537
    %v1539 = vpop.f32.mrf.mxu0
    %1540 = vdwg.mxu0
    %v1542 = vsel %vm1095, %v699, 0
    %v1545 = vsel %vm1095, %v700, 0
    %v1548 = vsel %vm1095, %v701, 0
    %v1551 = vsel %vm1095, %v702, 0
    %v1554 = vsel %vm1095, %v891, 0
    %v1557 = vsel %vm1095, %v892, 0
    %v1560 = vsel %vm1095, %v893, 0
    %v1563 = vsel %vm1095, %v894, 0
    %1565 = vmatprep.subr.bf16.mxu0 0
    %1566 = vmatpush1.bf16.xpose.msra.mxu0 0
    %1567 = vmatprep.subr.bf16.mxu0 0
    %1568 = vmatpush1.bf16.xpose.msra.mxu0 0
    %1569 = vmatprep.subr.bf16.mxu0 0
    %1570 = vmatpush1.bf16.xpose.msra.mxu0 0
    %1571 = vmatprep.subr.bf16.mxu0 0
    %1572 = vmatpush1.bf16.xpose.msra.mxu0 0
    %1573 = vmatprep.subr.bf16.mxu0 0
    %1574 = vmatpush1.bf16.xpose.msra.mxu0 %v1563
    %1575 = vmatprep.subr.bf16.mxu0 0
    %1576 = vmatpush1.bf16.xpose.msra.mxu0 %v1560
    %1577 = vmatprep.subr.bf16.mxu0 0
    %1578 = vmatpush1.bf16.xpose.msra.mxu0 %v1557
    %1579 = vmatprep.subr.bf16.mxu0 0
    %1580 = vmatpush1.bf16.xpose.msra.mxu0 %v1554
    %1581 = vmatprep.subr.bf16.mxu0 0
    %1582 = vmatpush2.bf16.xpose.msra.mxu0 0
    %1583 = vmatprep.subr.bf16.mxu0 0
    %1584 = vmatpush2.bf16.xpose.msra.mxu0 0
    %1585 = vmatprep.subr.bf16.mxu0 0
    %1586 = vmatpush2.bf16.xpose.msra.mxu0 0
    %1587 = vmatprep.subr.bf16.mxu0 0
    %1588 = vmatpush2.bf16.xpose.msra.mxu0 0
    %1589 = vmatprep.subr.bf16.mxu0 0
    %1590 = vmatpush2.bf16.xpose.msra.mxu0 0
    %1591 = vmatprep.subr.bf16.mxu0 0
    %1592 = vmatpush2.bf16.xpose.msra.mxu0 0
    %1593 = vmatprep.subr.bf16.mxu0 0
    %1594 = vmatpush2.bf16.xpose.msra.mxu0 0
    %1595 = vmatprep.subr.bf16.mxu0 0
    %1596 = vmatpush2.bf16.xpose.msra.mxu0 0
    %1597 = vmatprep.mubr.bf16.mxu0 0
    %1598 = vmatmul.mubr.bf16.gmra.mxu0 %v1542
    %v1599 = vpop.f32.mrf.mxu0
    %v1600 = vadd.f32 0.0, %v1599
    %v1601 = vpop.f32.mrf.mxu0
    %v1602 = vpop.f32.mrf.mxu0
    %v1603 = vadd.f32 0.0, %v1602
    %v1604 = vpop.f32.mrf.mxu0
    %1605 = vmatprep.mubr.bf16.mxu0 0
    %1606 = vmatmul.mubr.bf16.gmra.mxu0 %v1545
    %v1607 = vpop.f32.mrf.mxu0
    %v1608 = vadd.f32 0.0, %v1607
    %v1609 = vpop.f32.mrf.mxu0
    %v1610 = vpop.f32.mrf.mxu0
    %v1611 = vadd.f32 0.0, %v1610
    %v1612 = vpop.f32.mrf.mxu0
    %1613 = vmatprep.mubr.bf16.mxu0 0
    %1614 = vmatmul.mubr.bf16.gmra.mxu0 %v1548
    %v1615 = vpop.f32.mrf.mxu0
    %v1616 = vadd.f32 0.0, %v1615
    %v1617 = vpop.f32.mrf.mxu0
    %v1618 = vpop.f32.mrf.mxu0
    %v1619 = vadd.f32 0.0, %v1618
    %v1620 = vpop.f32.mrf.mxu0
    %1621 = vmatprep.mubr.bf16.mxu0 0
    %1622 = vmatmul.mubr.bf16.gmra.mxu0 %v1551
    %v1623 = vpop.f32.mrf.mxu0
    %v1624 = vadd.f32 0.0, %v1623
    %v1625 = vpop.f32.mrf.mxu0
    %v1626 = vpop.f32.mrf.mxu0
    %v1627 = vadd.f32 0.0, %v1626
    %v1628 = vpop.f32.mrf.mxu0
    %1629 = vdwg.mxu0
    %v1631 = vsel %vm1095, %v703, 0
    %v1634 = vsel %vm1095, %v704, 0
    %v1637 = vsel %vm1095, %v705, 0
    %v1640 = vsel %vm1095, %v706, 0
    %v1643 = vsel %vm1095, %v895, 0
    %v1646 = vsel %vm1095, %v896, 0
    %v1649 = vsel %vm1095, %v897, 0
    %v1652 = vsel %vm1095, %v898, 0
    %1654 = vmatprep.subr.bf16.mxu0 0
    %1655 = vmatpush1.bf16.xpose.msra.mxu0 0
    %1656 = vmatprep.subr.bf16.mxu0 0
    %1657 = vmatpush1.bf16.xpose.msra.mxu0 0
    %1658 = vmatprep.subr.bf16.mxu0 0
    %1659 = vmatpush1.bf16.xpose.msra.mxu0 0
    %1660 = vmatprep.subr.bf16.mxu0 0
    %1661 = vmatpush1.bf16.xpose.msra.mxu0 0
    %1662 = vmatprep.subr.bf16.mxu0 0
    %1663 = vmatpush1.bf16.xpose.msra.mxu0 %v1652
    %1664 = vmatprep.subr.bf16.mxu0 0
    %1665 = vmatpush1.bf16.xpose.msra.mxu0 %v1649
    %1666 = vmatprep.subr.bf16.mxu0 0
    %1667 = vmatpush1.bf16.xpose.msra.mxu0 %v1646
    %1668 = vmatprep.subr.bf16.mxu0 0
    %1669 = vmatpush1.bf16.xpose.msra.mxu0 %v1643
    %1670 = vmatprep.subr.bf16.mxu0 0
    %1671 = vmatpush2.bf16.xpose.msra.mxu0 0
    %1672 = vmatprep.subr.bf16.mxu0 0
    %1673 = vmatpush2.bf16.xpose.msra.mxu0 0
    %1674 = vmatprep.subr.bf16.mxu0 0
    %1675 = vmatpush2.bf16.xpose.msra.mxu0 0
    %1676 = vmatprep.subr.bf16.mxu0 0
    %1677 = vmatpush2.bf16.xpose.msra.mxu0 0
    %1678 = vmatprep.subr.bf16.mxu0 0
    %1679 = vmatpush2.bf16.xpose.msra.mxu0 0
    %1680 = vmatprep.subr.bf16.mxu0 0
    %1681 = vmatpush2.bf16.xpose.msra.mxu0 0
    %1682 = vmatprep.subr.bf16.mxu0 0
    %1683 = vmatpush2.bf16.xpose.msra.mxu0 0
    %1684 = vmatprep.subr.bf16.mxu0 0
    %1685 = vmatpush2.bf16.xpose.msra.mxu0 0
    %1686 = vmatprep.mubr.bf16.mxu0 0
    %1687 = vmatmul.mubr.bf16.gmra.mxu0 %v1631
    %v1688 = vpop.f32.mrf.mxu0
    %v1689 = vadd.f32 0.0, %v1688
    %v1690 = vpop.f32.mrf.mxu0
    %v1691 = vpop.f32.mrf.mxu0
    %v1692 = vadd.f32 0.0, %v1691
    %v1693 = vpop.f32.mrf.mxu0
    %1694 = vmatprep.mubr.bf16.mxu0 0
    %1695 = vmatmul.mubr.bf16.gmra.mxu0 %v1634
    %v1696 = vpop.f32.mrf.mxu0
    %v1697 = vadd.f32 0.0, %v1696
    %v1698 = vpop.f32.mrf.mxu0
    %v1699 = vpop.f32.mrf.mxu0
    %v1700 = vadd.f32 0.0, %v1699
    %v1701 = vpop.f32.mrf.mxu0
    %1702 = vmatprep.mubr.bf16.mxu0 0
    %1703 = vmatmul.mubr.bf16.gmra.mxu0 %v1637
    %v1704 = vpop.f32.mrf.mxu0
    %v1705 = vadd.f32 0.0, %v1704
    %v1706 = vpop.f32.mrf.mxu0
    %v1707 = vpop.f32.mrf.mxu0
    %v1708 = vadd.f32 0.0, %v1707
    %v1709 = vpop.f32.mrf.mxu0
    %1710 = vmatprep.mubr.bf16.mxu0 0
    %1711 = vmatmul.mubr.bf16.gmra.mxu0 %v1640
    %v1712 = vpop.f32.mrf.mxu0
    %v1713 = vadd.f32 0.0, %v1712
    %v1714 = vpop.f32.mrf.mxu0
    %v1715 = vpop.f32.mrf.mxu0
    %v1716 = vadd.f32 0.0, %v1715
    %v1717 = vpop.f32.mrf.mxu0
    %1718 = vdwg.mxu0
    %v1720 = vsel %vm1095, %v707, 0
    %v1723 = vsel %vm1095, %v708, 0
    %v1726 = vsel %vm1095, %v709, 0
    %v1729 = vsel %vm1095, %v710, 0
    %v1732 = vsel %vm1095, %v899, 0
    %v1735 = vsel %vm1095, %v900, 0
    %v1738 = vsel %vm1095, %v901, 0
    %v1741 = vsel %vm1095, %v902, 0
    %1743 = vmatprep.subr.bf16.mxu0 0
    %1744 = vmatpush1.bf16.xpose.msra.mxu0 0
    %1745 = vmatprep.subr.bf16.mxu0 0
    %1746 = vmatpush1.bf16.xpose.msra.mxu0 0
    %1747 = vmatprep.subr.bf16.mxu0 0
    %1748 = vmatpush1.bf16.xpose.msra.mxu0 0
    %1749 = vmatprep.subr.bf16.mxu0 0
    %1750 = vmatpush1.bf16.xpose.msra.mxu0 0
    %1751 = vmatprep.subr.bf16.mxu0 0
    %1752 = vmatpush1.bf16.xpose.msra.mxu0 %v1741
    %1753 = vmatprep.subr.bf16.mxu0 0
    %1754 = vmatpush1.bf16.xpose.msra.mxu0 %v1738
    %1755 = vmatprep.subr.bf16.mxu0 0
    %1756 = vmatpush1.bf16.xpose.msra.mxu0 %v1735
    %1757 = vmatprep.subr.bf16.mxu0 0
    %1758 = vmatpush1.bf16.xpose.msra.mxu0 %v1732
    %1759 = vmatprep.subr.bf16.mxu0 0
    %1760 = vmatpush2.bf16.xpose.msra.mxu0 0
    %1761 = vmatprep.subr.bf16.mxu0 0
    %1762 = vmatpush2.bf16.xpose.msra.mxu0 0
    %1763 = vmatprep.subr.bf16.mxu0 0
    %1764 = vmatpush2.bf16.xpose.msra.mxu0 0
    %1765 = vmatprep.subr.bf16.mxu0 0
    %1766 = vmatpush2.bf16.xpose.msra.mxu0 0
    %1767 = vmatprep.subr.bf16.mxu0 0
    %1768 = vmatpush2.bf16.xpose.msra.mxu0 0
    %1769 = vmatprep.subr.bf16.mxu0 0
    %1770 = vmatpush2.bf16.xpose.msra.mxu0 0
    %1771 = vmatprep.subr.bf16.mxu0 0
    %1772 = vmatpush2.bf16.xpose.msra.mxu0 0
    %1773 = vmatprep.subr.bf16.mxu0 0
    %1774 = vmatpush2.bf16.xpose.msra.mxu0 0
    %1775 = vmatprep.mubr.bf16.mxu0 0
    %1776 = vmatmul.mubr.bf16.gmra.mxu0 %v1720
    %v1777 = vpop.f32.mrf.mxu0
    %v1778 = vadd.f32 0.0, %v1777
    %v1779 = vpop.f32.mrf.mxu0
    %v1780 = vpop.f32.mrf.mxu0
    %v1781 = vadd.f32 0.0, %v1780
    %v1782 = vpop.f32.mrf.mxu0
    %1783 = vmatprep.mubr.bf16.mxu0 0
    %1784 = vmatmul.mubr.bf16.gmra.mxu0 %v1723
    %v1785 = vpop.f32.mrf.mxu0
    %v1786 = vadd.f32 0.0, %v1785
    %v1787 = vpop.f32.mrf.mxu0
    %v1788 = vpop.f32.mrf.mxu0
    %v1789 = vadd.f32 0.0, %v1788
    %v1790 = vpop.f32.mrf.mxu0
    %1791 = vmatprep.mubr.bf16.mxu0 0
    %1792 = vmatmul.mubr.bf16.gmra.mxu0 %v1726
    %v1793 = vpop.f32.mrf.mxu0
    %v1794 = vadd.f32 0.0, %v1793
    %v1795 = vpop.f32.mrf.mxu0
    %v1796 = vpop.f32.mrf.mxu0
    %v1797 = vadd.f32 0.0, %v1796
    %v1798 = vpop.f32.mrf.mxu0
    %1799 = vmatprep.mubr.bf16.mxu0 0
    %1800 = vmatmul.mubr.bf16.gmra.mxu0 %v1729
    %v1801 = vpop.f32.mrf.mxu0
    %v1802 = vadd.f32 0.0, %v1801
    %v1803 = vpop.f32.mrf.mxu0
    %v1804 = vpop.f32.mrf.mxu0
    %v1805 = vadd.f32 0.0, %v1804
    %v1806 = vpop.f32.mrf.mxu0
    %1807 = vdwg.mxu0
    %vm1808 = vcmask 523264
    %v1809 = vsel %vm1808, %v1155, -inf
    %1810 = vmax.xlane.f32.xlu0 %v1809
    %v1811 = vpop.xlane.xlu0 %1810
    %v1812 = vsel %vm1808, %v1158, -inf
    %1813 = vmax.xlane.f32.xlu0 %v1812
    %v1814 = vpop.xlane.xlu0 %1813
    %v1815 = vsel %vm1808, %v1163, -inf
    %1816 = vmax.xlane.f32.xlu0 %v1815
    %v1817 = vpop.xlane.xlu0 %1816
    %v1818 = vsel %vm1808, %v1166, -inf
    %1819 = vmax.xlane.f32.xlu0 %v1818
    %v1820 = vpop.xlane.xlu0 %1819
    %v1821 = vsel %vm1808, %v1171, -inf
    %1822 = vmax.xlane.f32.xlu0 %v1821
    %v1823 = vpop.xlane.xlu0 %1822
    %v1824 = vsel %vm1808, %v1174, -inf
    %1825 = vmax.xlane.f32.xlu0 %v1824
    %v1826 = vpop.xlane.xlu0 %1825
    %v1827 = vsel %vm1808, %v1179, -inf
    %1828 = vmax.xlane.f32.xlu0 %v1827
    %v1829 = vpop.xlane.xlu0 %1828
    %v1830 = vsel %vm1808, %v1182, -inf
    %1831 = vmax.xlane.f32.xlu0 %v1830
    %v1832 = vpop.xlane.xlu0 %1831
    %v1833 = vsel %vm1808, %v1244, -inf
    %1834 = vmax.xlane.f32.xlu0 %v1833
    %v1835 = vpop.xlane.xlu0 %1834
    %v1836 = vsel %vm1808, %v1247, -inf
    %1837 = vmax.xlane.f32.xlu0 %v1836
    %v1838 = vpop.xlane.xlu0 %1837
    %v1839 = vsel %vm1808, %v1252, -inf
    %1840 = vmax.xlane.f32.xlu0 %v1839
    %v1841 = vpop.xlane.xlu0 %1840
    %v1842 = vsel %vm1808, %v1255, -inf
    %1843 = vmax.xlane.f32.xlu0 %v1842
    %v1844 = vpop.xlane.xlu0 %1843
    %v1845 = vsel %vm1808, %v1260, -inf
    %1846 = vmax.xlane.f32.xlu0 %v1845
    %v1847 = vpop.xlane.xlu0 %1846
    %v1848 = vsel %vm1808, %v1263, -inf
    %1849 = vmax.xlane.f32.xlu0 %v1848
    %v1850 = vpop.xlane.xlu0 %1849
    %v1851 = vsel %vm1808, %v1268, -inf
    %1852 = vmax.xlane.f32.xlu0 %v1851
    %v1853 = vpop.xlane.xlu0 %1852
    %v1854 = vsel %vm1808, %v1271, -inf
    %1855 = vmax.xlane.f32.xlu0 %v1854
    %v1856 = vpop.xlane.xlu0 %1855
    %v1857 = vsel %vm1808, %v1333, -inf
    %1858 = vmax.xlane.f32.xlu0 %v1857
    %v1859 = vpop.xlane.xlu0 %1858
    %v1860 = vsel %vm1808, %v1336, -inf
    %1861 = vmax.xlane.f32.xlu0 %v1860
    %v1862 = vpop.xlane.xlu0 %1861
    %v1863 = vsel %vm1808, %v1341, -inf
    %1864 = vmax.xlane.f32.xlu0 %v1863
    %v1865 = vpop.xlane.xlu0 %1864
    %v1866 = vsel %vm1808, %v1344, -inf
    %1867 = vmax.xlane.f32.xlu0 %v1866
    %v1868 = vpop.xlane.xlu0 %1867
    %v1869 = vsel %vm1808, %v1349, -inf
    %1870 = vmax.xlane.f32.xlu0 %v1869
    %v1871 = vpop.xlane.xlu0 %1870
    %v1872 = vsel %vm1808, %v1352, -inf
    %1873 = vmax.xlane.f32.xlu0 %v1872
    %v1874 = vpop.xlane.xlu0 %1873
    %v1875 = vsel %vm1808, %v1357, -inf
    %1876 = vmax.xlane.f32.xlu0 %v1875
    %v1877 = vpop.xlane.xlu0 %1876
    %v1878 = vsel %vm1808, %v1360, -inf
    %1879 = vmax.xlane.f32.xlu0 %v1878
    %v1880 = vpop.xlane.xlu0 %1879
    %v1881 = vsel %vm1808, %v1422, -inf
    %1882 = vmax.xlane.f32.xlu0 %v1881
    %v1883 = vpop.xlane.xlu0 %1882
    %v1884 = vsel %vm1808, %v1425, -inf
    %1885 = vmax.xlane.f32.xlu0 %v1884
    %v1886 = vpop.xlane.xlu0 %1885
    %v1887 = vsel %vm1808, %v1430, -inf
    %1888 = vmax.xlane.f32.xlu0 %v1887
    %v1889 = vpop.xlane.xlu0 %1888
    %v1890 = vsel %vm1808, %v1433, -inf
    %1891 = vmax.xlane.f32.xlu0 %v1890
    %v1892 = vpop.xlane.xlu0 %1891
    %v1893 = vsel %vm1808, %v1438, -inf
    %1894 = vmax.xlane.f32.xlu0 %v1893
    %v1895 = vpop.xlane.xlu0 %1894
    %v1896 = vsel %vm1808, %v1441, -inf
    %1897 = vmax.xlane.f32.xlu0 %v1896
    %v1898 = vpop.xlane.xlu0 %1897
    %v1899 = vsel %vm1808, %v1446, -inf
    %1900 = vmax.xlane.f32.xlu0 %v1899
    %v1901 = vpop.xlane.xlu0 %1900
    %v1902 = vsel %vm1808, %v1449, -inf
    %1903 = vmax.xlane.f32.xlu0 %v1902
    %v1904 = vpop.xlane.xlu0 %1903
    %v1905 = vsel %vm1808, %v1511, -inf
    %1906 = vmax.xlane.f32.xlu0 %v1905
    %v1907 = vpop.xlane.xlu0 %1906
    %v1908 = vsel %vm1808, %v1514, -inf
    %1909 = vmax.xlane.f32.xlu0 %v1908
    %v1910 = vpop.xlane.xlu0 %1909
    %v1911 = vsel %vm1808, %v1519, -inf
    %1912 = vmax.xlane.f32.xlu0 %v1911
    %v1913 = vpop.xlane.xlu0 %1912
    %v1914 = vsel %vm1808, %v1522, -inf
    %1915 = vmax.xlane.f32.xlu0 %v1914
    %v1916 = vpop.xlane.xlu0 %1915
    %v1917 = vsel %vm1808, %v1527, -inf
    %1918 = vmax.xlane.f32.xlu0 %v1917
    %v1919 = vpop.xlane.xlu0 %1918
    %v1920 = vsel %vm1808, %v1530, -inf
    %1921 = vmax.xlane.f32.xlu0 %v1920
    %v1922 = vpop.xlane.xlu0 %1921
    %v1923 = vsel %vm1808, %v1535, -inf
    %1924 = vmax.xlane.f32.xlu0 %v1923
    %v1925 = vpop.xlane.xlu0 %1924
    %v1926 = vsel %vm1808, %v1538, -inf
    %1927 = vmax.xlane.f32.xlu0 %v1926
    %v1928 = vpop.xlane.xlu0 %1927
    %v1929 = vsel %vm1808, %v1600, -inf
    %1930 = vmax.xlane.f32.xlu0 %v1929
    %v1931 = vpop.xlane.xlu0 %1930
    %v1932 = vsel %vm1808, %v1603, -inf
    %1933 = vmax.xlane.f32.xlu0 %v1932
    %v1934 = vpop.xlane.xlu0 %1933
    %v1935 = vsel %vm1808, %v1608, -inf
    %1936 = vmax.xlane.f32.xlu0 %v1935
    %v1937 = vpop.xlane.xlu0 %1936
    %v1938 = vsel %vm1808, %v1611, -inf
    %1939 = vmax.xlane.f32.xlu0 %v1938
    %v1940 = vpop.xlane.xlu0 %1939
    %v1941 = vsel %vm1808, %v1616, -inf
    %1942 = vmax.xlane.f32.xlu0 %v1941
    %v1943 = vpop.xlane.xlu0 %1942
    %v1944 = vsel %vm1808, %v1619, -inf
    %1945 = vmax.xlane.f32.xlu0 %v1944
    %v1946 = vpop.xlane.xlu0 %1945
    %v1947 = vsel %vm1808, %v1624, -inf
    %1948 = vmax.xlane.f32.xlu0 %v1947
    %v1949 = vpop.xlane.xlu0 %1948
    %v1950 = vsel %vm1808, %v1627, -inf
    %1951 = vmax.xlane.f32.xlu0 %v1950
    %v1952 = vpop.xlane.xlu0 %1951
    %v1953 = vsel %vm1808, %v1689, -inf
    %1954 = vmax.xlane.f32.xlu0 %v1953
    %v1955 = vpop.xlane.xlu0 %1954
    %v1956 = vsel %vm1808, %v1692, -inf
    %1957 = vmax.xlane.f32.xlu0 %v1956
    %v1958 = vpop.xlane.xlu0 %1957
    %v1959 = vsel %vm1808, %v1697, -inf
    %1960 = vmax.xlane.f32.xlu0 %v1959
    %v1961 = vpop.xlane.xlu0 %1960
    %v1962 = vsel %vm1808, %v1700, -inf
    %1963 = vmax.xlane.f32.xlu0 %v1962
    %v1964 = vpop.xlane.xlu0 %1963
    %v1965 = vsel %vm1808, %v1705, -inf
    %1966 = vmax.xlane.f32.xlu0 %v1965
    %v1967 = vpop.xlane.xlu0 %1966
    %v1968 = vsel %vm1808, %v1708, -inf
    %1969 = vmax.xlane.f32.xlu0 %v1968
    %v1970 = vpop.xlane.xlu0 %1969
    %v1971 = vsel %vm1808, %v1713, -inf
    %1972 = vmax.xlane.f32.xlu0 %v1971
    %v1973 = vpop.xlane.xlu0 %1972
    %v1974 = vsel %vm1808, %v1716, -inf
    %1975 = vmax.xlane.f32.xlu0 %v1974
    %v1976 = vpop.xlane.xlu0 %1975
    %v1977 = vsel %vm1808, %v1778, -inf
    %1978 = vmax.xlane.f32.xlu0 %v1977
    %v1979 = vpop.xlane.xlu0 %1978
    %v1980 = vsel %vm1808, %v1781, -inf
    %1981 = vmax.xlane.f32.xlu0 %v1980
    %v1982 = vpop.xlane.xlu0 %1981
    %v1983 = vsel %vm1808, %v1786, -inf
    %1984 = vmax.xlane.f32.xlu0 %v1983
    %v1985 = vpop.xlane.xlu0 %1984
    %v1986 = vsel %vm1808, %v1789, -inf
    %1987 = vmax.xlane.f32.xlu0 %v1986
    %v1988 = vpop.xlane.xlu0 %1987
    %v1989 = vsel %vm1808, %v1794, -inf
    %1990 = vmax.xlane.f32.xlu0 %v1989
    %v1991 = vpop.xlane.xlu0 %1990
    %v1992 = vsel %vm1808, %v1797, -inf
    %1993 = vmax.xlane.f32.xlu0 %v1992
    %v1994 = vpop.xlane.xlu0 %1993
    %v1995 = vsel %vm1808, %v1802, -inf
    %1996 = vmax.xlane.f32.xlu0 %v1995
    %v1997 = vpop.xlane.xlu0 %1996
    %v1998 = vsel %vm1808, %v1805, -inf
    %1999 = vmax.xlane.f32.xlu0 %v1998
    %v2000 = vpop.xlane.xlu0 %1999
    %v2001 = vsub.f32 %v1155, %v1811
    %v2002 = vsub.f32 %v1158, %v1814
    %v2003 = vsub.f32 %v1163, %v1817
    %v2004 = vsub.f32 %v1166, %v1820
    %v2005 = vsub.f32 %v1171, %v1823
    %v2006 = vsub.f32 %v1174, %v1826
    %v2007 = vsub.f32 %v1179, %v1829
    %v2008 = vsub.f32 %v1182, %v1832
    %v2009 = vsub.f32 %v1244, %v1835
    %v2010 = vsub.f32 %v1247, %v1838
    %v2011 = vsub.f32 %v1252, %v1841
    %v2012 = vsub.f32 %v1255, %v1844
    %v2013 = vsub.f32 %v1260, %v1847
    %v2014 = vsub.f32 %v1263, %v1850
    %v2015 = vsub.f32 %v1268, %v1853
    %v2016 = vsub.f32 %v1271, %v1856
    %v2017 = vsub.f32 %v1333, %v1859
    %v2018 = vsub.f32 %v1336, %v1862
    %v2019 = vsub.f32 %v1341, %v1865
    %v2020 = vsub.f32 %v1344, %v1868
    %v2021 = vsub.f32 %v1349, %v1871
    %v2022 = vsub.f32 %v1352, %v1874
    %v2023 = vsub.f32 %v1357, %v1877
    %v2024 = vsub.f32 %v1360, %v1880
    %v2025 = vsub.f32 %v1422, %v1883
    %v2026 = vsub.f32 %v1425, %v1886
    %v2027 = vsub.f32 %v1430, %v1889
    %v2028 = vsub.f32 %v1433, %v1892
    %v2029 = vsub.f32 %v1438, %v1895
    %v2030 = vsub.f32 %v1441, %v1898
    %v2031 = vsub.f32 %v1446, %v1901
    %v2032 = vsub.f32 %v1449, %v1904
    %v2033 = vsub.f32 %v1511, %v1907
    %v2034 = vsub.f32 %v1514, %v1910
    %v2035 = vsub.f32 %v1519, %v1913
    %v2036 = vsub.f32 %v1522, %v1916
    %v2037 = vsub.f32 %v1527, %v1919
    %v2038 = vsub.f32 %v1530, %v1922
    %v2039 = vsub.f32 %v1535, %v1925
    %v2040 = vsub.f32 %v1538, %v1928
    %v2041 = vsub.f32 %v1600, %v1931
    %v2042 = vsub.f32 %v1603, %v1934
    %v2043 = vsub.f32 %v1608, %v1937
    %v2044 = vsub.f32 %v1611, %v1940
    %v2045 = vsub.f32 %v1616, %v1943
    %v2046 = vsub.f32 %v1619, %v1946
    %v2047 = vsub.f32 %v1624, %v1949
    %v2048 = vsub.f32 %v1627, %v1952
    %v2049 = vsub.f32 %v1689, %v1955
    %v2050 = vsub.f32 %v1692, %v1958
    %v2051 = vsub.f32 %v1697, %v1961
    %v2052 = vsub.f32 %v1700, %v1964
    %v2053 = vsub.f32 %v1705, %v1967
    %v2054 = vsub.f32 %v1708, %v1970
    %v2055 = vsub.f32 %v1713, %v1973
    %v2056 = vsub.f32 %v1716, %v1976
    %v2057 = vsub.f32 %v1778, %v1979
    %v2058 = vsub.f32 %v1781, %v1982
    %v2059 = vsub.f32 %v1786, %v1985
    %v2060 = vsub.f32 %v1789, %v1988
    %v2061 = vsub.f32 %v1794, %v1991
    %v2062 = vsub.f32 %v1797, %v1994
    %v2063 = vsub.f32 %v1802, %v1997
    %v2064 = vsub.f32 %v1805, %v2000
    %v2065 = vmul.f32 %v2001, 1.442695
    %v2066 = vpow.pop %v2065
    %v2067 = vmul.f32 %v2002, 1.442695
    %v2068 = vpow.pop %v2067
    %v2069 = vmul.f32 %v2003, 1.442695
    %v2070 = vpow.pop %v2069
    %v2071 = vmul.f32 %v2004, 1.442695
    %v2072 = vpow.pop %v2071
    %v2073 = vmul.f32 %v2005, 1.442695
    %v2074 = vpow.pop %v2073
    %v2075 = vmul.f32 %v2006, 1.442695
    %v2076 = vpow.pop %v2075
    %v2077 = vmul.f32 %v2007, 1.442695
    %v2078 = vpow.pop %v2077
    %v2079 = vmul.f32 %v2008, 1.442695
    %v2080 = vpow.pop %v2079
    %v2081 = vmul.f32 %v2009, 1.442695
    %v2082 = vpow.pop %v2081
    %v2083 = vmul.f32 %v2010, 1.442695
    %v2084 = vpow.pop %v2083
    %v2085 = vmul.f32 %v2011, 1.442695
    %v2086 = vpow.pop %v2085
    %v2087 = vmul.f32 %v2012, 1.442695
    %v2088 = vpow.pop %v2087
    %v2089 = vmul.f32 %v2013, 1.442695
    %v2090 = vpow.pop %v2089
    %v2091 = vmul.f32 %v2014, 1.442695
    %v2092 = vpow.pop %v2091
    %v2093 = vmul.f32 %v2015, 1.442695
    %v2094 = vpow.pop %v2093
    %v2095 = vmul.f32 %v2016, 1.442695
    %v2096 = vpow.pop %v2095
    %v2097 = vmul.f32 %v2017, 1.442695
    %v2098 = vpow.pop %v2097
    %v2099 = vmul.f32 %v2018, 1.442695
    %v2100 = vpow.pop %v2099
    %v2101 = vmul.f32 %v2019, 1.442695
    %v2102 = vpow.pop %v2101
    %v2103 = vmul.f32 %v2020, 1.442695
    %v2104 = vpow.pop %v2103
    %v2105 = vmul.f32 %v2021, 1.442695
    %v2106 = vpow.pop %v2105
    %v2107 = vmul.f32 %v2022, 1.442695
    %v2108 = vpow.pop %v2107
    %v2109 = vmul.f32 %v2023, 1.442695
    %v2110 = vpow.pop %v2109
    %v2111 = vmul.f32 %v2024, 1.442695
    %v2112 = vpow.pop %v2111
    %v2113 = vmul.f32 %v2025, 1.442695
    %v2114 = vpow.pop %v2113
    %v2115 = vmul.f32 %v2026, 1.442695
    %v2116 = vpow.pop %v2115
    %v2117 = vmul.f32 %v2027, 1.442695
    %v2118 = vpow.pop %v2117
    %v2119 = vmul.f32 %v2028, 1.442695
    %v2120 = vpow.pop %v2119
    %v2121 = vmul.f32 %v2029, 1.442695
    %v2122 = vpow.pop %v2121
    %v2123 = vmul.f32 %v2030, 1.442695
    %v2124 = vpow.pop %v2123
    %v2125 = vmul.f32 %v2031, 1.442695
    %v2126 = vpow.pop %v2125
    %v2127 = vmul.f32 %v2032, 1.442695
    %v2128 = vpow.pop %v2127
    %v2129 = vmul.f32 %v2033, 1.442695
    %v2130 = vpow.pop %v2129
    %v2131 = vmul.f32 %v2034, 1.442695
    %v2132 = vpow.pop %v2131
    %v2133 = vmul.f32 %v2035, 1.442695
    %v2134 = vpow.pop %v2133
    %v2135 = vmul.f32 %v2036, 1.442695
    %v2136 = vpow.pop %v2135
    %v2137 = vmul.f32 %v2037, 1.442695
    %v2138 = vpow.pop %v2137
    %v2139 = vmul.f32 %v2038, 1.442695
    %v2140 = vpow.pop %v2139
    %v2141 = vmul.f32 %v2039, 1.442695
    %v2142 = vpow.pop %v2141
    %v2143 = vmul.f32 %v2040, 1.442695
    %v2144 = vpow.pop %v2143
    %v2145 = vmul.f32 %v2041, 1.442695
    %v2146 = vpow.pop %v2145
    %v2147 = vmul.f32 %v2042, 1.442695
    %v2148 = vpow.pop %v2147
    %v2149 = vmul.f32 %v2043, 1.442695
    %v2150 = vpow.pop %v2149
    %v2151 = vmul.f32 %v2044, 1.442695
    %v2152 = vpow.pop %v2151
    %v2153 = vmul.f32 %v2045, 1.442695
    %v2154 = vpow.pop %v2153
    %v2155 = vmul.f32 %v2046, 1.442695
    %v2156 = vpow.pop %v2155
    %v2157 = vmul.f32 %v2047, 1.442695
    %v2158 = vpow.pop %v2157
    %v2159 = vmul.f32 %v2048, 1.442695
    %v2160 = vpow.pop %v2159
    %v2161 = vmul.f32 %v2049, 1.442695
    %v2162 = vpow.pop %v2161
    %v2163 = vmul.f32 %v2050, 1.442695
    %v2164 = vpow.pop %v2163
    %v2165 = vmul.f32 %v2051, 1.442695
    %v2166 = vpow.pop %v2165
    %v2167 = vmul.f32 %v2052, 1.442695
    %v2168 = vpow.pop %v2167
    %v2169 = vmul.f32 %v2053, 1.442695
    %v2170 = vpow.pop %v2169
    %v2171 = vmul.f32 %v2054, 1.442695
    %v2172 = vpow.pop %v2171
    %v2173 = vmul.f32 %v2055, 1.442695
    %v2174 = vpow.pop %v2173
    %v2175 = vmul.f32 %v2056, 1.442695
    %v2176 = vpow.pop %v2175
    %v2177 = vmul.f32 %v2057, 1.442695
    %v2178 = vpow.pop %v2177
    %v2179 = vmul.f32 %v2058, 1.442695
    %v2180 = vpow.pop %v2179
    %v2181 = vmul.f32 %v2059, 1.442695
    %v2182 = vpow.pop %v2181
    %v2183 = vmul.f32 %v2060, 1.442695
    %v2184 = vpow.pop %v2183
    %v2185 = vmul.f32 %v2061, 1.442695
    %v2186 = vpow.pop %v2185
    %v2187 = vmul.f32 %v2062, 1.442695
    %v2188 = vpow.pop %v2187
    %v2189 = vmul.f32 %v2063, 1.442695
    %v2190 = vpow.pop %v2189
    %v2191 = vmul.f32 %v2064, 1.442695
    %v2192 = vpow.pop %v2191
    %v2193 = vsel %vm1808, %v2066, 0.0
    %2194 = vadd.xlane.f32.xlu0 %v2193
    %v2195 = vpop.xlane.xlu0 %2194
    %v2196 = vsel %vm1808, %v2068, 0.0
    %2197 = vadd.xlane.f32.xlu0 %v2196
    %v2198 = vpop.xlane.xlu0 %2197
    %v2199 = vsel %vm1808, %v2070, 0.0
    %2200 = vadd.xlane.f32.xlu0 %v2199
    %v2201 = vpop.xlane.xlu0 %2200
    %v2202 = vsel %vm1808, %v2072, 0.0
    %2203 = vadd.xlane.f32.xlu0 %v2202
    %v2204 = vpop.xlane.xlu0 %2203
    %v2205 = vsel %vm1808, %v2074, 0.0
    %2206 = vadd.xlane.f32.xlu0 %v2205
    %v2207 = vpop.xlane.xlu0 %2206
    %v2208 = vsel %vm1808, %v2076, 0.0
    %2209 = vadd.xlane.f32.xlu0 %v2208
    %v2210 = vpop.xlane.xlu0 %2209
    %v2211 = vsel %vm1808, %v2078, 0.0
    %2212 = vadd.xlane.f32.xlu0 %v2211
    %v2213 = vpop.xlane.xlu0 %2212
    %v2214 = vsel %vm1808, %v2080, 0.0
    %2215 = vadd.xlane.f32.xlu0 %v2214
    %v2216 = vpop.xlane.xlu0 %2215
    %v2217 = vsel %vm1808, %v2082, 0.0
    %2218 = vadd.xlane.f32.xlu0 %v2217
    %v2219 = vpop.xlane.xlu0 %2218
    %v2220 = vsel %vm1808, %v2084, 0.0
    %2221 = vadd.xlane.f32.xlu0 %v2220
    %v2222 = vpop.xlane.xlu0 %2221
    %v2223 = vsel %vm1808, %v2086, 0.0
    %2224 = vadd.xlane.f32.xlu0 %v2223
    %v2225 = vpop.xlane.xlu0 %2224
    %v2226 = vsel %vm1808, %v2088, 0.0
    %2227 = vadd.xlane.f32.xlu0 %v2226
    %v2228 = vpop.xlane.xlu0 %2227
    %v2229 = vsel %vm1808, %v2090, 0.0
    %2230 = vadd.xlane.f32.xlu0 %v2229
    %v2231 = vpop.xlane.xlu0 %2230
    %v2232 = vsel %vm1808, %v2092, 0.0
    %2233 = vadd.xlane.f32.xlu0 %v2232
    %v2234 = vpop.xlane.xlu0 %2233
    %v2235 = vsel %vm1808, %v2094, 0.0
    %2236 = vadd.xlane.f32.xlu0 %v2235
    %v2237 = vpop.xlane.xlu0 %2236
    %v2238 = vsel %vm1808, %v2096, 0.0
    %2239 = vadd.xlane.f32.xlu0 %v2238
    %v2240 = vpop.xlane.xlu0 %2239
    %v2241 = vsel %vm1808, %v2098, 0.0
    %2242 = vadd.xlane.f32.xlu0 %v2241
    %v2243 = vpop.xlane.xlu0 %2242
    %v2244 = vsel %vm1808, %v2100, 0.0
    %2245 = vadd.xlane.f32.xlu0 %v2244
    %v2246 = vpop.xlane.xlu0 %2245
    %v2247 = vsel %vm1808, %v2102, 0.0
    %2248 = vadd.xlane.f32.xlu0 %v2247
    %v2249 = vpop.xlane.xlu0 %2248
    %v2250 = vsel %vm1808, %v2104, 0.0
    %2251 = vadd.xlane.f32.xlu0 %v2250
    %v2252 = vpop.xlane.xlu0 %2251
    %v2253 = vsel %vm1808, %v2106, 0.0
    %2254 = vadd.xlane.f32.xlu0 %v2253
    %v2255 = vpop.xlane.xlu0 %2254
    %v2256 = vsel %vm1808, %v2108, 0.0
    %2257 = vadd.xlane.f32.xlu0 %v2256
    %v2258 = vpop.xlane.xlu0 %2257
    %v2259 = vsel %vm1808, %v2110, 0.0
    %2260 = vadd.xlane.f32.xlu0 %v2259
    %v2261 = vpop.xlane.xlu0 %2260
    %v2262 = vsel %vm1808, %v2112, 0.0
    %2263 = vadd.xlane.f32.xlu0 %v2262
    %v2264 = vpop.xlane.xlu0 %2263
    %v2265 = vsel %vm1808, %v2114, 0.0
    %2266 = vadd.xlane.f32.xlu0 %v2265
    %v2267 = vpop.xlane.xlu0 %2266
    %v2268 = vsel %vm1808, %v2116, 0.0
    %2269 = vadd.xlane.f32.xlu0 %v2268
    %v2270 = vpop.xlane.xlu0 %2269
    %v2271 = vsel %vm1808, %v2118, 0.0
    %2272 = vadd.xlane.f32.xlu0 %v2271
    %v2273 = vpop.xlane.xlu0 %2272
    %v2274 = vsel %vm1808, %v2120, 0.0
    %2275 = vadd.xlane.f32.xlu0 %v2274
    %v2276 = vpop.xlane.xlu0 %2275
    %v2277 = vsel %vm1808, %v2122, 0.0
    %2278 = vadd.xlane.f32.xlu0 %v2277
    %v2279 = vpop.xlane.xlu0 %2278
    %v2280 = vsel %vm1808, %v2124, 0.0
    %2281 = vadd.xlane.f32.xlu0 %v2280
    %v2282 = vpop.xlane.xlu0 %2281
    %v2283 = vsel %vm1808, %v2126, 0.0
    %2284 = vadd.xlane.f32.xlu0 %v2283
    %v2285 = vpop.xlane.xlu0 %2284
    %v2286 = vsel %vm1808, %v2128, 0.0
    %2287 = vadd.xlane.f32.xlu0 %v2286
    %v2288 = vpop.xlane.xlu0 %2287
    %v2289 = vsel %vm1808, %v2130, 0.0
    %2290 = vadd.xlane.f32.xlu0 %v2289
    %v2291 = vpop.xlane.xlu0 %2290
    %v2292 = vsel %vm1808, %v2132, 0.0
    %2293 = vadd.xlane.f32.xlu0 %v2292
    %v2294 = vpop.xlane.xlu0 %2293
    %v2295 = vsel %vm1808, %v2134, 0.0
    %2296 = vadd.xlane.f32.xlu0 %v2295
    %v2297 = vpop.xlane.xlu0 %2296
    %v2298 = vsel %vm1808, %v2136, 0.0
    %2299 = vadd.xlane.f32.xlu0 %v2298
    %v2300 = vpop.xlane.xlu0 %2299
    %v2301 = vsel %vm1808, %v2138, 0.0
    %2302 = vadd.xlane.f32.xlu0 %v2301
    %v2303 = vpop.xlane.xlu0 %2302
    %v2304 = vsel %vm1808, %v2140, 0.0
    %2305 = vadd.xlane.f32.xlu0 %v2304
    %v2306 = vpop.xlane.xlu0 %2305
    %v2307 = vsel %vm1808, %v2142, 0.0
    %2308 = vadd.xlane.f32.xlu0 %v2307
    %v2309 = vpop.xlane.xlu0 %2308
    %v2310 = vsel %vm1808, %v2144, 0.0
    %2311 = vadd.xlane.f32.xlu0 %v2310
    %v2312 = vpop.xlane.xlu0 %2311
    %v2313 = vsel %vm1808, %v2146, 0.0
    %2314 = vadd.xlane.f32.xlu0 %v2313
    %v2315 = vpop.xlane.xlu0 %2314
    %v2316 = vsel %vm1808, %v2148, 0.0
    %2317 = vadd.xlane.f32.xlu0 %v2316
    %v2318 = vpop.xlane.xlu0 %2317
    %v2319 = vsel %vm1808, %v2150, 0.0
    %2320 = vadd.xlane.f32.xlu0 %v2319
    %v2321 = vpop.xlane.xlu0 %2320
    %v2322 = vsel %vm1808, %v2152, 0.0
    %2323 = vadd.xlane.f32.xlu0 %v2322
    %v2324 = vpop.xlane.xlu0 %2323
    %v2325 = vsel %vm1808, %v2154, 0.0
    %2326 = vadd.xlane.f32.xlu0 %v2325
    %v2327 = vpop.xlane.xlu0 %2326
    %v2328 = vsel %vm1808, %v2156, 0.0
    %2329 = vadd.xlane.f32.xlu0 %v2328
    %v2330 = vpop.xlane.xlu0 %2329
    %v2331 = vsel %vm1808, %v2158, 0.0
    %2332 = vadd.xlane.f32.xlu0 %v2331
    %v2333 = vpop.xlane.xlu0 %2332
    %v2334 = vsel %vm1808, %v2160, 0.0
    %2335 = vadd.xlane.f32.xlu0 %v2334
    %v2336 = vpop.xlane.xlu0 %2335
    %v2337 = vsel %vm1808, %v2162, 0.0
    %2338 = vadd.xlane.f32.xlu0 %v2337
    %v2339 = vpop.xlane.xlu0 %2338
    %v2340 = vsel %vm1808, %v2164, 0.0
    %2341 = vadd.xlane.f32.xlu0 %v2340
    %v2342 = vpop.xlane.xlu0 %2341
    %v2343 = vsel %vm1808, %v2166, 0.0
    %2344 = vadd.xlane.f32.xlu0 %v2343
    %v2345 = vpop.xlane.xlu0 %2344
    %v2346 = vsel %vm1808, %v2168, 0.0
    %2347 = vadd.xlane.f32.xlu0 %v2346
    %v2348 = vpop.xlane.xlu0 %2347
    %v2349 = vsel %vm1808, %v2170, 0.0
    %2350 = vadd.xlane.f32.xlu0 %v2349
    %v2351 = vpop.xlane.xlu0 %2350
    %v2352 = vsel %vm1808, %v2172, 0.0
    %2353 = vadd.xlane.f32.xlu0 %v2352
    %v2354 = vpop.xlane.xlu0 %2353
    %v2355 = vsel %vm1808, %v2174, 0.0
    %2356 = vadd.xlane.f32.xlu0 %v2355
    %v2357 = vpop.xlane.xlu0 %2356
    %v2358 = vsel %vm1808, %v2176, 0.0
    %2359 = vadd.xlane.f32.xlu0 %v2358
    %v2360 = vpop.xlane.xlu0 %2359
    %v2361 = vsel %vm1808, %v2178, 0.0
    %2362 = vadd.xlane.f32.xlu0 %v2361
    %v2363 = vpop.xlane.xlu0 %2362
    %v2364 = vsel %vm1808, %v2180, 0.0
    %2365 = vadd.xlane.f32.xlu0 %v2364
    %v2366 = vpop.xlane.xlu0 %2365
    %v2367 = vsel %vm1808, %v2182, 0.0
    %2368 = vadd.xlane.f32.xlu0 %v2367
    %v2369 = vpop.xlane.xlu0 %2368
    %v2370 = vsel %vm1808, %v2184, 0.0
    %2371 = vadd.xlane.f32.xlu0 %v2370
    %v2372 = vpop.xlane.xlu0 %2371
    %v2373 = vsel %vm1808, %v2186, 0.0
    %2374 = vadd.xlane.f32.xlu0 %v2373
    %v2375 = vpop.xlane.xlu0 %2374
    %v2376 = vsel %vm1808, %v2188, 0.0
    %2377 = vadd.xlane.f32.xlu0 %v2376
    %v2378 = vpop.xlane.xlu0 %2377
    %v2379 = vsel %vm1808, %v2190, 0.0
    %2380 = vadd.xlane.f32.xlu0 %v2379
    %v2381 = vpop.xlane.xlu0 %2380
    %v2382 = vsel %vm1808, %v2192, 0.0
    %2383 = vadd.xlane.f32.xlu0 %v2382
    %v2384 = vpop.xlane.xlu0 %2383
    %v2385 = vrcp.pop %v2195
    %v2386 = vrcp.pop %v2198
    %v2387 = vrcp.pop %v2201
    %v2388 = vrcp.pop %v2204
    %v2389 = vrcp.pop %v2207
    %v2390 = vrcp.pop %v2210
    %v2391 = vrcp.pop %v2213
    %v2392 = vrcp.pop %v2216
    %v2393 = vrcp.pop %v2219
    %v2394 = vrcp.pop %v2222
    %v2395 = vrcp.pop %v2225
    %v2396 = vrcp.pop %v2228
    %v2397 = vrcp.pop %v2231
    %v2398 = vrcp.pop %v2234
    %v2399 = vrcp.pop %v2237
    %v2400 = vrcp.pop %v2240
    %v2401 = vrcp.pop %v2243
    %v2402 = vrcp.pop %v2246
    %v2403 = vrcp.pop %v2249
    %v2404 = vrcp.pop %v2252
    %v2405 = vrcp.pop %v2255
    %v2406 = vrcp.pop %v2258
    %v2407 = vrcp.pop %v2261
    %v2408 = vrcp.pop %v2264
    %v2409 = vrcp.pop %v2267
    %v2410 = vrcp.pop %v2270
    %v2411 = vrcp.pop %v2273
    %v2412 = vrcp.pop %v2276
    %v2413 = vrcp.pop %v2279
    %v2414 = vrcp.pop %v2282
    %v2415 = vrcp.pop %v2285
    %v2416 = vrcp.pop %v2288
    %v2417 = vrcp.pop %v2291
    %v2418 = vrcp.pop %v2294
    %v2419 = vrcp.pop %v2297
    %v2420 = vrcp.pop %v2300
    %v2421 = vrcp.pop %v2303
    %v2422 = vrcp.pop %v2306
    %v2423 = vrcp.pop %v2309
    %v2424 = vrcp.pop %v2312
    %v2425 = vrcp.pop %v2315
    %v2426 = vrcp.pop %v2318
    %v2427 = vrcp.pop %v2321
    %v2428 = vrcp.pop %v2324
    %v2429 = vrcp.pop %v2327
    %v2430 = vrcp.pop %v2330
    %v2431 = vrcp.pop %v2333
    %v2432 = vrcp.pop %v2336
    %v2433 = vrcp.pop %v2339
    %v2434 = vrcp.pop %v2342
    %v2435 = vrcp.pop %v2345
    %v2436 = vrcp.pop %v2348
    %v2437 = vrcp.pop %v2351
    %v2438 = vrcp.pop %v2354
    %v2439 = vrcp.pop %v2357
    %v2440 = vrcp.pop %v2360
    %v2441 = vrcp.pop %v2363
    %v2442 = vrcp.pop %v2366
    %v2443 = vrcp.pop %v2369
    %v2444 = vrcp.pop %v2372
    %v2445 = vrcp.pop %v2375
    %v2446 = vrcp.pop %v2378
    %v2447 = vrcp.pop %v2381
    %v2448 = vrcp.pop %v2384
    %v2449 = vmul.f32 %v2066, %v2385
    %v2450 = vmul.f32 %v2068, %v2386
    %v2451 = vmul.f32 %v2070, %v2387
    %v2452 = vmul.f32 %v2072, %v2388
    %v2453 = vmul.f32 %v2074, %v2389
    %v2454 = vmul.f32 %v2076, %v2390
    %v2455 = vmul.f32 %v2078, %v2391
    %v2456 = vmul.f32 %v2080, %v2392
    %v2457 = vmul.f32 %v2082, %v2393
    %v2458 = vmul.f32 %v2084, %v2394
    %v2459 = vmul.f32 %v2086, %v2395
    %v2460 = vmul.f32 %v2088, %v2396
    %v2461 = vmul.f32 %v2090, %v2397
    %v2462 = vmul.f32 %v2092, %v2398
    %v2463 = vmul.f32 %v2094, %v2399
    %v2464 = vmul.f32 %v2096, %v2400
    %v2465 = vmul.f32 %v2098, %v2401
    %v2466 = vmul.f32 %v2100, %v2402
    %v2467 = vmul.f32 %v2102, %v2403
    %v2468 = vmul.f32 %v2104, %v2404
    %v2469 = vmul.f32 %v2106, %v2405
    %v2470 = vmul.f32 %v2108, %v2406
    %v2471 = vmul.f32 %v2110, %v2407
    %v2472 = vmul.f32 %v2112, %v2408
    %v2473 = vmul.f32 %v2114, %v2409
    %v2474 = vmul.f32 %v2116, %v2410
    %v2475 = vmul.f32 %v2118, %v2411
    %v2476 = vmul.f32 %v2120, %v2412
    %v2477 = vmul.f32 %v2122, %v2413
    %v2478 = vmul.f32 %v2124, %v2414
    %v2479 = vmul.f32 %v2126, %v2415
    %v2480 = vmul.f32 %v2128, %v2416
    %v2481 = vmul.f32 %v2130, %v2417
    %v2482 = vmul.f32 %v2132, %v2418
    %v2483 = vmul.f32 %v2134, %v2419
    %v2484 = vmul.f32 %v2136, %v2420
    %v2485 = vmul.f32 %v2138, %v2421
    %v2486 = vmul.f32 %v2140, %v2422
    %v2487 = vmul.f32 %v2142, %v2423
    %v2488 = vmul.f32 %v2144, %v2424
    %v2489 = vmul.f32 %v2146, %v2425
    %v2490 = vmul.f32 %v2148, %v2426
    %v2491 = vmul.f32 %v2150, %v2427
    %v2492 = vmul.f32 %v2152, %v2428
    %v2493 = vmul.f32 %v2154, %v2429
    %v2494 = vmul.f32 %v2156, %v2430
    %v2495 = vmul.f32 %v2158, %v2431
    %v2496 = vmul.f32 %v2160, %v2432
    %v2497 = vmul.f32 %v2162, %v2433
    %v2498 = vmul.f32 %v2164, %v2434
    %v2499 = vmul.f32 %v2166, %v2435
    %v2500 = vmul.f32 %v2168, %v2436
    %v2501 = vmul.f32 %v2170, %v2437
    %v2502 = vmul.f32 %v2172, %v2438
    %v2503 = vmul.f32 %v2174, %v2439
    %v2504 = vmul.f32 %v2176, %v2440
    %v2505 = vmul.f32 %v2178, %v2441
    %v2506 = vmul.f32 %v2180, %v2442
    %v2507 = vmul.f32 %v2182, %v2443
    %v2508 = vmul.f32 %v2184, %v2444
    %v2509 = vmul.f32 %v2186, %v2445
    %v2510 = vmul.f32 %v2188, %v2446
    %v2511 = vmul.f32 %v2190, %v2447
    %v2512 = vmul.f32 %v2192, %v2448
    %v2513 = vpack.c.bf16 %v2450, %v2449
    %v2514 = vpack.c.bf16 %v2452, %v2451
    %v2515 = vpack.c.bf16 %v2454, %v2453
    %v2516 = vpack.c.bf16 %v2456, %v2455
    %v2517 = vpack.c.bf16 %v2458, %v2457
    %v2518 = vpack.c.bf16 %v2460, %v2459
    %v2519 = vpack.c.bf16 %v2462, %v2461
    %v2520 = vpack.c.bf16 %v2464, %v2463
    %v2521 = vpack.c.bf16 %v2466, %v2465
    %v2522 = vpack.c.bf16 %v2468, %v2467
    %v2523 = vpack.c.bf16 %v2470, %v2469
    %v2524 = vpack.c.bf16 %v2472, %v2471
    %v2525 = vpack.c.bf16 %v2474, %v2473
    %v2526 = vpack.c.bf16 %v2476, %v2475
    %v2527 = vpack.c.bf16 %v2478, %v2477
    %v2528 = vpack.c.bf16 %v2480, %v2479
    %v2529 = vpack.c.bf16 %v2482, %v2481
    %v2530 = vpack.c.bf16 %v2484, %v2483
    %v2531 = vpack.c.bf16 %v2486, %v2485
    %v2532 = vpack.c.bf16 %v2488, %v2487
    %v2533 = vpack.c.bf16 %v2490, %v2489
    %v2534 = vpack.c.bf16 %v2492, %v2491
    %v2535 = vpack.c.bf16 %v2494, %v2493
    %v2536 = vpack.c.bf16 %v2496, %v2495
    %v2537 = vpack.c.bf16 %v2498, %v2497
    %v2538 = vpack.c.bf16 %v2500, %v2499
    %v2539 = vpack.c.bf16 %v2502, %v2501
    %v2540 = vpack.c.bf16 %v2504, %v2503
    %v2541 = vpack.c.bf16 %v2506, %v2505
    %v2542 = vpack.c.bf16 %v2508, %v2507
    %v2543 = vpack.c.bf16 %v2510, %v2509
    %v2544 = vpack.c.bf16 %v2512, %v2511
    %v2546 = vsel %vm1808, %v2513, 0
    %v2549 = vsel %vm1808, %v2514, 0
    %v2552 = vsel %vm1808, %v2515, 0
    %v2555 = vsel %vm1808, %v2516, 0
    %2557 = vmatprep.subr.bf16.mxu0 0
    %2558 = vmatpush1.bf16.msra.mxu0 0
    %2559 = vmatprep.subr.bf16.mxu0 0
    %2560 = vmatpush1.bf16.msra.mxu0 0
    %2561 = vmatprep.subr.bf16.mxu0 0
    %2562 = vmatpush1.bf16.msra.mxu0 0
    %2563 = vmatprep.subr.bf16.mxu0 0
    %2564 = vmatpush1.bf16.msra.mxu0 0
    %2565 = vmatprep.subr.bf16.mxu0 0
    %2566 = vmatpush1.bf16.msra.mxu0 %v1066
    %2567 = vmatprep.subr.bf16.mxu0 0
    %2568 = vmatpush1.bf16.msra.mxu0 %v1065
    %2569 = vmatprep.subr.bf16.mxu0 0
    %2570 = vmatpush1.bf16.msra.mxu0 %v1064
    %2571 = vmatprep.subr.bf16.mxu0 0
    %2572 = vmatpush1.bf16.msra.mxu0 %v1063
    %2573 = vmatprep.subr.bf16.mxu0 0
    %2574 = vmatpush2.bf16.msra.mxu0 0
    %2575 = vmatprep.subr.bf16.mxu0 0
    %2576 = vmatpush2.bf16.msra.mxu0 0
    %2577 = vmatprep.subr.bf16.mxu0 0
    %2578 = vmatpush2.bf16.msra.mxu0 0
    %2579 = vmatprep.subr.bf16.mxu0 0
    %2580 = vmatpush2.bf16.msra.mxu0 0
    %2581 = vmatprep.subr.bf16.mxu0 0
    %2582 = vmatpush2.bf16.msra.mxu0 0
    %2583 = vmatprep.subr.bf16.mxu0 0
    %2584 = vmatpush2.bf16.msra.mxu0 0
    %2585 = vmatprep.subr.bf16.mxu0 0
    %2586 = vmatpush2.bf16.msra.mxu0 0
    %2587 = vmatprep.subr.bf16.mxu0 0
    %2588 = vmatpush2.bf16.msra.mxu0 0
    %2589 = vmatprep.mubr.bf16.mxu0 0
    %2590 = vmatmul.mubr.bf16.gmra.mxu0 %v2546
    %v2591 = vpop.f32.mrf.mxu0
    %v2592 = vadd.f32 0.0, %v2591
    %v2593 = vpop.f32.mrf.mxu0
    %v2594 = vpop.f32.mrf.mxu0
    %v2595 = vadd.f32 0.0, %v2594
    %v2596 = vpop.f32.mrf.mxu0
    %2597 = vmatprep.mubr.bf16.mxu0 0
    %2598 = vmatmul.mubr.bf16.gmra.mxu0 %v2549
    %v2599 = vpop.f32.mrf.mxu0
    %v2600 = vadd.f32 0.0, %v2599
    %v2601 = vpop.f32.mrf.mxu0
    %v2602 = vpop.f32.mrf.mxu0
    %v2603 = vadd.f32 0.0, %v2602
    %v2604 = vpop.f32.mrf.mxu0
    %2605 = vmatprep.mubr.bf16.mxu0 0
    %2606 = vmatmul.mubr.bf16.gmra.mxu0 %v2552
    %v2607 = vpop.f32.mrf.mxu0
    %v2608 = vadd.f32 0.0, %v2607
    %v2609 = vpop.f32.mrf.mxu0
    %v2610 = vpop.f32.mrf.mxu0
    %v2611 = vadd.f32 0.0, %v2610
    %v2612 = vpop.f32.mrf.mxu0
    %2613 = vmatprep.mubr.bf16.mxu0 0
    %2614 = vmatmul.mubr.bf16.gmra.mxu0 %v2555
    %v2615 = vpop.f32.mrf.mxu0
    %v2616 = vadd.f32 0.0, %v2615
    %v2617 = vpop.f32.mrf.mxu0
    %v2618 = vpop.f32.mrf.mxu0
    %v2619 = vadd.f32 0.0, %v2618
    %v2620 = vpop.f32.mrf.mxu0
    %2621 = vdwg.mxu0
    %v2623 = vsel %vm1808, %v2517, 0
    %v2626 = vsel %vm1808, %v2518, 0
    %v2629 = vsel %vm1808, %v2519, 0
    %v2632 = vsel %vm1808, %v2520, 0
    %2634 = vmatprep.subr.bf16.mxu0 0
    %2635 = vmatpush1.bf16.msra.mxu0 0
    %2636 = vmatprep.subr.bf16.mxu0 0
    %2637 = vmatpush1.bf16.msra.mxu0 0
    %2638 = vmatprep.subr.bf16.mxu0 0
    %2639 = vmatpush1.bf16.msra.mxu0 0
    %2640 = vmatprep.subr.bf16.mxu0 0
    %2641 = vmatpush1.bf16.msra.mxu0 0
    %2642 = vmatprep.subr.bf16.mxu0 0
    %2643 = vmatpush1.bf16.msra.mxu0 %v1070
    %2644 = vmatprep.subr.bf16.mxu0 0
    %2645 = vmatpush1.bf16.msra.mxu0 %v1069
    %2646 = vmatprep.subr.bf16.mxu0 0
    %2647 = vmatpush1.bf16.msra.mxu0 %v1068
    %2648 = vmatprep.subr.bf16.mxu0 0
    %2649 = vmatpush1.bf16.msra.mxu0 %v1067
    %2650 = vmatprep.subr.bf16.mxu0 0
    %2651 = vmatpush2.bf16.msra.mxu0 0
    %2652 = vmatprep.subr.bf16.mxu0 0
    %2653 = vmatpush2.bf16.msra.mxu0 0
    %2654 = vmatprep.subr.bf16.mxu0 0
    %2655 = vmatpush2.bf16.msra.mxu0 0
    %2656 = vmatprep.subr.bf16.mxu0 0
    %2657 = vmatpush2.bf16.msra.mxu0 0
    %2658 = vmatprep.subr.bf16.mxu0 0
    %2659 = vmatpush2.bf16.msra.mxu0 0
    %2660 = vmatprep.subr.bf16.mxu0 0
    %2661 = vmatpush2.bf16.msra.mxu0 0
    %2662 = vmatprep.subr.bf16.mxu0 0
    %2663 = vmatpush2.bf16.msra.mxu0 0
    %2664 = vmatprep.subr.bf16.mxu0 0
    %2665 = vmatpush2.bf16.msra.mxu0 0
    %2666 = vmatprep.mubr.bf16.mxu0 0
    %2667 = vmatmul.mubr.bf16.gmra.mxu0 %v2623
    %v2668 = vpop.f32.mrf.mxu0
    %v2669 = vadd.f32 0.0, %v2668
    %v2670 = vpop.f32.mrf.mxu0
    %v2671 = vpop.f32.mrf.mxu0
    %v2672 = vadd.f32 0.0, %v2671
    %v2673 = vpop.f32.mrf.mxu0
    %2674 = vmatprep.mubr.bf16.mxu0 0
    %2675 = vmatmul.mubr.bf16.gmra.mxu0 %v2626
    %v2676 = vpop.f32.mrf.mxu0
    %v2677 = vadd.f32 0.0, %v2676
    %v2678 = vpop.f32.mrf.mxu0
    %v2679 = vpop.f32.mrf.mxu0
    %v2680 = vadd.f32 0.0, %v2679
    %v2681 = vpop.f32.mrf.mxu0
    %2682 = vmatprep.mubr.bf16.mxu0 0
    %2683 = vmatmul.mubr.bf16.gmra.mxu0 %v2629
    %v2684 = vpop.f32.mrf.mxu0
    %v2685 = vadd.f32 0.0, %v2684
    %v2686 = vpop.f32.mrf.mxu0
    %v2687 = vpop.f32.mrf.mxu0
    %v2688 = vadd.f32 0.0, %v2687
    %v2689 = vpop.f32.mrf.mxu0
    %2690 = vmatprep.mubr.bf16.mxu0 0
    %2691 = vmatmul.mubr.bf16.gmra.mxu0 %v2632
    %v2692 = vpop.f32.mrf.mxu0
    %v2693 = vadd.f32 0.0, %v2692
    %v2694 = vpop.f32.mrf.mxu0
    %v2695 = vpop.f32.mrf.mxu0
    %v2696 = vadd.f32 0.0, %v2695
    %v2697 = vpop.f32.mrf.mxu0
    %2698 = vdwg.mxu0
    %v2700 = vsel %vm1808, %v2521, 0
    %v2703 = vsel %vm1808, %v2522, 0
    %v2706 = vsel %vm1808, %v2523, 0
    %v2709 = vsel %vm1808, %v2524, 0
    %2711 = vmatprep.subr.bf16.mxu0 0
    %2712 = vmatpush1.bf16.msra.mxu0 0
    %2713 = vmatprep.subr.bf16.mxu0 0
    %2714 = vmatpush1.bf16.msra.mxu0 0
    %2715 = vmatprep.subr.bf16.mxu0 0
    %2716 = vmatpush1.bf16.msra.mxu0 0
    %2717 = vmatprep.subr.bf16.mxu0 0
    %2718 = vmatpush1.bf16.msra.mxu0 0
    %2719 = vmatprep.subr.bf16.mxu0 0
    %2720 = vmatpush1.bf16.msra.mxu0 %v1074
    %2721 = vmatprep.subr.bf16.mxu0 0
    %2722 = vmatpush1.bf16.msra.mxu0 %v1073
    %2723 = vmatprep.subr.bf16.mxu0 0
    %2724 = vmatpush1.bf16.msra.mxu0 %v1072
    %2725 = vmatprep.subr.bf16.mxu0 0
    %2726 = vmatpush1.bf16.msra.mxu0 %v1071
    %2727 = vmatprep.subr.bf16.mxu0 0
    %2728 = vmatpush2.bf16.msra.mxu0 0
    %2729 = vmatprep.subr.bf16.mxu0 0
    %2730 = vmatpush2.bf16.msra.mxu0 0
    %2731 = vmatprep.subr.bf16.mxu0 0
    %2732 = vmatpush2.bf16.msra.mxu0 0
    %2733 = vmatprep.subr.bf16.mxu0 0
    %2734 = vmatpush2.bf16.msra.mxu0 0
    %2735 = vmatprep.subr.bf16.mxu0 0
    %2736 = vmatpush2.bf16.msra.mxu0 0
    %2737 = vmatprep.subr.bf16.mxu0 0
    %2738 = vmatpush2.bf16.msra.mxu0 0
    %2739 = vmatprep.subr.bf16.mxu0 0
    %2740 = vmatpush2.bf16.msra.mxu0 0
    %2741 = vmatprep.subr.bf16.mxu0 0
    %2742 = vmatpush2.bf16.msra.mxu0 0
    %2743 = vmatprep.mubr.bf16.mxu0 0
    %2744 = vmatmul.mubr.bf16.gmra.mxu0 %v2700
    %v2745 = vpop.f32.mrf.mxu0
    %v2746 = vadd.f32 0.0, %v2745
    %v2747 = vpop.f32.mrf.mxu0
    %v2748 = vpop.f32.mrf.mxu0
    %v2749 = vadd.f32 0.0, %v2748
    %v2750 = vpop.f32.mrf.mxu0
    %2751 = vmatprep.mubr.bf16.mxu0 0
    %2752 = vmatmul.mubr.bf16.gmra.mxu0 %v2703
    %v2753 = vpop.f32.mrf.mxu0
    %v2754 = vadd.f32 0.0, %v2753
    %v2755 = vpop.f32.mrf.mxu0
    %v2756 = vpop.f32.mrf.mxu0
    %v2757 = vadd.f32 0.0, %v2756
    %v2758 = vpop.f32.mrf.mxu0
    %2759 = vmatprep.mubr.bf16.mxu0 0
    %2760 = vmatmul.mubr.bf16.gmra.mxu0 %v2706
    %v2761 = vpop.f32.mrf.mxu0
    %v2762 = vadd.f32 0.0, %v2761
    %v2763 = vpop.f32.mrf.mxu0
    %v2764 = vpop.f32.mrf.mxu0
    %v2765 = vadd.f32 0.0, %v2764
    %v2766 = vpop.f32.mrf.mxu0
    %2767 = vmatprep.mubr.bf16.mxu0 0
    %2768 = vmatmul.mubr.bf16.gmra.mxu0 %v2709
    %v2769 = vpop.f32.mrf.mxu0
    %v2770 = vadd.f32 0.0, %v2769
    %v2771 = vpop.f32.mrf.mxu0
    %v2772 = vpop.f32.mrf.mxu0
    %v2773 = vadd.f32 0.0, %v2772
    %v2774 = vpop.f32.mrf.mxu0
    %2775 = vdwg.mxu0
    %v2777 = vsel %vm1808, %v2525, 0
    %v2780 = vsel %vm1808, %v2526, 0
    %v2783 = vsel %vm1808, %v2527, 0
    %v2786 = vsel %vm1808, %v2528, 0
    %2788 = vmatprep.subr.bf16.mxu0 0
    %2789 = vmatpush1.bf16.msra.mxu0 0
    %2790 = vmatprep.subr.bf16.mxu0 0
    %2791 = vmatpush1.bf16.msra.mxu0 0
    %2792 = vmatprep.subr.bf16.mxu0 0
    %2793 = vmatpush1.bf16.msra.mxu0 0
    %2794 = vmatprep.subr.bf16.mxu0 0
    %2795 = vmatpush1.bf16.msra.mxu0 0
    %2796 = vmatprep.subr.bf16.mxu0 0
    %2797 = vmatpush1.bf16.msra.mxu0 %v1078
    %2798 = vmatprep.subr.bf16.mxu0 0
    %2799 = vmatpush1.bf16.msra.mxu0 %v1077
    %2800 = vmatprep.subr.bf16.mxu0 0
    %2801 = vmatpush1.bf16.msra.mxu0 %v1076
    %2802 = vmatprep.subr.bf16.mxu0 0
    %2803 = vmatpush1.bf16.msra.mxu0 %v1075
    %2804 = vmatprep.subr.bf16.mxu0 0
    %2805 = vmatpush2.bf16.msra.mxu0 0
    %2806 = vmatprep.subr.bf16.mxu0 0
    %2807 = vmatpush2.bf16.msra.mxu0 0
    %2808 = vmatprep.subr.bf16.mxu0 0
    %2809 = vmatpush2.bf16.msra.mxu0 0
    %2810 = vmatprep.subr.bf16.mxu0 0
    %2811 = vmatpush2.bf16.msra.mxu0 0
    %2812 = vmatprep.subr.bf16.mxu0 0
    %2813 = vmatpush2.bf16.msra.mxu0 0
    %2814 = vmatprep.subr.bf16.mxu0 0
    %2815 = vmatpush2.bf16.msra.mxu0 0
    %2816 = vmatprep.subr.bf16.mxu0 0
    %2817 = vmatpush2.bf16.msra.mxu0 0
    %2818 = vmatprep.subr.bf16.mxu0 0
    %2819 = vmatpush2.bf16.msra.mxu0 0
    %2820 = vmatprep.mubr.bf16.mxu0 0
    %2821 = vmatmul.mubr.bf16.gmra.mxu0 %v2777
    %v2822 = vpop.f32.mrf.mxu0
    %v2823 = vadd.f32 0.0, %v2822
    %v2824 = vpop.f32.mrf.mxu0
    %v2825 = vpop.f32.mrf.mxu0
    %v2826 = vadd.f32 0.0, %v2825
    %v2827 = vpop.f32.mrf.mxu0
    %2828 = vmatprep.mubr.bf16.mxu0 0
    %2829 = vmatmul.mubr.bf16.gmra.mxu0 %v2780
    %v2830 = vpop.f32.mrf.mxu0
    %v2831 = vadd.f32 0.0, %v2830
    %v2832 = vpop.f32.mrf.mxu0
    %v2833 = vpop.f32.mrf.mxu0
    %v2834 = vadd.f32 0.0, %v2833
    %v2835 = vpop.f32.mrf.mxu0
    %2836 = vmatprep.mubr.bf16.mxu0 0
    %2837 = vmatmul.mubr.bf16.gmra.mxu0 %v2783
    %v2838 = vpop.f32.mrf.mxu0
    %v2839 = vadd.f32 0.0, %v2838
    %v2840 = vpop.f32.mrf.mxu0
    %v2841 = vpop.f32.mrf.mxu0
    %v2842 = vadd.f32 0.0, %v2841
    %v2843 = vpop.f32.mrf.mxu0
    %2844 = vmatprep.mubr.bf16.mxu0 0
    %2845 = vmatmul.mubr.bf16.gmra.mxu0 %v2786
    %v2846 = vpop.f32.mrf.mxu0
    %v2847 = vadd.f32 0.0, %v2846
    %v2848 = vpop.f32.mrf.mxu0
    %v2849 = vpop.f32.mrf.mxu0
    %v2850 = vadd.f32 0.0, %v2849
    %v2851 = vpop.f32.mrf.mxu0
    %2852 = vdwg.mxu0
    %v2854 = vsel %vm1808, %v2529, 0
    %v2857 = vsel %vm1808, %v2530, 0
    %v2860 = vsel %vm1808, %v2531, 0
    %v2863 = vsel %vm1808, %v2532, 0
    %2865 = vmatprep.subr.bf16.mxu0 0
    %2866 = vmatpush1.bf16.msra.mxu0 0
    %2867 = vmatprep.subr.bf16.mxu0 0
    %2868 = vmatpush1.bf16.msra.mxu0 0
    %2869 = vmatprep.subr.bf16.mxu0 0
    %2870 = vmatpush1.bf16.msra.mxu0 0
    %2871 = vmatprep.subr.bf16.mxu0 0
    %2872 = vmatpush1.bf16.msra.mxu0 0
    %2873 = vmatprep.subr.bf16.mxu0 0
    %2874 = vmatpush1.bf16.msra.mxu0 %v1082
    %2875 = vmatprep.subr.bf16.mxu0 0
    %2876 = vmatpush1.bf16.msra.mxu0 %v1081
    %2877 = vmatprep.subr.bf16.mxu0 0
    %2878 = vmatpush1.bf16.msra.mxu0 %v1080
    %2879 = vmatprep.subr.bf16.mxu0 0
    %2880 = vmatpush1.bf16.msra.mxu0 %v1079
    %2881 = vmatprep.subr.bf16.mxu0 0
    %2882 = vmatpush2.bf16.msra.mxu0 0
    %2883 = vmatprep.subr.bf16.mxu0 0
    %2884 = vmatpush2.bf16.msra.mxu0 0
    %2885 = vmatprep.subr.bf16.mxu0 0
    %2886 = vmatpush2.bf16.msra.mxu0 0
    %2887 = vmatprep.subr.bf16.mxu0 0
    %2888 = vmatpush2.bf16.msra.mxu0 0
    %2889 = vmatprep.subr.bf16.mxu0 0
    %2890 = vmatpush2.bf16.msra.mxu0 0
    %2891 = vmatprep.subr.bf16.mxu0 0
    %2892 = vmatpush2.bf16.msra.mxu0 0
    %2893 = vmatprep.subr.bf16.mxu0 0
    %2894 = vmatpush2.bf16.msra.mxu0 0
    %2895 = vmatprep.subr.bf16.mxu0 0
    %2896 = vmatpush2.bf16.msra.mxu0 0
    %2897 = vmatprep.mubr.bf16.mxu0 0
    %2898 = vmatmul.mubr.bf16.gmra.mxu0 %v2854
    %v2899 = vpop.f32.mrf.mxu0
    %v2900 = vadd.f32 0.0, %v2899
    %v2901 = vpop.f32.mrf.mxu0
    %v2902 = vpop.f32.mrf.mxu0
    %v2903 = vadd.f32 0.0, %v2902
    %v2904 = vpop.f32.mrf.mxu0
    %2905 = vmatprep.mubr.bf16.mxu0 0
    %2906 = vmatmul.mubr.bf16.gmra.mxu0 %v2857
    %v2907 = vpop.f32.mrf.mxu0
    %v2908 = vadd.f32 0.0, %v2907
    %v2909 = vpop.f32.mrf.mxu0
    %v2910 = vpop.f32.mrf.mxu0
    %v2911 = vadd.f32 0.0, %v2910
    %v2912 = vpop.f32.mrf.mxu0
    %2913 = vmatprep.mubr.bf16.mxu0 0
    %2914 = vmatmul.mubr.bf16.gmra.mxu0 %v2860
    %v2915 = vpop.f32.mrf.mxu0
    %v2916 = vadd.f32 0.0, %v2915
    %v2917 = vpop.f32.mrf.mxu0
    %v2918 = vpop.f32.mrf.mxu0
    %v2919 = vadd.f32 0.0, %v2918
    %v2920 = vpop.f32.mrf.mxu0
    %2921 = vmatprep.mubr.bf16.mxu0 0
    %2922 = vmatmul.mubr.bf16.gmra.mxu0 %v2863
    %v2923 = vpop.f32.mrf.mxu0
    %v2924 = vadd.f32 0.0, %v2923
    %v2925 = vpop.f32.mrf.mxu0
    %v2926 = vpop.f32.mrf.mxu0
    %v2927 = vadd.f32 0.0, %v2926
    %v2928 = vpop.f32.mrf.mxu0
    %2929 = vdwg.mxu0
    %v2931 = vsel %vm1808, %v2533, 0
    %v2934 = vsel %vm1808, %v2534, 0
    %v2937 = vsel %vm1808, %v2535, 0
    %v2940 = vsel %vm1808, %v2536, 0
    %2942 = vmatprep.subr.bf16.mxu0 0
    %2943 = vmatpush1.bf16.msra.mxu0 0
    %2944 = vmatprep.subr.bf16.mxu0 0
    %2945 = vmatpush1.bf16.msra.mxu0 0
    %2946 = vmatprep.subr.bf16.mxu0 0
    %2947 = vmatpush1.bf16.msra.mxu0 0
    %2948 = vmatprep.subr.bf16.mxu0 0
    %2949 = vmatpush1.bf16.msra.mxu0 0
    %2950 = vmatprep.subr.bf16.mxu0 0
    %2951 = vmatpush1.bf16.msra.mxu0 %v1086
    %2952 = vmatprep.subr.bf16.mxu0 0
    %2953 = vmatpush1.bf16.msra.mxu0 %v1085
    %2954 = vmatprep.subr.bf16.mxu0 0
    %2955 = vmatpush1.bf16.msra.mxu0 %v1084
    %2956 = vmatprep.subr.bf16.mxu0 0
    %2957 = vmatpush1.bf16.msra.mxu0 %v1083
    %2958 = vmatprep.subr.bf16.mxu0 0
    %2959 = vmatpush2.bf16.msra.mxu0 0
    %2960 = vmatprep.subr.bf16.mxu0 0
    %2961 = vmatpush2.bf16.msra.mxu0 0
    %2962 = vmatprep.subr.bf16.mxu0 0
    %2963 = vmatpush2.bf16.msra.mxu0 0
    %2964 = vmatprep.subr.bf16.mxu0 0
    %2965 = vmatpush2.bf16.msra.mxu0 0
    %2966 = vmatprep.subr.bf16.mxu0 0
    %2967 = vmatpush2.bf16.msra.mxu0 0
    %2968 = vmatprep.subr.bf16.mxu0 0
    %2969 = vmatpush2.bf16.msra.mxu0 0
    %2970 = vmatprep.subr.bf16.mxu0 0
    %2971 = vmatpush2.bf16.msra.mxu0 0
    %2972 = vmatprep.subr.bf16.mxu0 0
    %2973 = vmatpush2.bf16.msra.mxu0 0
    %2974 = vmatprep.mubr.bf16.mxu0 0
    %2975 = vmatmul.mubr.bf16.gmra.mxu0 %v2931
    %v2976 = vpop.f32.mrf.mxu0
    %v2977 = vadd.f32 0.0, %v2976
    %v2978 = vpop.f32.mrf.mxu0
    %v2979 = vpop.f32.mrf.mxu0
    %v2980 = vadd.f32 0.0, %v2979
    %v2981 = vpop.f32.mrf.mxu0
    %2982 = vmatprep.mubr.bf16.mxu0 0
    %2983 = vmatmul.mubr.bf16.gmra.mxu0 %v2934
    %v2984 = vpop.f32.mrf.mxu0
    %v2985 = vadd.f32 0.0, %v2984
    %v2986 = vpop.f32.mrf.mxu0
    %v2987 = vpop.f32.mrf.mxu0
    %v2988 = vadd.f32 0.0, %v2987
    %v2989 = vpop.f32.mrf.mxu0
    %2990 = vmatprep.mubr.bf16.mxu0 0
    %2991 = vmatmul.mubr.bf16.gmra.mxu0 %v2937
    %v2992 = vpop.f32.mrf.mxu0
    %v2993 = vadd.f32 0.0, %v2992
    %v2994 = vpop.f32.mrf.mxu0
    %v2995 = vpop.f32.mrf.mxu0
    %v2996 = vadd.f32 0.0, %v2995
    %v2997 = vpop.f32.mrf.mxu0
    %2998 = vmatprep.mubr.bf16.mxu0 0
    %2999 = vmatmul.mubr.bf16.gmra.mxu0 %v2940
    %v3000 = vpop.f32.mrf.mxu0
    %v3001 = vadd.f32 0.0, %v3000
    %v3002 = vpop.f32.mrf.mxu0
    %v3003 = vpop.f32.mrf.mxu0
    %v3004 = vadd.f32 0.0, %v3003
    %v3005 = vpop.f32.mrf.mxu0
    %3006 = vdwg.mxu0
    %v3008 = vsel %vm1808, %v2537, 0
    %v3011 = vsel %vm1808, %v2538, 0
    %v3014 = vsel %vm1808, %v2539, 0
    %v3017 = vsel %vm1808, %v2540, 0
    %3019 = vmatprep.subr.bf16.mxu0 0
    %3020 = vmatpush1.bf16.msra.mxu0 0
    %3021 = vmatprep.subr.bf16.mxu0 0
    %3022 = vmatpush1.bf16.msra.mxu0 0
    %3023 = vmatprep.subr.bf16.mxu0 0
    %3024 = vmatpush1.bf16.msra.mxu0 0
    %3025 = vmatprep.subr.bf16.mxu0 0
    %3026 = vmatpush1.bf16.msra.mxu0 0
    %3027 = vmatprep.subr.bf16.mxu0 0
    %3028 = vmatpush1.bf16.msra.mxu0 %v1090
    %3029 = vmatprep.subr.bf16.mxu0 0
    %3030 = vmatpush1.bf16.msra.mxu0 %v1089
    %3031 = vmatprep.subr.bf16.mxu0 0
    %3032 = vmatpush1.bf16.msra.mxu0 %v1088
    %3033 = vmatprep.subr.bf16.mxu0 0
    %3034 = vmatpush1.bf16.msra.mxu0 %v1087
    %3035 = vmatprep.subr.bf16.mxu0 0
    %3036 = vmatpush2.bf16.msra.mxu0 0
    %3037 = vmatprep.subr.bf16.mxu0 0
    %3038 = vmatpush2.bf16.msra.mxu0 0
    %3039 = vmatprep.subr.bf16.mxu0 0
    %3040 = vmatpush2.bf16.msra.mxu0 0
    %3041 = vmatprep.subr.bf16.mxu0 0
    %3042 = vmatpush2.bf16.msra.mxu0 0
    %3043 = vmatprep.subr.bf16.mxu0 0
    %3044 = vmatpush2.bf16.msra.mxu0 0
    %3045 = vmatprep.subr.bf16.mxu0 0
    %3046 = vmatpush2.bf16.msra.mxu0 0
    %3047 = vmatprep.subr.bf16.mxu0 0
    %3048 = vmatpush2.bf16.msra.mxu0 0
    %3049 = vmatprep.subr.bf16.mxu0 0
    %3050 = vmatpush2.bf16.msra.mxu0 0
    %3051 = vmatprep.mubr.bf16.mxu0 0
    %3052 = vmatmul.mubr.bf16.gmra.mxu0 %v3008
    %v3053 = vpop.f32.mrf.mxu0
    %v3054 = vadd.f32 0.0, %v3053
    %v3055 = vpop.f32.mrf.mxu0
    %v3056 = vpop.f32.mrf.mxu0
    %v3057 = vadd.f32 0.0, %v3056
    %v3058 = vpop.f32.mrf.mxu0
    %3059 = vmatprep.mubr.bf16.mxu0 0
    %3060 = vmatmul.mubr.bf16.gmra.mxu0 %v3011
    %v3061 = vpop.f32.mrf.mxu0
    %v3062 = vadd.f32 0.0, %v3061
    %v3063 = vpop.f32.mrf.mxu0
    %v3064 = vpop.f32.mrf.mxu0
    %v3065 = vadd.f32 0.0, %v3064
    %v3066 = vpop.f32.mrf.mxu0
    %3067 = vmatprep.mubr.bf16.mxu0 0
    %3068 = vmatmul.mubr.bf16.gmra.mxu0 %v3014
    %v3069 = vpop.f32.mrf.mxu0
    %v3070 = vadd.f32 0.0, %v3069
    %v3071 = vpop.f32.mrf.mxu0
    %v3072 = vpop.f32.mrf.mxu0
    %v3073 = vadd.f32 0.0, %v3072
    %v3074 = vpop.f32.mrf.mxu0
    %3075 = vmatprep.mubr.bf16.mxu0 0
    %3076 = vmatmul.mubr.bf16.gmra.mxu0 %v3017
    %v3077 = vpop.f32.mrf.mxu0
    %v3078 = vadd.f32 0.0, %v3077
    %v3079 = vpop.f32.mrf.mxu0
    %v3080 = vpop.f32.mrf.mxu0
    %v3081 = vadd.f32 0.0, %v3080
    %v3082 = vpop.f32.mrf.mxu0
    %3083 = vdwg.mxu0
    %v3085 = vsel %vm1808, %v2541, 0
    %v3088 = vsel %vm1808, %v2542, 0
    %v3091 = vsel %vm1808, %v2543, 0
    %v3094 = vsel %vm1808, %v2544, 0
    %3096 = vmatprep.subr.bf16.mxu0 0
    %3097 = vmatpush1.bf16.msra.mxu0 0
    %3098 = vmatprep.subr.bf16.mxu0 0
    %3099 = vmatpush1.bf16.msra.mxu0 0
    %3100 = vmatprep.subr.bf16.mxu0 0
    %3101 = vmatpush1.bf16.msra.mxu0 0
    %3102 = vmatprep.subr.bf16.mxu0 0
    %3103 = vmatpush1.bf16.msra.mxu0 0
    %3104 = vmatprep.subr.bf16.mxu0 0
    %3105 = vmatpush1.bf16.msra.mxu0 %v1094
    %3106 = vmatprep.subr.bf16.mxu0 0
    %3107 = vmatpush1.bf16.msra.mxu0 %v1093
    %3108 = vmatprep.subr.bf16.mxu0 0
    %3109 = vmatpush1.bf16.msra.mxu0 %v1092
    %3110 = vmatprep.subr.bf16.mxu0 0
    %3111 = vmatpush1.bf16.msra.mxu0 %v1091
    %3112 = vmatprep.subr.bf16.mxu0 0
    %3113 = vmatpush2.bf16.msra.mxu0 0
    %3114 = vmatprep.subr.bf16.mxu0 0
    %3115 = vmatpush2.bf16.msra.mxu0 0
    %3116 = vmatprep.subr.bf16.mxu0 0
    %3117 = vmatpush2.bf16.msra.mxu0 0
    %3118 = vmatprep.subr.bf16.mxu0 0
    %3119 = vmatpush2.bf16.msra.mxu0 0
    %3120 = vmatprep.subr.bf16.mxu0 0
    %3121 = vmatpush2.bf16.msra.mxu0 0
    %3122 = vmatprep.subr.bf16.mxu0 0
    %3123 = vmatpush2.bf16.msra.mxu0 0
    %3124 = vmatprep.subr.bf16.mxu0 0
    %3125 = vmatpush2.bf16.msra.mxu0 0
    %3126 = vmatprep.subr.bf16.mxu0 0
    %3127 = vmatpush2.bf16.msra.mxu0 0
    %3128 = vmatprep.mubr.bf16.mxu0 0
    %3129 = vmatmul.mubr.bf16.gmra.mxu0 %v3085
    %v3130 = vpop.f32.mrf.mxu0
    %v3131 = vadd.f32 0.0, %v3130
    %v3132 = vpop.f32.mrf.mxu0
    %v3133 = vpop.f32.mrf.mxu0
    %v3134 = vadd.f32 0.0, %v3133
    %v3135 = vpop.f32.mrf.mxu0
    %3136 = vmatprep.mubr.bf16.mxu0 0
    %3137 = vmatmul.mubr.bf16.gmra.mxu0 %v3088
    %v3138 = vpop.f32.mrf.mxu0
    %v3139 = vadd.f32 0.0, %v3138
    %v3140 = vpop.f32.mrf.mxu0
    %v3141 = vpop.f32.mrf.mxu0
    %v3142 = vadd.f32 0.0, %v3141
    %v3143 = vpop.f32.mrf.mxu0
    %3144 = vmatprep.mubr.bf16.mxu0 0
    %3145 = vmatmul.mubr.bf16.gmra.mxu0 %v3091
    %v3146 = vpop.f32.mrf.mxu0
    %v3147 = vadd.f32 0.0, %v3146
    %v3148 = vpop.f32.mrf.mxu0
    %v3149 = vpop.f32.mrf.mxu0
    %v3150 = vadd.f32 0.0, %v3149
    %v3151 = vpop.f32.mrf.mxu0
    %3152 = vmatprep.mubr.bf16.mxu0 0
    %3153 = vmatmul.mubr.bf16.gmra.mxu0 %v3094
    %v3154 = vpop.f32.mrf.mxu0
    %v3155 = vadd.f32 0.0, %v3154
    %v3156 = vpop.f32.mrf.mxu0
    %v3157 = vpop.f32.mrf.mxu0
    %v3158 = vadd.f32 0.0, %v3157
    %v3159 = vpop.f32.mrf.mxu0
    %3160 = vdwg.mxu0
    %3177 = vrot.lane.b32.xlu0 %v2746, 32
    %v3178 = vpop.permute.xlu0 %3177
    %3179 = vrot.lane.b32.xlu0 %v2749, 32
    %v3180 = vpop.permute.xlu0 %3179
    %3181 = vrot.lane.b32.xlu0 %v2754, 32
    %v3182 = vpop.permute.xlu0 %3181
    %3183 = vrot.lane.b32.xlu0 %v2757, 32
    %v3184 = vpop.permute.xlu0 %3183
    %3185 = vrot.lane.b32.xlu0 %v2762, 32
    %v3186 = vpop.permute.xlu0 %3185
    %3187 = vrot.lane.b32.xlu0 %v2765, 32
    %v3188 = vpop.permute.xlu0 %3187
    %3189 = vrot.lane.b32.xlu0 %v2770, 32
    %v3190 = vpop.permute.xlu0 %3189
    %3191 = vrot.lane.b32.xlu0 %v2773, 32
    %v3192 = vpop.permute.xlu0 %3191
    %3193 = vrot.lane.b32.xlu0 %v2823, 32
    %v3194 = vpop.permute.xlu0 %3193
    %3195 = vrot.lane.b32.xlu0 %v2826, 32
    %v3196 = vpop.permute.xlu0 %3195
    %3197 = vrot.lane.b32.xlu0 %v2831, 32
    %v3198 = vpop.permute.xlu0 %3197
    %3199 = vrot.lane.b32.xlu0 %v2834, 32
    %v3200 = vpop.permute.xlu0 %3199
    %3201 = vrot.lane.b32.xlu0 %v2839, 32
    %v3202 = vpop.permute.xlu0 %3201
    %3203 = vrot.lane.b32.xlu0 %v2842, 32
    %v3204 = vpop.permute.xlu0 %3203
    %3205 = vrot.lane.b32.xlu0 %v2847, 32
    %v3206 = vpop.permute.xlu0 %3205
    %3207 = vrot.lane.b32.xlu0 %v2850, 32
    %v3208 = vpop.permute.xlu0 %3207
    %3241 = vrot.lane.b32.xlu0 %v2900, 64
    %v3242 = vpop.permute.xlu0 %3241
    %3243 = vrot.lane.b32.xlu0 %v2903, 64
    %v3244 = vpop.permute.xlu0 %3243
    %3245 = vrot.lane.b32.xlu0 %v2908, 64
    %v3246 = vpop.permute.xlu0 %3245
    %3247 = vrot.lane.b32.xlu0 %v2911, 64
    %v3248 = vpop.permute.xlu0 %3247
    %3249 = vrot.lane.b32.xlu0 %v2916, 64
    %v3250 = vpop.permute.xlu0 %3249
    %3251 = vrot.lane.b32.xlu0 %v2919, 64
    %v3252 = vpop.permute.xlu0 %3251
    %3253 = vrot.lane.b32.xlu0 %v2924, 64
    %v3254 = vpop.permute.xlu0 %3253
    %3255 = vrot.lane.b32.xlu0 %v2927, 64
    %v3256 = vpop.permute.xlu0 %3255
    %3257 = vrot.lane.b32.xlu0 %v2977, 64
    %v3258 = vpop.permute.xlu0 %3257
    %3259 = vrot.lane.b32.xlu0 %v2980, 64
    %v3260 = vpop.permute.xlu0 %3259
    %3261 = vrot.lane.b32.xlu0 %v2985, 64
    %v3262 = vpop.permute.xlu0 %3261
    %3263 = vrot.lane.b32.xlu0 %v2988, 64
    %v3264 = vpop.permute.xlu0 %3263
    %3265 = vrot.lane.b32.xlu0 %v2993, 64
    %v3266 = vpop.permute.xlu0 %3265
    %3267 = vrot.lane.b32.xlu0 %v2996, 64
    %v3268 = vpop.permute.xlu0 %3267
    %3269 = vrot.lane.b32.xlu0 %v3001, 64
    %v3270 = vpop.permute.xlu0 %3269
    %3271 = vrot.lane.b32.xlu0 %v3004, 64
    %v3272 = vpop.permute.xlu0 %3271
    %3305 = vrot.lane.b32.xlu0 %v3054, 96
    %v3306 = vpop.permute.xlu0 %3305
    %3307 = vrot.lane.b32.xlu0 %v3057, 96
    %v3308 = vpop.permute.xlu0 %3307
    %3309 = vrot.lane.b32.xlu0 %v3062, 96
    %v3310 = vpop.permute.xlu0 %3309
    %3311 = vrot.lane.b32.xlu0 %v3065, 96
    %v3312 = vpop.permute.xlu0 %3311
    %3313 = vrot.lane.b32.xlu0 %v3070, 96
    %v3314 = vpop.permute.xlu0 %3313
    %3315 = vrot.lane.b32.xlu0 %v3073, 96
    %v3316 = vpop.permute.xlu0 %3315
    %3317 = vrot.lane.b32.xlu0 %v3078, 96
    %v3318 = vpop.permute.xlu0 %3317
    %3319 = vrot.lane.b32.xlu0 %v3081, 96
    %v3320 = vpop.permute.xlu0 %3319
    %3321 = vrot.lane.b32.xlu0 %v3131, 96
    %v3322 = vpop.permute.xlu0 %3321
    %3323 = vrot.lane.b32.xlu0 %v3134, 96
    %v3324 = vpop.permute.xlu0 %3323
    %3325 = vrot.lane.b32.xlu0 %v3139, 96
    %v3326 = vpop.permute.xlu0 %3325
    %3327 = vrot.lane.b32.xlu0 %v3142, 96
    %v3328 = vpop.permute.xlu0 %3327
    %3329 = vrot.lane.b32.xlu0 %v3147, 96
    %v3330 = vpop.permute.xlu0 %3329
    %3331 = vrot.lane.b32.xlu0 %v3150, 96
    %v3332 = vpop.permute.xlu0 %3331
    %3333 = vrot.lane.b32.xlu0 %v3155, 96
    %v3334 = vpop.permute.xlu0 %3333
    %3335 = vrot.lane.b32.xlu0 %v3158, 96
    %v3336 = vpop.permute.xlu0 %3335
    %v3353 = vsel %vm1095, %v2592, %v3178
    %v3354 = vsel %vm1095, %v2595, %v3180
    %v3355 = vsel %vm1095, %v2600, %v3182
    %v3356 = vsel %vm1095, %v2603, %v3184
    %v3357 = vsel %vm1095, %v2608, %v3186
    %v3358 = vsel %vm1095, %v2611, %v3188
    %v3359 = vsel %vm1095, %v2616, %v3190
    %v3360 = vsel %vm1095, %v2619, %v3192
    %v3361 = vsel %vm1095, %v2669, %v3194
    %v3362 = vsel %vm1095, %v2672, %v3196
    %v3363 = vsel %vm1095, %v2677, %v3198
    %v3364 = vsel %vm1095, %v2680, %v3200
    %v3365 = vsel %vm1095, %v2685, %v3202
    %v3366 = vsel %vm1095, %v2688, %v3204
    %v3367 = vsel %vm1095, %v2693, %v3206
    %v3368 = vsel %vm1095, %v2696, %v3208
    %v3369 = vsel %vm1808, %v3353, %v3242
    %v3370 = vsel %vm1808, %v3354, %v3244
    %v3371 = vsel %vm1808, %v3355, %v3246
    %v3372 = vsel %vm1808, %v3356, %v3248
    %v3373 = vsel %vm1808, %v3357, %v3250
    %v3374 = vsel %vm1808, %v3358, %v3252
    %v3375 = vsel %vm1808, %v3359, %v3254
    %v3376 = vsel %vm1808, %v3360, %v3256
    %v3377 = vsel %vm1808, %v3361, %v3258
    %v3378 = vsel %vm1808, %v3362, %v3260
    %v3379 = vsel %vm1808, %v3363, %v3262
    %v3380 = vsel %vm1808, %v3364, %v3264
    %v3381 = vsel %vm1808, %v3365, %v3266
    %v3382 = vsel %vm1808, %v3366, %v3268
    %v3383 = vsel %vm1808, %v3367, %v3270
    %v3384 = vsel %vm1808, %v3368, %v3272
    %vm3385 = vcmask 785408
    %v3386 = vsel %vm3385, %v3369, %v3306
    %v3387 = vsel %vm3385, %v3370, %v3308
    %v3388 = vsel %vm3385, %v3371, %v3310
    %v3389 = vsel %vm3385, %v3372, %v3312
    %v3390 = vsel %vm3385, %v3373, %v3314
    %v3391 = vsel %vm3385, %v3374, %v3316
    %v3392 = vsel %vm3385, %v3375, %v3318
    %v3393 = vsel %vm3385, %v3376, %v3320
    %v3394 = vsel %vm3385, %v3377, %v3322
    %v3395 = vsel %vm3385, %v3378, %v3324
    %v3396 = vsel %vm3385, %v3379, %v3326
    %v3397 = vsel %vm3385, %v3380, %v3328
    %v3398 = vsel %vm3385, %v3381, %v3330
    %v3399 = vsel %vm3385, %v3382, %v3332
    %v3400 = vsel %vm3385, %v3383, %v3334
    %v3401 = vsel %vm3385, %v3384, %v3336
    %v3402 = vld [vmem:[%s3] sm:$0xff]
    %v3403 = vld [vmem:[%s3 + $0x8] sm:$0xff]
    %v3404 = vld [vmem:[%s3 + $0x10] sm:$0xff]
    %v3405 = vld [vmem:[%s3 + $0x18] sm:$0xff]
    %v3406 = vld [vmem:[%s3 + $0x20] sm:$0xff]
    %v3407 = vld [vmem:[%s3 + $0x28] sm:$0xff]
    %v3408 = vld [vmem:[%s3 + $0x30] sm:$0xff]
    %v3409 = vld [vmem:[%s3 + $0x38] sm:$0xff]
    %v3410 = vld [vmem:[%s3 + $0x40] sm:$0xff]
    %v3411 = vld [vmem:[%s3 + $0x48] sm:$0xff]
    %v3412 = vld [vmem:[%s3 + $0x50] sm:$0xff]
    %v3413 = vld [vmem:[%s3 + $0x58] sm:$0xff]
    %v3414 = vld [vmem:[%s3 + $0x60] sm:$0xff]
    %v3415 = vld [vmem:[%s3 + $0x68] sm:$0xff]
    %v3416 = vld [vmem:[%s3 + $0x70] sm:$0xff]
    %v3417 = vld [vmem:[%s3 + $0x78] sm:$0xff]
    %v3418 = vld [vmem:[%s4] sm:$0x1]
    %v3420 = vlaneseq
    %v3421 = vshrl.u32 %v3420, 7
    %v3422 = vsub.s32 0, %v3421
    %v3423 = vrot.slane %v3418, %v3422
    %3425 = vmatprep.subr.mxu0 0.0
    %3426 = vmatpush1.msra.mxu0 %v3417
    %3427 = vmatprep.subr.mxu0 0.0
    %3428 = vmatpush1.msra.mxu0 %v3416
    %3429 = vmatprep.subr.mxu0 0.0
    %3430 = vmatpush1.msra.mxu0 %v3415
    %3431 = vmatprep.subr.mxu0 0.0
    %3432 = vmatpush1.msra.mxu0 %v3414
    %3433 = vmatprep.subr.mxu0 0.0
    %3434 = vmatpush1.msra.mxu0 %v3413
    %3435 = vmatprep.subr.mxu0 0.0
    %3436 = vmatpush1.msra.mxu0 %v3412
    %3437 = vmatprep.subr.mxu0 0.0
    %3438 = vmatpush1.msra.mxu0 %v3411
    %3439 = vmatprep.subr.mxu0 0.0
    %3440 = vmatpush1.msra.mxu0 %v3410
    %3441 = vmatprep.subr.mxu0 0.0
    %3442 = vmatpush1.msra.mxu0 %v3409
    %3443 = vmatprep.subr.mxu0 0.0
    %3444 = vmatpush1.msra.mxu0 %v3408
    %3445 = vmatprep.subr.mxu0 0.0
    %3446 = vmatpush1.msra.mxu0 %v3407
    %3447 = vmatprep.subr.mxu0 0.0
    %3448 = vmatpush1.msra.mxu0 %v3406
    %3449 = vmatprep.subr.mxu0 0.0
    %3450 = vmatpush1.msra.mxu0 %v3405
    %3451 = vmatprep.subr.mxu0 0.0
    %3452 = vmatpush1.msra.mxu0 %v3404
    %3453 = vmatprep.subr.mxu0 0.0
    %3454 = vmatpush1.msra.mxu0 %v3403
    %3455 = vmatprep.subr.mxu0 0.0
    %3456 = vmatpush1.msra.mxu0 %v3402
    %3457 = vmatprep.subr.mxu0 0.0
    %3458 = vmatpush2.msra.mxu0 0.0
    %3459 = vmatprep.subr.mxu0 0.0
    %3460 = vmatpush2.msra.mxu0 0.0
    %3461 = vmatprep.subr.mxu0 0.0
    %3462 = vmatpush2.msra.mxu0 0.0
    %3463 = vmatprep.subr.mxu0 0.0
    %3464 = vmatpush2.msra.mxu0 0.0
    %3465 = vmatprep.subr.mxu0 0.0
    %3466 = vmatpush2.msra.mxu0 0.0
    %3467 = vmatprep.subr.mxu0 0.0
    %3468 = vmatpush2.msra.mxu0 0.0
    %3469 = vmatprep.subr.mxu0 0.0
    %3470 = vmatpush2.msra.mxu0 0.0
    %3471 = vmatprep.subr.mxu0 0.0
    %3472 = vmatpush2.msra.mxu0 0.0
    %3473 = vmatprep.subr.mxu0 0.0
    %3474 = vmatpush2.msra.mxu0 0.0
    %3475 = vmatprep.subr.mxu0 0.0
    %3476 = vmatpush2.msra.mxu0 0.0
    %3477 = vmatprep.subr.mxu0 0.0
    %3478 = vmatpush2.msra.mxu0 0.0
    %3479 = vmatprep.subr.mxu0 0.0
    %3480 = vmatpush2.msra.mxu0 0.0
    %3481 = vmatprep.subr.mxu0 0.0
    %3482 = vmatpush2.msra.mxu0 0.0
    %3483 = vmatprep.subr.mxu0 0.0
    %3484 = vmatpush2.msra.mxu0 0.0
    %3485 = vmatprep.subr.mxu0 0.0
    %3486 = vmatpush2.msra.mxu0 0.0
    %3487 = vmatprep.subr.mxu0 0.0
    %3488 = vmatpush2.msra.mxu0 0.0
    %3489 = vmatprep.mubr.f32.mxu0 0.0
    %3490 = vmatmul.mubr.f32.gmra.mxu0 %v3386
    %v3491 = vpop.f32.mrf.mxu0
    %v3492 = vadd.f32 %v3423, %v3491
    %v3493 = vpop.f32.mrf.mxu0
    %3494 = vmatprep.mubr.f32.mxu0 0.0
    %3495 = vmatmul.mubr.f32.gmra.mxu0 %v3387
    %v3496 = vpop.f32.mrf.mxu0
    %v3497 = vadd.f32 %v3423, %v3496
    %v3498 = vpop.f32.mrf.mxu0
    %3499 = vmatprep.mubr.f32.mxu0 0.0
    %3500 = vmatmul.mubr.f32.gmra.mxu0 %v3388
    %v3501 = vpop.f32.mrf.mxu0
    %v3502 = vadd.f32 %v3423, %v3501
    %v3503 = vpop.f32.mrf.mxu0
    %3504 = vmatprep.mubr.f32.mxu0 0.0
    %3505 = vmatmul.mubr.f32.gmra.mxu0 %v3389
    %v3506 = vpop.f32.mrf.mxu0
    %v3507 = vadd.f32 %v3423, %v3506
    %v3508 = vpop.f32.mrf.mxu0
    %3509 = vmatprep.mubr.f32.mxu0 0.0
    %3510 = vmatmul.mubr.f32.gmra.mxu0 %v3390
    %v3511 = vpop.f32.mrf.mxu0
    %v3512 = vadd.f32 %v3423, %v3511
    %v3513 = vpop.f32.mrf.mxu0
    %3514 = vmatprep.mubr.f32.mxu0 0.0
    %3515 = vmatmul.mubr.f32.gmra.mxu0 %v3391
    %v3516 = vpop.f32.mrf.mxu0
    %v3517 = vadd.f32 %v3423, %v3516
    %v3518 = vpop.f32.mrf.mxu0
    %3519 = vmatprep.mubr.f32.mxu0 0.0
    %3520 = vmatmul.mubr.f32.gmra.mxu0 %v3392
    %v3521 = vpop.f32.mrf.mxu0
    %v3522 = vadd.f32 %v3423, %v3521
    %v3523 = vpop.f32.mrf.mxu0
    %3524 = vmatprep.mubr.f32.mxu0 0.0
    %3525 = vmatmul.mubr.f32.gmra.mxu0 %v3393
    %v3526 = vpop.f32.mrf.mxu0
    %v3527 = vadd.f32 %v3423, %v3526
    %v3528 = vpop.f32.mrf.mxu0
    %3529 = vmatprep.mubr.f32.mxu0 0.0
    %3530 = vmatmul.mubr.f32.gmra.mxu0 %v3394
    %v3531 = vpop.f32.mrf.mxu0
    %v3532 = vadd.f32 %v3423, %v3531
    %v3533 = vpop.f32.mrf.mxu0
    %3534 = vmatprep.mubr.f32.mxu0 0.0
    %3535 = vmatmul.mubr.f32.gmra.mxu0 %v3395
    %v3536 = vpop.f32.mrf.mxu0
    %v3537 = vadd.f32 %v3423, %v3536
    %v3538 = vpop.f32.mrf.mxu0
    %3539 = vmatprep.mubr.f32.mxu0 0.0
    %3540 = vmatmul.mubr.f32.gmra.mxu0 %v3396
    %v3541 = vpop.f32.mrf.mxu0
    %v3542 = vadd.f32 %v3423, %v3541
    %v3543 = vpop.f32.mrf.mxu0
    %3544 = vmatprep.mubr.f32.mxu0 0.0
    %3545 = vmatmul.mubr.f32.gmra.mxu0 %v3397
    %v3546 = vpop.f32.mrf.mxu0
    %v3547 = vadd.f32 %v3423, %v3546
    %v3548 = vpop.f32.mrf.mxu0
    %3549 = vmatprep.mubr.f32.mxu0 0.0
    %3550 = vmatmul.mubr.f32.gmra.mxu0 %v3398
    %v3551 = vpop.f32.mrf.mxu0
    %v3552 = vadd.f32 %v3423, %v3551
    %v3553 = vpop.f32.mrf.mxu0
    %3554 = vmatprep.mubr.f32.mxu0 0.0
    %3555 = vmatmul.mubr.f32.gmra.mxu0 %v3399
    %v3556 = vpop.f32.mrf.mxu0
    %v3557 = vadd.f32 %v3423, %v3556
    %v3558 = vpop.f32.mrf.mxu0
    %3559 = vmatprep.mubr.f32.mxu0 0.0
    %3560 = vmatmul.mubr.f32.gmra.mxu0 %v3400
    %v3561 = vpop.f32.mrf.mxu0
    %v3562 = vadd.f32 %v3423, %v3561
    %v3563 = vpop.f32.mrf.mxu0
    %3564 = vmatprep.mubr.f32.mxu0 0.0
    %3565 = vmatmul.mubr.f32.gmra.mxu0 %v3401
    %v3566 = vpop.f32.mrf.mxu0
    %v3567 = vadd.f32 %v3423, %v3566
    %v3568 = vpop.f32.mrf.mxu0
    %3569 = vdwg.mxu0
    %v3570 = vadd.f32 %v3492, %v76
    %v3571 = vadd.f32 %v3497, %v77
    %v3572 = vadd.f32 %v3502, %v78
    %v3573 = vadd.f32 %v3507, %v79
    %v3574 = vadd.f32 %v3512, %v80
    %v3575 = vadd.f32 %v3517, %v81
    %v3576 = vadd.f32 %v3522, %v82
    %v3577 = vadd.f32 %v3527, %v83
    %v3578 = vadd.f32 %v3532, %v108
    %v3579 = vadd.f32 %v3537, %v109
    %v3580 = vadd.f32 %v3542, %v110
    %v3581 = vadd.f32 %v3547, %v111
    %v3582 = vadd.f32 %v3552, %v112
    %v3583 = vadd.f32 %v3557, %v113
    %v3584 = vadd.f32 %v3562, %v114
    %v3585 = vadd.f32 %v3567, %v115
    %3586 = vadd.xlane.f32.xlu0 %v3570
    %v3587 = vpop.xlane.xlu0 %3586
    %3588 = vadd.xlane.f32.xlu0 %v3571
    %v3589 = vpop.xlane.xlu0 %3588
    %3590 = vadd.xlane.f32.xlu0 %v3572
    %v3591 = vpop.xlane.xlu0 %3590
    %3592 = vadd.xlane.f32.xlu0 %v3573
    %v3593 = vpop.xlane.xlu0 %3592
    %3594 = vadd.xlane.f32.xlu0 %v3574
    %v3595 = vpop.xlane.xlu0 %3594
    %3596 = vadd.xlane.f32.xlu0 %v3575
    %v3597 = vpop.xlane.xlu0 %3596
    %3598 = vadd.xlane.f32.xlu0 %v3576
    %v3599 = vpop.xlane.xlu0 %3598
    %3600 = vadd.xlane.f32.xlu0 %v3577
    %v3601 = vpop.xlane.xlu0 %3600
    %3602 = vadd.xlane.f32.xlu0 %v3578
    %v3603 = vpop.xlane.xlu0 %3602
    %3604 = vadd.xlane.f32.xlu0 %v3579
    %v3605 = vpop.xlane.xlu0 %3604
    %3606 = vadd.xlane.f32.xlu0 %v3580
    %v3607 = vpop.xlane.xlu0 %3606
    %3608 = vadd.xlane.f32.xlu0 %v3581
    %v3609 = vpop.xlane.xlu0 %3608
    %3610 = vadd.xlane.f32.xlu0 %v3582
    %v3611 = vpop.xlane.xlu0 %3610
    %3612 = vadd.xlane.f32.xlu0 %v3583
    %v3613 = vpop.xlane.xlu0 %3612
    %3614 = vadd.xlane.f32.xlu0 %v3584
    %v3615 = vpop.xlane.xlu0 %3614
    %3616 = vadd.xlane.f32.xlu0 %v3585
    %v3617 = vpop.xlane.xlu0 %3616
    %v3618 = vmul.f32 %v3587, 0.0078125
    %v3619 = vmul.f32 %v3589, 0.0078125
    %v3620 = vmul.f32 %v3591, 0.0078125
    %v3621 = vmul.f32 %v3593, 0.0078125
    %v3622 = vmul.f32 %v3595, 0.0078125
    %v3623 = vmul.f32 %v3597, 0.0078125
    %v3624 = vmul.f32 %v3599, 0.0078125
    %v3625 = vmul.f32 %v3601, 0.0078125
    %v3626 = vmul.f32 %v3603, 0.0078125
    %v3627 = vmul.f32 %v3605, 0.0078125
    %v3628 = vmul.f32 %v3607, 0.0078125
    %v3629 = vmul.f32 %v3609, 0.0078125
    %v3630 = vmul.f32 %v3611, 0.0078125
    %v3631 = vmul.f32 %v3613, 0.0078125
    %v3632 = vmul.f32 %v3615, 0.0078125
    %v3633 = vmul.f32 %v3617, 0.0078125
    %v3634 = vmul.f32 %v3570, %v3570
    %v3635 = vmul.f32 %v3571, %v3571
    %v3636 = vmul.f32 %v3572, %v3572
    %v3637 = vmul.f32 %v3573, %v3573
    %v3638 = vmul.f32 %v3574, %v3574
    %v3639 = vmul.f32 %v3575, %v3575
    %v3640 = vmul.f32 %v3576, %v3576
    %v3641 = vmul.f32 %v3577, %v3577
    %v3642 = vmul.f32 %v3578, %v3578
    %v3643 = vmul.f32 %v3579, %v3579
    %v3644 = vmul.f32 %v3580, %v3580
    %v3645 = vmul.f32 %v3581, %v3581
    %v3646 = vmul.f32 %v3582, %v3582
    %v3647 = vmul.f32 %v3583, %v3583
    %v3648 = vmul.f32 %v3584, %v3584
    %v3649 = vmul.f32 %v3585, %v3585
    %3650 = vadd.xlane.f32.xlu0 %v3634
    %v3651 = vpop.xlane.xlu0 %3650
    %3652 = vadd.xlane.f32.xlu0 %v3635
    %v3653 = vpop.xlane.xlu0 %3652
    %3654 = vadd.xlane.f32.xlu0 %v3636
    %v3655 = vpop.xlane.xlu0 %3654
    %3656 = vadd.xlane.f32.xlu0 %v3637
    %v3657 = vpop.xlane.xlu0 %3656
    %3658 = vadd.xlane.f32.xlu0 %v3638
    %v3659 = vpop.xlane.xlu0 %3658
    %3660 = vadd.xlane.f32.xlu0 %v3639
    %v3661 = vpop.xlane.xlu0 %3660
    %3662 = vadd.xlane.f32.xlu0 %v3640
    %v3663 = vpop.xlane.xlu0 %3662
    %3664 = vadd.xlane.f32.xlu0 %v3641
    %v3665 = vpop.xlane.xlu0 %3664
    %3666 = vadd.xlane.f32.xlu0 %v3642
    %v3667 = vpop.xlane.xlu0 %3666
    %3668 = vadd.xlane.f32.xlu0 %v3643
    %v3669 = vpop.xlane.xlu0 %3668
    %3670 = vadd.xlane.f32.xlu0 %v3644
    %v3671 = vpop.xlane.xlu0 %3670
    %3672 = vadd.xlane.f32.xlu0 %v3645
    %v3673 = vpop.xlane.xlu0 %3672
    %3674 = vadd.xlane.f32.xlu0 %v3646
    %v3675 = vpop.xlane.xlu0 %3674
    %3676 = vadd.xlane.f32.xlu0 %v3647
    %v3677 = vpop.xlane.xlu0 %3676
    %3678 = vadd.xlane.f32.xlu0 %v3648
    %v3679 = vpop.xlane.xlu0 %3678
    %3680 = vadd.xlane.f32.xlu0 %v3649
    %v3681 = vpop.xlane.xlu0 %3680
    %v3682 = vmul.f32 %v3651, 0.0078125
    %v3683 = vmul.f32 %v3653, 0.0078125
    %v3684 = vmul.f32 %v3655, 0.0078125
    %v3685 = vmul.f32 %v3657, 0.0078125
    %v3686 = vmul.f32 %v3659, 0.0078125
    %v3687 = vmul.f32 %v3661, 0.0078125
    %v3688 = vmul.f32 %v3663, 0.0078125
    %v3689 = vmul.f32 %v3665, 0.0078125
    %v3690 = vmul.f32 %v3667, 0.0078125
    %v3691 = vmul.f32 %v3669, 0.0078125
    %v3692 = vmul.f32 %v3671, 0.0078125
    %v3693 = vmul.f32 %v3673, 0.0078125
    %v3694 = vmul.f32 %v3675, 0.0078125
    %v3695 = vmul.f32 %v3677, 0.0078125
    %v3696 = vmul.f32 %v3679, 0.0078125
    %v3697 = vmul.f32 %v3681, 0.0078125
    %v3698 = vmul.f32 %v3618, %v3618
    %v3699 = vmul.f32 %v3619, %v3619
    %v3700 = vmul.f32 %v3620, %v3620
    %v3701 = vmul.f32 %v3621, %v3621
    %v3702 = vmul.f32 %v3622, %v3622
    %v3703 = vmul.f32 %v3623, %v3623
    %v3704 = vmul.f32 %v3624, %v3624
    %v3705 = vmul.f32 %v3625, %v3625
    %v3706 = vmul.f32 %v3626, %v3626
    %v3707 = vmul.f32 %v3627, %v3627
    %v3708 = vmul.f32 %v3628, %v3628
    %v3709 = vmul.f32 %v3629, %v3629
    %v3710 = vmul.f32 %v3630, %v3630
    %v3711 = vmul.f32 %v3631, %v3631
    %v3712 = vmul.f32 %v3632, %v3632
    %v3713 = vmul.f32 %v3633, %v3633
    %v3714 = vsub.f32 %v3682, %v3698
    %v3715 = vsub.f32 %v3683, %v3699
    %v3716 = vsub.f32 %v3684, %v3700
    %v3717 = vsub.f32 %v3685, %v3701
    %v3718 = vsub.f32 %v3686, %v3702
    %v3719 = vsub.f32 %v3687, %v3703
    %v3720 = vsub.f32 %v3688, %v3704
    %v3721 = vsub.f32 %v3689, %v3705
    %v3722 = vsub.f32 %v3690, %v3706
    %v3723 = vsub.f32 %v3691, %v3707
    %v3724 = vsub.f32 %v3692, %v3708
    %v3725 = vsub.f32 %v3693, %v3709
    %v3726 = vsub.f32 %v3694, %v3710
    %v3727 = vsub.f32 %v3695, %v3711
    %v3728 = vsub.f32 %v3696, %v3712
    %v3729 = vsub.f32 %v3697, %v3713
    %v3730 = vsub.f32 %v3570, %v3618
    %v3731 = vsub.f32 %v3571, %v3619
    %v3732 = vsub.f32 %v3572, %v3620
    %v3733 = vsub.f32 %v3573, %v3621
    %v3734 = vsub.f32 %v3574, %v3622
    %v3735 = vsub.f32 %v3575, %v3623
    %v3736 = vsub.f32 %v3576, %v3624
    %v3737 = vsub.f32 %v3577, %v3625
    %v3738 = vsub.f32 %v3578, %v3626
    %v3739 = vsub.f32 %v3579, %v3627
    %v3740 = vsub.f32 %v3580, %v3628
    %v3741 = vsub.f32 %v3581, %v3629
    %v3742 = vsub.f32 %v3582, %v3630
    %v3743 = vsub.f32 %v3583, %v3631
    %v3744 = vsub.f32 %v3584, %v3632
    %v3745 = vsub.f32 %v3585, %v3633
    %v3746 = vadd.f32 %v3714, 1e-05
    %v3747 = vadd.f32 %v3715, 1e-05
    %v3748 = vadd.f32 %v3716, 1e-05
    %v3749 = vadd.f32 %v3717, 1e-05
    %v3750 = vadd.f32 %v3718, 1e-05
    %v3751 = vadd.f32 %v3719, 1e-05
    %v3752 = vadd.f32 %v3720, 1e-05
    %v3753 = vadd.f32 %v3721, 1e-05
    %v3754 = vadd.f32 %v3722, 1e-05
    %v3755 = vadd.f32 %v3723, 1e-05
    %v3756 = vadd.f32 %v3724, 1e-05
    %v3757 = vadd.f32 %v3725, 1e-05
    %v3758 = vadd.f32 %v3726, 1e-05
    %v3759 = vadd.f32 %v3727, 1e-05
    %v3760 = vadd.f32 %v3728, 1e-05
    %v3761 = vadd.f32 %v3729, 1e-05
    %v3762 = vrsqrt.pop %v3746
    %v3763 = vrsqrt.pop %v3747
    %v3764 = vrsqrt.pop %v3748
    %v3765 = vrsqrt.pop %v3749
    %v3766 = vrsqrt.pop %v3750
    %v3767 = vrsqrt.pop %v3751
    %v3768 = vrsqrt.pop %v3752
    %v3769 = vrsqrt.pop %v3753
    %v3770 = vrsqrt.pop %v3754
    %v3771 = vrsqrt.pop %v3755
    %v3772 = vrsqrt.pop %v3756
    %v3773 = vrsqrt.pop %v3757
    %v3774 = vrsqrt.pop %v3758
    %v3775 = vrsqrt.pop %v3759
    %v3776 = vrsqrt.pop %v3760
    %v3777 = vrsqrt.pop %v3761
    %v3778 = vmul.f32 %v3730, %v3762
    %v3779 = vmul.f32 %v3731, %v3763
    %v3780 = vmul.f32 %v3732, %v3764
    %v3781 = vmul.f32 %v3733, %v3765
    %v3782 = vmul.f32 %v3734, %v3766
    %v3783 = vmul.f32 %v3735, %v3767
    %v3784 = vmul.f32 %v3736, %v3768
    %v3785 = vmul.f32 %v3737, %v3769
    %v3786 = vmul.f32 %v3738, %v3770
    %v3787 = vmul.f32 %v3739, %v3771
    %v3788 = vmul.f32 %v3740, %v3772
    %v3789 = vmul.f32 %v3741, %v3773
    %v3790 = vmul.f32 %v3742, %v3774
    %v3791 = vmul.f32 %v3743, %v3775
    %v3792 = vmul.f32 %v3744, %v3776
    %v3793 = vmul.f32 %v3745, %v3777
    %v3794 = vld [vmem:[%s5] sm:$0x1]
    %v3796 = vlaneseq
    %v3797 = vshrl.u32 %v3796, 7
    %v3798 = vsub.s32 0, %v3797
    %v3799 = vrot.slane %v3794, %v3798
    %v3801 = vmul.f32 %v3778, %v3799
    %v3802 = vmul.f32 %v3779, %v3799
    %v3803 = vmul.f32 %v3780, %v3799
    %v3804 = vmul.f32 %v3781, %v3799
    %v3805 = vmul.f32 %v3782, %v3799
    %v3806 = vmul.f32 %v3783, %v3799
    %v3807 = vmul.f32 %v3784, %v3799
    %v3808 = vmul.f32 %v3785, %v3799
    %v3809 = vmul.f32 %v3786, %v3799
    %v3810 = vmul.f32 %v3787, %v3799
    %v3811 = vmul.f32 %v3788, %v3799
    %v3812 = vmul.f32 %v3789, %v3799
    %v3813 = vmul.f32 %v3790, %v3799
    %v3814 = vmul.f32 %v3791, %v3799
    %v3815 = vmul.f32 %v3792, %v3799
    %v3816 = vmul.f32 %v3793, %v3799
    %v3817 = vld [vmem:[%s6] sm:$0x1]
    %v3819 = vlaneseq
    %v3820 = vshrl.u32 %v3819, 7
    %v3821 = vsub.s32 0, %v3820
    %v3822 = vrot.slane %v3817, %v3821
    %v3824 = vadd.f32 %v3801, %v3822
    %v3825 = vadd.f32 %v3802, %v3822
    %v3826 = vadd.f32 %v3803, %v3822
    %v3827 = vadd.f32 %v3804, %v3822
    %v3828 = vadd.f32 %v3805, %v3822
    %v3829 = vadd.f32 %v3806, %v3822
    %v3830 = vadd.f32 %v3807, %v3822
    %v3831 = vadd.f32 %v3808, %v3822
    %v3832 = vadd.f32 %v3809, %v3822
    %v3833 = vadd.f32 %v3810, %v3822
    %v3834 = vadd.f32 %v3811, %v3822
    %v3835 = vadd.f32 %v3812, %v3822
    %v3836 = vadd.f32 %v3813, %v3822
    %v3837 = vadd.f32 %v3814, %v3822
    %v3838 = vadd.f32 %v3815, %v3822
    %v3839 = vadd.f32 %v3816, %v3822
    %3840 = vst [vmem:[#allocation2] sm:$0xff] %v3824
    %3841 = vst [vmem:[#allocation2 + $0x8] sm:$0xff] %v3825
    %3842 = vst [vmem:[#allocation2 + $0x10] sm:$0xff] %v3826
    %3843 = vst [vmem:[#allocation2 + $0x18] sm:$0xff] %v3827
    %3844 = vst [vmem:[#allocation2 + $0x20] sm:$0xff] %v3828
    %3845 = vst [vmem:[#allocation2 + $0x28] sm:$0xff] %v3829
    %3846 = vst [vmem:[#allocation2 + $0x30] sm:$0xff] %v3830
    %3847 = vst [vmem:[#allocation2 + $0x38] sm:$0xff] %v3831
    %3848 = vst [vmem:[#allocation2 + $0x40] sm:$0xff] %v3832
    %3849 = vst [vmem:[#allocation2 + $0x48] sm:$0xff] %v3833
    %3850 = vst [vmem:[#allocation2 + $0x50] sm:$0xff] %v3834
    %3851 = vst [vmem:[#allocation2 + $0x58] sm:$0xff] %v3835
    %3852 = vst [vmem:[#allocation2 + $0x60] sm:$0xff] %v3836
    %3853 = vst [vmem:[#allocation2 + $0x68] sm:$0xff] %v3837
    %3854 = vst [vmem:[#allocation2 + $0x70] sm:$0xff] %v3838
    %3855 = vst [vmem:[#allocation2 + $0x78] sm:$0xff] %v3839
    // Predicated region
    $region30: #{tpu_custom_call.1} parent=1 // pred_check
      _
    $region31: #{tpu_custom_call.1} parent=1 // pred_check_branch
      %3857 = sbr.rel (0) target = $region33
    $region32: #{tpu_custom_call.1} parent=1 // pred_region
      %s3859 = ssub.s32 2048, 2048
      %3860 = vsyncadd [#allocation3], %s3859
      %s3861 = sshll.u32 [#allocation2], 4
      %s3862 = int_to_ptr.vmem [resolvable:$true] %s3861
      %3867 = dma.vmem_to_hbm [thread:$0]  %s3862, 2048, %s7, [#allocation3], 128, 128, 8
    $region33: #{tpu_custom_call.1} parent=1 // pred_fallthru
      _
    // Predicated region
    $region34: #{tpu_custom_call.1} parent=1 // pred_check
      _
    $region35: #{tpu_custom_call.1} parent=1 // pred_check_branch
      %3869 = sbr.rel (0) target = $region37
    $region36: #{tpu_custom_call.1} parent=1 // pred_region
      %3870 = dma.done [#allocation3], 2048
    $region37: #{tpu_custom_call.1} parent=1 // pred_fallthru
      _
    %3871 = vsyncpa [#allocation3], 1

</llo_original>
